<compile_context>
chip_gen: v7x
topology: tpu7x:2x2x1
jax: 0.10.0
libtpu: 0.0.40
codegen_flags: <defaults>
</compile_context>

<pallas_src>
import jax
import jax.numpy as jnp
from jax.experimental import pallas as pl
from jax.experimental.pallas import tpu as pltpu

LEAKYRELU_SLOPE = 0.2
BN_EPS = 1e-5
CONV2D_CONFIG_1 = dict(kernel_size=4, stride=2, padding=1)
CONV2D_CONFIG_2 = dict(kernel_size=4, stride=1, padding=1)


def _pad_to(n, m):
    return ((n + m - 1) // m) * m


# ----------------------------------------------------------------------------
# Pallas kernel: O = leaky_relu( (A @ B) * scale + shift )
# Grid = (M tiles, N tiles, K tiles); K is the LAST (reduction) axis and the
# output block doubles as the f32 accumulator (same block index for all k).
# ----------------------------------------------------------------------------
def fused_gemm_affine_lrelu_kernel(a_ref, b_ref, scale_ref, shift_ref, o_ref):
    k = pl.program_id(2)

    @pl.when(k == 0)
    def _():
        o_ref[...] = jnp.zeros_like(o_ref)

    o_ref[...] += jnp.dot(a_ref[...], b_ref[...],
                          preferred_element_type=jnp.float32)

    @pl.when(k == pl.num_programs(2) - 1)
    def _():
        y = o_ref[...] * scale_ref[...] + shift_ref[...]
        o_ref[...] = jnp.where(y >= 0, y, LEAKYRELU_SLOPE * y)


def fused_gemm_affine_lrelu(a, b, scale, shift):
    """a: (M, K) patches, b: (K, N) weights, scale/shift: (N,) per-channel."""
    M, K = a.shape
    K2, N = b.shape
    assert K == K2

    # Tiny-N layers (the final 1-channel conv): a 128-lane Pallas tile wastes
    # >99% of MXU lanes, epilogue work and output DMA — plain XLA is faster.
    if N < 16:
        y = jnp.dot(a, b.astype(a.dtype),
                    preferred_element_type=jnp.float32) * scale + shift
        return jnp.where(y >= 0, y, LEAKYRELU_SLOPE * y)

    # ---- tile selection (VMEM-bounded, size independent) -------------------
    Np = _pad_to(N, 128)
    tn = 256 if Np % 256 == 0 else 128          # 128-wide also maps v5e MXU

    Mp = _pad_to(max(M, 8), 8)
    if Mp <= 512:
        tm = Mp
    else:
        tm = 512
        Mp = _pad_to(Mp, tm)

    Kp = _pad_to(K, 128)                        # only pad to the lane granule
    tk = min(512, Kp)
    Kp = _pad_to(Kp, tk)

    # ---- pad operands only when required; bf16 inputs for the MXU ----------
    a_p = a.astype(jnp.bfloat16)
    if (Mp, Kp) != (M, K):
        a_p = jnp.pad(a_p, ((0, Mp - M), (0, Kp - K)))
    b_p = b.astype(jnp.bfloat16)
    if (Kp, Np) != (K, N):
        b_p = jnp.pad(b_p, ((0, Kp - K), (0, Np - N)))
    scale_p = scale.astype(jnp.float32).reshape(1, N)
    shift_p = shift.astype(jnp.float32).reshape(1, N)
    if Np != N:
        scale_p = jnp.pad(scale_p, ((0, 0), (0, Np - N)))
        shift_p = jnp.pad(shift_p, ((0, 0), (0, Np - N)))

    out = pl.pallas_call(
        fused_gemm_affine_lrelu_kernel,
        out_shape=jax.ShapeDtypeStruct((Mp, Np), jnp.float32),
        grid_spec=pltpu.PrefetchScalarGridSpec(
            num_scalar_prefetch=0,
            grid=(Mp // tm, Np // tn, Kp // tk),
            in_specs=[
                pl.BlockSpec((tm, tk), lambda i, j, k: (i, k)),
                pl.BlockSpec((tk, tn), lambda i, j, k: (k, j)),
                pl.BlockSpec((1, tn), lambda i, j, k: (0, j)),
                pl.BlockSpec((1, tn), lambda i, j, k: (0, j)),
            ],
            out_specs=pl.BlockSpec((tm, tn), lambda i, j, k: (i, j)),
        ),
        compiler_params=pltpu.CompilerParams(
            dimension_semantics=("parallel", "parallel", "arbitrary"),
            vmem_limit_bytes=48 * 1024 * 1024,   # fits v7x's 64 MiB VMEM/TC
        ),
    )(a_p, b_p, scale_p, shift_p)

    if (Mp, Np) != (M, N):
        out = out[:M, :N]
    return out


# ----------------------------------------------------------------------------
# Glue: im2col (pure JAX slicing), parameter init, layer composition
# ----------------------------------------------------------------------------
def im2col(x_nhwc, k, s, p):
    # TODO(synk): the strided k*k tap gather is not expressible in a BlockSpec
    # index_map, so patch extraction stays in XLA (bf16 to halve the traffic).
    N, H, W, C = x_nhwc.shape
    xp = jnp.pad(x_nhwc, ((0, 0), (p, p), (p, p), (0, 0)))
    Ho = (H + 2 * p - k) // s + 1
    Wo = (W + 2 * p - k) // s + 1
    cols = []
    for di in range(k):
        for dj in range(k):
            cols.append(xp[:, di:di + (Ho - 1) * s + 1:s,
                            dj:dj + (Wo - 1) * s + 1:s, :])
    cols = jnp.concatenate(cols, axis=-1)  # (N, Ho, Wo, k*k*C)
    return cols.reshape(N * Ho * Wo, k * k * C), (N, Ho, Wo)


def init_conv_params(key, cin, cout, k, with_bn):
    kw, kb, kg, kbe = jax.random.split(key, 4)
    fan_in = cin * k * k
    w = jax.random.normal(kw, (k, k, cin, cout), jnp.float32) * (2.0 / fan_in) ** 0.5
    b = 0.01 * jax.random.normal(kb, (cout,), jnp.float32)
    params = {"w": w.reshape(k * k * cin, cout), "b": b}
    if with_bn:
        params["gamma"] = 1.0 + 0.1 * jax.random.normal(kg, (cout,), jnp.float32)
        params["beta"] = 0.1 * jax.random.normal(kbe, (cout,), jnp.float32)
        params["mean"] = jnp.zeros((cout,), jnp.float32)
        params["var"] = jnp.ones((cout,), jnp.float32)
    return params


def conv_block(x_nhwc, params, cfg, with_bn):
    k, s, p = cfg["kernel_size"], cfg["stride"], cfg["padding"]
    # bf16 activations into im2col: MXU-native dtype, half the patch HBM bytes.
    cols, (N, Ho, Wo) = im2col(x_nhwc.astype(jnp.bfloat16), k, s, p)
    cout = params["w"].shape[1]
    if with_bn:
        # TODO(synk): training-mode BN (batch statistics) not implemented.
        inv = params["gamma"] / jnp.sqrt(params["var"] + BN_EPS)
        scale = inv
        shift = params["beta"] + (params["b"] - params["mean"]) * inv
    else:
        scale = jnp.ones((cout,), jnp.float32)
        shift = params["b"]
    y = fused_gemm_affine_lrelu(cols, params["w"], scale, shift)
    return y.reshape(N, Ho, Wo, cout)


def discriminator_init(key, in_channels=3):
    keys = jax.random.split(key, 5)
    return [
        init_conv_params(keys[0], 2 * in_channels, 64, 4, with_bn=False),
        init_conv_params(keys[1], 64, 128, 4, with_bn=True),
        init_conv_params(keys[2], 128, 256, 4, with_bn=True),
        init_conv_params(keys[3], 256, 512, 4, with_bn=True),
        init_conv_params(keys[4], 512, 1, 4, with_bn=True),
    ]


def discriminator_forward(params, x_nchw, y_nchw):
    # NCHW in / NCHW out; NHWC internally.
    cat = jnp.concatenate([x_nchw, y_nchw], axis=1)
    h = jnp.transpose(cat, (0, 2, 3, 1))
    cfgs = [CONV2D_CONFIG_1, CONV2D_CONFIG_1, CONV2D_CONFIG_1,
            CONV2D_CONFIG_2, CONV2D_CONFIG_2]
    bns = [False, True, True, True, True]
    for prm, cfg, bn in zip(params, cfgs, bns):
        h = conv_block(h, prm, cfg, bn)
    return jnp.transpose(h, (0, 3, 1, 2)).astype(jnp.float32)


if __name__ == "__main__":
    key = jax.random.PRNGKey(0)
    kx, ky, kp = jax.random.split(key, 3)
    B, C, H, W = 2, 3, 32, 32
    x = jax.random.normal(kx, (B, C, H, W), jnp.float32)
    y = jax.random.normal(ky, (B, C, H, W), jnp.float32)

    params = discriminator_init(kp, in_channels=C)
    fwd = jax.jit(discriminator_forward)
    out = jax.block_until_ready(fwd(params, x, y))

    # 32 -> 16 -> 8 -> 4 -> 3 -> 2 spatially, 1 output channel
    assert out.shape == (B, 1, 2, 2), out.shape
    assert bool(jnp.all(jnp.isfinite(out)))
    print("KERNEL_OK")
</pallas_src>

<mosaic_0001>
module attributes {stable_mosaic.version = 11 : i64} {
  func.func @fused_gemm_affine_lrelu_kernel(%arg0: i32, %arg1: i32, %arg2: i32, %arg3: memref<512x128xbf16, #tpu.memory_space<vmem>>, %arg4: memref<128x128xbf16, #tpu.memory_space<vmem>>, %arg5: memref<1x128xf32, #tpu.memory_space<vmem>>, %arg6: memref<1x128xf32, #tpu.memory_space<vmem>>, %arg7: memref<512x128xf32, #tpu.memory_space<vmem>>) attributes {dimension_semantics = [#tpu.dimension_semantics<parallel>, #tpu.dimension_semantics<parallel>, #tpu.dimension_semantics<arbitrary>], iteration_bounds = array<i64: 1, 1, 1>, scalar_prefetch = 0 : i64, scratch_operands = 0 : i64, tpu.core_type = #tpu.core_type<tc>, window_params = [{transform_indices = @transform_0, window_bounds = array<i64: 512, 128>}, {transform_indices = @transform_1, window_bounds = array<i64: 128, 128>}, {transform_indices = @transform_2, window_bounds = array<i64: 1, 128>}, {transform_indices = @transform_3, window_bounds = array<i64: 1, 128>}, {transform_indices = @transform_4, window_bounds = array<i64: 512, 128>}]} {
    %c0_i32 = arith.constant 0 : i32
    %0 = arith.cmpi eq, %arg2, %c0_i32 : i32
    %1 = arith.extui %0 : i1 to i32
    %c0_i32_0 = arith.constant 0 : i32
    %2 = arith.cmpi ne, %1, %c0_i32_0 : i32
    scf.if %2 {
      %cst_10 = arith.constant 0.000000e+00 : f32
      %12 = vector.broadcast %cst_10 : f32 to vector<512x128xf32>
      %c0_11 = arith.constant 0 : index
      %c0_12 = arith.constant 0 : index
      %13 = vector.load %arg7[%c0_11, %c0_12] : memref<512x128xf32, #tpu.memory_space<vmem>>, vector<512x128xf32>
      tpu.vector_store %arg7[%c0_11, %c0_12], %12 {strides = array<i32>} : memref<512x128xf32, #tpu.memory_space<vmem>>, vector<512x128xf32>,
    } else {
    }
    %c0 = arith.constant 0 : index
    %c0_1 = arith.constant 0 : index
    %3 = vector.load %arg7[%c0, %c0_1] : memref<512x128xf32, #tpu.memory_space<vmem>>, vector<512x128xf32>
    %c0_2 = arith.constant 0 : index
    %c0_3 = arith.constant 0 : index
    %4 = vector.load %arg3[%c0_2, %c0_3] : memref<512x128xbf16, #tpu.memory_space<vmem>>, vector<512x128xbf16>
    %c0_4 = arith.constant 0 : index
    %c0_5 = arith.constant 0 : index
    %5 = vector.load %arg4[%c0_4, %c0_5] : memref<128x128xbf16, #tpu.memory_space<vmem>>, vector<128x128xbf16>
    %cst = arith.constant dense<0.000000e+00> : vector<512x128xf32>
    %6 = tpu.matmul %4, %5, %cst {dimension_numbers = #tpu.dot_dimension_numbers<[1], [0], [0], [1], [0, 0, 1, 1], [], []>} : vector<512x128xbf16>, vector<128x128xbf16>, vector<512x128xf32> -> vector<512x128xf32>
    %7 = arith.addf %3, %6 : vector<512x128xf32>
    %c0_6 = arith.constant 0 : index
    %c0_7 = arith.constant 0 : index
    %8 = vector.load %arg7[%c0_6, %c0_7] : memref<512x128xf32, #tpu.memory_space<vmem>>, vector<512x128xf32>
    tpu.vector_store %arg7[%c0_6, %c0_7], %7 {strides = array<i32>} : memref<512x128xf32, #tpu.memory_space<vmem>>, vector<512x128xf32>,
    %c0_i32_8 = arith.constant 0 : i32
    %9 = arith.cmpi eq, %arg2, %c0_i32_8 : i32
    %10 = arith.extui %9 : i1 to i32
    %c0_i32_9 = arith.constant 0 : i32
    %11 = arith.cmpi ne, %10, %c0_i32_9 : i32
    scf.if %11 {
      %c0_10 = arith.constant 0 : index
      %c0_11 = arith.constant 0 : index
      %12 = vector.load %arg7[%c0_10, %c0_11] : memref<512x128xf32, #tpu.memory_space<vmem>>, vector<512x128xf32>
      %c0_12 = arith.constant 0 : index
      %c0_13 = arith.constant 0 : index
      %13 = vector.load %arg5[%c0_12, %c0_13] : memref<1x128xf32, #tpu.memory_space<vmem>>, vector<1x128xf32>
      %14 = vector.broadcast %13 : vector<1x128xf32> to vector<512x128xf32>
      %15 = arith.mulf %12, %14 : vector<512x128xf32>
      %c0_14 = arith.constant 0 : index
      %c0_15 = arith.constant 0 : index
      %16 = vector.load %arg6[%c0_14, %c0_15] : memref<1x128xf32, #tpu.memory_space<vmem>>, vector<1x128xf32>
      %17 = vector.broadcast %16 : vector<1x128xf32> to vector<512x128xf32>
      %18 = arith.addf %15, %17 : vector<512x128xf32>
      %cst_16 = arith.constant 0.000000e+00 : f32
      %19 = vector.broadcast %cst_16 : f32 to vector<512x128xf32>
      %20 = arith.cmpf oge, %18, %19 : vector<512x128xf32>
      %cst_17 = arith.constant 2.000000e-01 : f32
      %21 = vector.broadcast %cst_17 : f32 to vector<512x128xf32>
      %22 = arith.mulf %21, %18 : vector<512x128xf32>
      %23 = arith.select %20, %18, %22 : vector<512x128xi1>, vector<512x128xf32>
      %c0_18 = arith.constant 0 : index
      %c0_19 = arith.constant 0 : index
      %24 = vector.load %arg7[%c0_18, %c0_19] : memref<512x128xf32, #tpu.memory_space<vmem>>, vector<512x128xf32>
      tpu.vector_store %arg7[%c0_18, %c0_19], %23 {strides = array<i32>} : memref<512x128xf32, #tpu.memory_space<vmem>>, vector<512x128xf32>,
    } else {
    }
    return
  }
  func.func @transform_0(%arg0: i32, %arg1: i32, %arg2: i32) -> (i32, i32) {
    %c0_i32 = arith.constant 0 : i32
    return %arg0, %arg2 : i32, i32
  }
  func.func @transform_1(%arg0: i32, %arg1: i32, %arg2: i32) -> (i32, i32) {
    %c0_i32 = arith.constant 0 : i32
    return %arg2, %arg1 : i32, i32
  }
  func.func @transform_2(%arg0: i32, %arg1: i32, %arg2: i32) -> (i32, i32) {
    %c0_i32 = arith.constant 0 : i32
    %c0_i32_0 = arith.constant 0 : i32
    return %c0_i32, %arg1 : i32, i32
  }
  func.func @transform_3(%arg0: i32, %arg1: i32, %arg2: i32) -> (i32, i32) {
    %c0_i32 = arith.constant 0 : i32
    %c0_i32_0 = arith.constant 0 : i32
    return %c0_i32, %arg1 : i32, i32
  }
  func.func @transform_4(%arg0: i32, %arg1: i32, %arg2: i32) -> (i32, i32) {
    %c0_i32 = arith.constant 0 : i32
    return %arg0, %arg1 : i32, i32
  }
}

module attributes {stable_mosaic.version = 11 : i64} {
  func.func @fused_gemm_affine_lrelu_kernel(%arg0: i32, %arg1: i32, %arg2: i32, %arg3: memref<128x512xbf16, #tpu.memory_space<vmem>>, %arg4: memref<512x128xbf16, #tpu.memory_space<vmem>>, %arg5: memref<1x128xf32, #tpu.memory_space<vmem>>, %arg6: memref<1x128xf32, #tpu.memory_space<vmem>>, %arg7: memref<128x128xf32, #tpu.memory_space<vmem>>) attributes {dimension_semantics = [#tpu.dimension_semantics<parallel>, #tpu.dimension_semantics<parallel>, #tpu.dimension_semantics<arbitrary>], iteration_bounds = array<i64: 1, 1, 2>, scalar_prefetch = 0 : i64, scratch_operands = 0 : i64, tpu.core_type = #tpu.core_type<tc>, window_params = [{transform_indices = @transform_0, window_bounds = array<i64: 128, 512>}, {transform_indices = @transform_1, window_bounds = array<i64: 512, 128>}, {transform_indices = @transform_2, window_bounds = array<i64: 1, 128>}, {transform_indices = @transform_3, window_bounds = array<i64: 1, 128>}, {transform_indices = @transform_4, window_bounds = array<i64: 128, 128>}]} {
    %c0_i32 = arith.constant 0 : i32
    %0 = arith.cmpi eq, %arg2, %c0_i32 : i32
    %1 = arith.extui %0 : i1 to i32
    %c0_i32_0 = arith.constant 0 : i32
    %2 = arith.cmpi ne, %1, %c0_i32_0 : i32
    scf.if %2 {
      %cst_9 = arith.constant 0.000000e+00 : f32
      %12 = vector.broadcast %cst_9 : f32 to vector<128x128xf32>
      %c0_10 = arith.constant 0 : index
      %c0_11 = arith.constant 0 : index
      %13 = vector.load %arg7[%c0_10, %c0_11] : memref<128x128xf32, #tpu.memory_space<vmem>>, vector<128x128xf32>
      tpu.vector_store %arg7[%c0_10, %c0_11], %12 {strides = array<i32>} : memref<128x128xf32, #tpu.memory_space<vmem>>, vector<128x128xf32>,
    } else {
    }
    %c0 = arith.constant 0 : index
    %c0_1 = arith.constant 0 : index
    %3 = vector.load %arg7[%c0, %c0_1] : memref<128x128xf32, #tpu.memory_space<vmem>>, vector<128x128xf32>
    %c0_2 = arith.constant 0 : index
    %c0_3 = arith.constant 0 : index
    %4 = vector.load %arg3[%c0_2, %c0_3] : memref<128x512xbf16, #tpu.memory_space<vmem>>, vector<128x512xbf16>
    %c0_4 = arith.constant 0 : index
    %c0_5 = arith.constant 0 : index
    %5 = vector.load %arg4[%c0_4, %c0_5] : memref<512x128xbf16, #tpu.memory_space<vmem>>, vector<512x128xbf16>
    %cst = arith.constant dense<0.000000e+00> : vector<128x128xf32>
    %6 = tpu.matmul %4, %5, %cst {dimension_numbers = #tpu.dot_dimension_numbers<[1], [0], [0], [1], [0, 0, 1, 1], [], []>} : vector<128x512xbf16>, vector<512x128xbf16>, vector<128x128xf32> -> vector<128x128xf32>
    %7 = arith.addf %3, %6 : vector<128x128xf32>
    %c0_6 = arith.constant 0 : index
    %c0_7 = arith.constant 0 : index
    %8 = vector.load %arg7[%c0_6, %c0_7] : memref<128x128xf32, #tpu.memory_space<vmem>>, vector<128x128xf32>
    tpu.vector_store %arg7[%c0_6, %c0_7], %7 {strides = array<i32>} : memref<128x128xf32, #tpu.memory_space<vmem>>, vector<128x128xf32>,
    %c1_i32 = arith.constant 1 : i32
    %9 = arith.cmpi eq, %arg2, %c1_i32 : i32
    %10 = arith.extui %9 : i1 to i32
    %c0_i32_8 = arith.constant 0 : i32
    %11 = arith.cmpi ne, %10, %c0_i32_8 : i32
    scf.if %11 {
      %c0_9 = arith.constant 0 : index
      %c0_10 = arith.constant 0 : index
      %12 = vector.load %arg7[%c0_9, %c0_10] : memref<128x128xf32, #tpu.memory_space<vmem>>, vector<128x128xf32>
      %c0_11 = arith.constant 0 : index
      %c0_12 = arith.constant 0 : index
      %13 = vector.load %arg5[%c0_11, %c0_12] : memref<1x128xf32, #tpu.memory_space<vmem>>, vector<1x128xf32>
      %14 = vector.broadcast %13 : vector<1x128xf32> to vector<128x128xf32>
      %15 = arith.mulf %12, %14 : vector<128x128xf32>
      %c0_13 = arith.constant 0 : index
      %c0_14 = arith.constant 0 : index
      %16 = vector.load %arg6[%c0_13, %c0_14] : memref<1x128xf32, #tpu.memory_space<vmem>>, vector<1x128xf32>
      %17 = vector.broadcast %16 : vector<1x128xf32> to vector<128x128xf32>
      %18 = arith.addf %15, %17 : vector<128x128xf32>
      %cst_15 = arith.constant 0.000000e+00 : f32
      %19 = vector.broadcast %cst_15 : f32 to vector<128x128xf32>
      %20 = arith.cmpf oge, %18, %19 : vector<128x128xf32>
      %cst_16 = arith.constant 2.000000e-01 : f32
      %21 = vector.broadcast %cst_16 : f32 to vector<128x128xf32>
      %22 = arith.mulf %21, %18 : vector<128x128xf32>
      %23 = arith.select %20, %18, %22 : vector<128x128xi1>, vector<128x128xf32>
      %c0_17 = arith.constant 0 : index
      %c0_18 = arith.constant 0 : index
      %24 = vector.load %arg7[%c0_17, %c0_18] : memref<128x128xf32, #tpu.memory_space<vmem>>, vector<128x128xf32>
      tpu.vector_store %arg7[%c0_17, %c0_18], %23 {strides = array<i32>} : memref<128x128xf32, #tpu.memory_space<vmem>>, vector<128x128xf32>,
    } else {
    }
    return
  }
  func.func @transform_0(%arg0: i32, %arg1: i32, %arg2: i32) -> (i32, i32) {
    %c0_i32 = arith.constant 0 : i32
    return %arg0, %arg2 : i32, i32
  }
  func.func @transform_1(%arg0: i32, %arg1: i32, %arg2: i32) -> (i32, i32) {
    %c0_i32 = arith.constant 0 : i32
    return %arg2, %arg1 : i32, i32
  }
  func.func @transform_2(%arg0: i32, %arg1: i32, %arg2: i32) -> (i32, i32) {
    %c0_i32 = arith.constant 0 : i32
    %c0_i32_0 = arith.constant 0 : i32
    return %c0_i32, %arg1 : i32, i32
  }
  func.func @transform_3(%arg0: i32, %arg1: i32, %arg2: i32) -> (i32, i32) {
    %c0_i32 = arith.constant 0 : i32
    %c0_i32_0 = arith.constant 0 : i32
    return %c0_i32, %arg1 : i32, i32
  }
  func.func @transform_4(%arg0: i32, %arg1: i32, %arg2: i32) -> (i32, i32) {
    %c0_i32 = arith.constant 0 : i32
    return %arg0, %arg1 : i32, i32
  }
}

module attributes {stable_mosaic.version = 11 : i64} {
  func.func @fused_gemm_affine_lrelu_kernel(%arg0: i32, %arg1: i32, %arg2: i32, %arg3: memref<32x512xbf16, #tpu.memory_space<vmem>>, %arg4: memref<512x256xbf16, #tpu.memory_space<vmem>>, %arg5: memref<1x256xf32, #tpu.memory_space<vmem>>, %arg6: memref<1x256xf32, #tpu.memory_space<vmem>>, %arg7: memref<32x256xf32, #tpu.memory_space<vmem>>) attributes {dimension_semantics = [#tpu.dimension_semantics<parallel>, #tpu.dimension_semantics<parallel>, #tpu.dimension_semantics<arbitrary>], iteration_bounds = array<i64: 1, 1, 4>, scalar_prefetch = 0 : i64, scratch_operands = 0 : i64, tpu.core_type = #tpu.core_type<tc>, window_params = [{transform_indices = @transform_0, window_bounds = array<i64: 32, 512>}, {transform_indices = @transform_1, window_bounds = array<i64: 512, 256>}, {transform_indices = @transform_2, window_bounds = array<i64: 1, 256>}, {transform_indices = @transform_3, window_bounds = array<i64: 1, 256>}, {transform_indices = @transform_4, window_bounds = array<i64: 32, 256>}]} {
    %c0_i32 = arith.constant 0 : i32
    %0 = arith.cmpi eq, %arg2, %c0_i32 : i32
    %1 = arith.extui %0 : i1 to i32
    %c0_i32_0 = arith.constant 0 : i32
    %2 = arith.cmpi ne, %1, %c0_i32_0 : i32
    scf.if %2 {
      %cst_9 = arith.constant 0.000000e+00 : f32
      %12 = vector.broadcast %cst_9 : f32 to vector<32x256xf32>
      %c0_10 = arith.constant 0 : index
      %c0_11 = arith.constant 0 : index
      %13 = vector.load %arg7[%c0_10, %c0_11] : memref<32x256xf32, #tpu.memory_space<vmem>>, vector<32x256xf32>
      tpu.vector_store %arg7[%c0_10, %c0_11], %12 {strides = array<i32>} : memref<32x256xf32, #tpu.memory_space<vmem>>, vector<32x256xf32>,
    } else {
    }
    %c0 = arith.constant 0 : index
    %c0_1 = arith.constant 0 : index
    %3 = vector.load %arg7[%c0, %c0_1] : memref<32x256xf32, #tpu.memory_space<vmem>>, vector<32x256xf32>
    %c0_2 = arith.constant 0 : index
    %c0_3 = arith.constant 0 : index
    %4 = vector.load %arg3[%c0_2, %c0_3] : memref<32x512xbf16, #tpu.memory_space<vmem>>, vector<32x512xbf16>
    %c0_4 = arith.constant 0 : index
    %c0_5 = arith.constant 0 : index
    %5 = vector.load %arg4[%c0_4, %c0_5] : memref<512x256xbf16, #tpu.memory_space<vmem>>, vector<512x256xbf16>
    %cst = arith.constant dense<0.000000e+00> : vector<32x256xf32>
    %6 = tpu.matmul %4, %5, %cst {dimension_numbers = #tpu.dot_dimension_numbers<[1], [0], [0], [1], [0, 0, 1, 1], [], []>} : vector<32x512xbf16>, vector<512x256xbf16>, vector<32x256xf32> -> vector<32x256xf32>
    %7 = arith.addf %3, %6 : vector<32x256xf32>
    %c0_6 = arith.constant 0 : index
    %c0_7 = arith.constant 0 : index
    %8 = vector.load %arg7[%c0_6, %c0_7] : memref<32x256xf32, #tpu.memory_space<vmem>>, vector<32x256xf32>
    tpu.vector_store %arg7[%c0_6, %c0_7], %7 {strides = array<i32>} : memref<32x256xf32, #tpu.memory_space<vmem>>, vector<32x256xf32>,
    %c3_i32 = arith.constant 3 : i32
    %9 = arith.cmpi eq, %arg2, %c3_i32 : i32
    %10 = arith.extui %9 : i1 to i32
    %c0_i32_8 = arith.constant 0 : i32
    %11 = arith.cmpi ne, %10, %c0_i32_8 : i32
    scf.if %11 {
      %c0_9 = arith.constant 0 : index
      %c0_10 = arith.constant 0 : index
      %12 = vector.load %arg7[%c0_9, %c0_10] : memref<32x256xf32, #tpu.memory_space<vmem>>, vector<32x256xf32>
      %c0_11 = arith.constant 0 : index
      %c0_12 = arith.constant 0 : index
      %13 = vector.load %arg5[%c0_11, %c0_12] : memref<1x256xf32, #tpu.memory_space<vmem>>, vector<1x256xf32>
      %14 = vector.broadcast %13 : vector<1x256xf32> to vector<32x256xf32>
      %15 = arith.mulf %12, %14 : vector<32x256xf32>
      %c0_13 = arith.constant 0 : index
      %c0_14 = arith.constant 0 : index
      %16 = vector.load %arg6[%c0_13, %c0_14] : memref<1x256xf32, #tpu.memory_space<vmem>>, vector<1x256xf32>
      %17 = vector.broadcast %16 : vector<1x256xf32> to vector<32x256xf32>
      %18 = arith.addf %15, %17 : vector<32x256xf32>
      %cst_15 = arith.constant 0.000000e+00 : f32
      %19 = vector.broadcast %cst_15 : f32 to vector<32x256xf32>
      %20 = arith.cmpf oge, %18, %19 : vector<32x256xf32>
      %cst_16 = arith.constant 2.000000e-01 : f32
      %21 = vector.broadcast %cst_16 : f32 to vector<32x256xf32>
      %22 = arith.mulf %21, %18 : vector<32x256xf32>
      %23 = arith.select %20, %18, %22 : vector<32x256xi1>, vector<32x256xf32>
      %c0_17 = arith.constant 0 : index
      %c0_18 = arith.constant 0 : index
      %24 = vector.load %arg7[%c0_17, %c0_18] : memref<32x256xf32, #tpu.memory_space<vmem>>, vector<32x256xf32>
      tpu.vector_store %arg7[%c0_17, %c0_18], %23 {strides = array<i32>} : memref<32x256xf32, #tpu.memory_space<vmem>>, vector<32x256xf32>,
    } else {
    }
    return
  }
  func.func @transform_0(%arg0: i32, %arg1: i32, %arg2: i32) -> (i32, i32) {
    %c0_i32 = arith.constant 0 : i32
    return %arg0, %arg2 : i32, i32
  }
  func.func @transform_1(%arg0: i32, %arg1: i32, %arg2: i32) -> (i32, i32) {
    %c0_i32 = arith.constant 0 : i32
    return %arg2, %arg1 : i32, i32
  }
  func.func @transform_2(%arg0: i32, %arg1: i32, %arg2: i32) -> (i32, i32) {
    %c0_i32 = arith.constant 0 : i32
    %c0_i32_0 = arith.constant 0 : i32
    return %c0_i32, %arg1 : i32, i32
  }
  func.func @transform_3(%arg0: i32, %arg1: i32, %arg2: i32) -> (i32, i32) {
    %c0_i32 = arith.constant 0 : i32
    %c0_i32_0 = arith.constant 0 : i32
    return %c0_i32, %arg1 : i32, i32
  }
  func.func @transform_4(%arg0: i32, %arg1: i32, %arg2: i32) -> (i32, i32) {
    %c0_i32 = arith.constant 0 : i32
    return %arg0, %arg1 : i32, i32
  }
}

module attributes {stable_mosaic.version = 11 : i64} {
  func.func @fused_gemm_affine_lrelu_kernel(%arg0: i32, %arg1: i32, %arg2: i32, %arg3: memref<24x512xbf16, #tpu.memory_space<vmem>>, %arg4: memref<512x256xbf16, #tpu.memory_space<vmem>>, %arg5: memref<1x256xf32, #tpu.memory_space<vmem>>, %arg6: memref<1x256xf32, #tpu.memory_space<vmem>>, %arg7: memref<24x256xf32, #tpu.memory_space<vmem>>) attributes {dimension_semantics = [#tpu.dimension_semantics<parallel>, #tpu.dimension_semantics<parallel>, #tpu.dimension_semantics<arbitrary>], iteration_bounds = array<i64: 1, 2, 8>, scalar_prefetch = 0 : i64, scratch_operands = 0 : i64, tpu.core_type = #tpu.core_type<tc>, window_params = [{transform_indices = @transform_0, window_bounds = array<i64: 24, 512>}, {transform_indices = @transform_1, window_bounds = array<i64: 512, 256>}, {transform_indices = @transform_2, window_bounds = array<i64: 1, 256>}, {transform_indices = @transform_3, window_bounds = array<i64: 1, 256>}, {transform_indices = @transform_4, window_bounds = array<i64: 24, 256>}]} {
    %c0_i32 = arith.constant 0 : i32
    %0 = arith.cmpi eq, %arg2, %c0_i32 : i32
    %1 = arith.extui %0 : i1 to i32
    %c0_i32_0 = arith.constant 0 : i32
    %2 = arith.cmpi ne, %1, %c0_i32_0 : i32
    scf.if %2 {
      %cst_9 = arith.constant 0.000000e+00 : f32
      %12 = vector.broadcast %cst_9 : f32 to vector<24x256xf32>
      %c0_10 = arith.constant 0 : index
      %c0_11 = arith.constant 0 : index
      %13 = vector.load %arg7[%c0_10, %c0_11] : memref<24x256xf32, #tpu.memory_space<vmem>>, vector<24x256xf32>
      tpu.vector_store %arg7[%c0_10, %c0_11], %12 {strides = array<i32>} : memref<24x256xf32, #tpu.memory_space<vmem>>, vector<24x256xf32>,
    } else {
    }
    %c0 = arith.constant 0 : index
    %c0_1 = arith.constant 0 : index
    %3 = vector.load %arg7[%c0, %c0_1] : memref<24x256xf32, #tpu.memory_space<vmem>>, vector<24x256xf32>
    %c0_2 = arith.constant 0 : index
    %c0_3 = arith.constant 0 : index
    %4 = vector.load %arg3[%c0_2, %c0_3] : memref<24x512xbf16, #tpu.memory_space<vmem>>, vector<24x512xbf16>
    %c0_4 = arith.constant 0 : index
    %c0_5 = arith.constant 0 : index
    %5 = vector.load %arg4[%c0_4, %c0_5] : memref<512x256xbf16, #tpu.memory_space<vmem>>, vector<512x256xbf16>
    %cst = arith.constant dense<0.000000e+00> : vector<24x256xf32>
    %6 = tpu.matmul %4, %5, %cst {dimension_numbers = #tpu.dot_dimension_numbers<[1], [0], [0], [1], [0, 0, 1, 1], [], []>} : vector<24x512xbf16>, vector<512x256xbf16>, vector<24x256xf32> -> vector<24x256xf32>
    %7 = arith.addf %3, %6 : vector<24x256xf32>
    %c0_6 = arith.constant 0 : index
    %c0_7 = arith.constant 0 : index
    %8 = vector.load %arg7[%c0_6, %c0_7] : memref<24x256xf32, #tpu.memory_space<vmem>>, vector<24x256xf32>
    tpu.vector_store %arg7[%c0_6, %c0_7], %7 {strides = array<i32>} : memref<24x256xf32, #tpu.memory_space<vmem>>, vector<24x256xf32>,
    %c7_i32 = arith.constant 7 : i32
    %9 = arith.cmpi eq, %arg2, %c7_i32 : i32
    %10 = arith.extui %9 : i1 to i32
    %c0_i32_8 = arith.constant 0 : i32
    %11 = arith.cmpi ne, %10, %c0_i32_8 : i32
    scf.if %11 {
      %c0_9 = arith.constant 0 : index
      %c0_10 = arith.constant 0 : index
      %12 = vector.load %arg7[%c0_9, %c0_10] : memref<24x256xf32, #tpu.memory_space<vmem>>, vector<24x256xf32>
      %c0_11 = arith.constant 0 : index
      %c0_12 = arith.constant 0 : index
      %13 = vector.load %arg5[%c0_11, %c0_12] : memref<1x256xf32, #tpu.memory_space<vmem>>, vector<1x256xf32>
      %14 = vector.broadcast %13 : vector<1x256xf32> to vector<24x256xf32>
      %15 = arith.mulf %12, %14 : vector<24x256xf32>
      %c0_13 = arith.constant 0 : index
      %c0_14 = arith.constant 0 : index
      %16 = vector.load %arg6[%c0_13, %c0_14] : memref<1x256xf32, #tpu.memory_space<vmem>>, vector<1x256xf32>
      %17 = vector.broadcast %16 : vector<1x256xf32> to vector<24x256xf32>
      %18 = arith.addf %15, %17 : vector<24x256xf32>
      %cst_15 = arith.constant 0.000000e+00 : f32
      %19 = vector.broadcast %cst_15 : f32 to vector<24x256xf32>
      %20 = arith.cmpf oge, %18, %19 : vector<24x256xf32>
      %cst_16 = arith.constant 2.000000e-01 : f32
      %21 = vector.broadcast %cst_16 : f32 to vector<24x256xf32>
      %22 = arith.mulf %21, %18 : vector<24x256xf32>
      %23 = arith.select %20, %18, %22 : vector<24x256xi1>, vector<24x256xf32>
      %c0_17 = arith.constant 0 : index
      %c0_18 = arith.constant 0 : index
      %24 = vector.load %arg7[%c0_17, %c0_18] : memref<24x256xf32, #tpu.memory_space<vmem>>, vector<24x256xf32>
      tpu.vector_store %arg7[%c0_17, %c0_18], %23 {strides = array<i32>} : memref<24x256xf32, #tpu.memory_space<vmem>>, vector<24x256xf32>,
    } else {
    }
    return
  }
  func.func @transform_0(%arg0: i32, %arg1: i32, %arg2: i32) -> (i32, i32) {
    %c0_i32 = arith.constant 0 : i32
    return %arg0, %arg2 : i32, i32
  }
  func.func @transform_1(%arg0: i32, %arg1: i32, %arg2: i32) -> (i32, i32) {
    %c0_i32 = arith.constant 0 : i32
    return %arg2, %arg1 : i32, i32
  }
  func.func @transform_2(%arg0: i32, %arg1: i32, %arg2: i32) -> (i32, i32) {
    %c0_i32 = arith.constant 0 : i32
    %c0_i32_0 = arith.constant 0 : i32
    return %c0_i32, %arg1 : i32, i32
  }
  func.func @transform_3(%arg0: i32, %arg1: i32, %arg2: i32) -> (i32, i32) {
    %c0_i32 = arith.constant 0 : i32
    %c0_i32_0 = arith.constant 0 : i32
    return %c0_i32, %arg1 : i32, i32
  }
  func.func @transform_4(%arg0: i32, %arg1: i32, %arg2: i32) -> (i32, i32) {
    %c0_i32 = arith.constant 0 : i32
    return %arg0, %arg1 : i32, i32
  }
}

</mosaic_0001>

<llo_original>
// kernel: discriminator_forward.5
$region0: #{discriminator_forward.5}
  #allocation0 [shape = 'u32[]', space=smem, size = 0x4, offset = 0x4, fixed_abs, tag = 'smem constant byte address 0x4 - core index']
  #allocation1 [shape = 'u32[144,128]{1,0:T(1,128)}', space=vmem, size = 0x12000, scoped, tag = 'internal scratch']
  %s0 = inlined_call_operand.vmem [shape: bf16[128,1024], index: 0, kind: input, shape index: {}]
  %s1 = inlined_call_operand.vmem [shape: bf16[1024,128], index: 1, kind: input, shape index: {}]
  %s2 = inlined_call_operand.vmem [shape: f32[1,128], index: 2, kind: input, shape index: {}]
  %s3 = inlined_call_operand.vmem [shape: f32[1,128], index: 3, kind: input, shape index: {}]
  %s4 = inlined_call_operand.vmem [shape: f32[128,128], index: 4, kind: output, shape index: {}]
  %s5 = sld [smem:[#allocation0]]
  $region80: #{discriminator_forward.5} parent=0
    _
  %s7 = ssub.s32 1, %s5
  %s8 = scalar_select 0, %s7, %s5
  $region1: #{discriminator_forward.5} parent=0
    #allocation2 [shape = 'u8[262144]{0}', space=vmem, size = 0x40000, scoped, tag = 'input window, operand 0']
    loop: start=0, step=1, limit=4
    $region2: #{discriminator_forward.5} parent=1 // loop_pre_header
      _
    $region3: #{discriminator_forward.5} parent=1 // loop_header
      %s10 = sphi 0, %s14
      %p11 = scmp.ge.s32.totalorder %s10, 4
      %s17 = sphi 0, %s36
      %s18 = sphi 0, %s32
      %s19 = sphi 0, %s28
      %s20 = sphi 0, %s17
      %s21 = sphi 0, %s18
      %s22 = sphi 0, %s19
      %s23 = sphi 0, %s20
      %s24 = sphi 0, %s21
      %s25 = sphi 0, %s22
      %s41 = sphi 0, %s43
      %s44 = sphi 0, %s41
      %s45 = sphi 0, %s44
      %s61 = sphi 0, %s45
      %s69 = sphi 0, %s71
      %s72 = sphi 0, %s69
      %s73 = sphi 0, %s72
      %s89 = sphi 0, %s73
      %s95 = sphi 0, %s97
      %s98 = sphi 0, %s95
      %s99 = sphi 0, %s98
      %s115 = sphi 0, %s99
      %s121 = sphi 0, %s123
      %s124 = sphi 0, %s121
      %s125 = sphi 0, %s124
      %s141 = sphi 0, %s125
      %s149 = sphi 0, %s151
      %s152 = sphi 0, %s149
      %s153 = sphi 0, %s152
      %s169 = sphi 0, %s153
    $region4: #{discriminator_forward.5} parent=1 // loop_header_branch
      %13 = sbr.rel (%p11) target = $region8
    $region5: #{discriminator_forward.5} parent=1 // loop_body
      %s15 = ssub.s32 %s10, 1
      %s16 = ssub.s32 %s10, 2
      %s26 = sadd.s32 1, %s19
      %p27 = scmp.ge.s32.totalorder %s26, 2
      %s28 = scalar_select %p27, 0, %s26
      %s29 = sadd.s32 1, %s18
      %s30 = scalar_select %p27, %s29, %s18
      %p31 = scmp.ge.s32.totalorder %s30, 1
      %s32 = scalar_select %p31, 0, %s30
      %s33 = sadd.s32 1, %s17
      %s34 = scalar_select %p31, %s33, %s17
      %p35 = scmp.ge.s32.totalorder %s34, 1
      %s36 = scalar_select %p35, 0, %s34
      %s37 = ssub.s32 %s17, %s36
      %s38 = ssub.s32 %s19, %s28
      %s39 = sor.u32 %s37, %s38
      %p40 = scmp.eq.s32.totalorder %s39, 0
      %s42 = sadd.s32 %s41, 1
      %s43 = scalar_select %p40, %s41, %s42
      %p46 = pneg %p40
      %p47 = scmp.eq.s32.totalorder %s10, 1
      %p48 = por %p46, %p47
      %p49 = scmp.ne.s32.totalorder %s41, %s44
      %p50 = scmp.eq.s32.totalorder %s10, 0
      %p51 = por %p49, %p50
      %p52 = scmp.ne.s32.totalorder %s41, %s44
      %p53 = scmp.eq.s32.totalorder %s15, 1
      %p54 = por %p52, %p53
      %p55 = scmp.ne.s32.totalorder %s44, %s45
      %p56 = scmp.eq.s32.totalorder %s15, 0
      %p57 = por %p55, %p56
      %p58 = scmp.ne.s32.totalorder %s44, %s45
      %p59 = scmp.eq.s32.totalorder %s16, 1
      %p60 = por %p58, %p59
      %p62 = scmp.ne.s32.totalorder %s45, %s61
      %p63 = scmp.eq.s32.totalorder %s16, 0
      %p64 = por %p62, %p63
      %s65 = ssub.s32 %s19, %s28
      %s66 = ssub.s32 %s18, %s32
      %s67 = sor.u32 %s65, %s66
      %p68 = scmp.eq.s32.totalorder %s67, 0
      %s70 = sadd.s32 %s69, 1
      %s71 = scalar_select %p68, %s69, %s70
      %p74 = pneg %p68
      %p75 = scmp.eq.s32.totalorder %s10, 1
      %p76 = por %p74, %p75
      %p77 = scmp.ne.s32.totalorder %s69, %s72
      %p78 = scmp.eq.s32.totalorder %s10, 0
      %p79 = por %p77, %p78
      %p80 = scmp.ne.s32.totalorder %s69, %s72
      %p81 = scmp.eq.s32.totalorder %s15, 1
      %p82 = por %p80, %p81
      %p83 = scmp.ne.s32.totalorder %s72, %s73
      %p84 = scmp.eq.s32.totalorder %s15, 0
      %p85 = por %p83, %p84
      %p86 = scmp.ne.s32.totalorder %s72, %s73
      %p87 = scmp.eq.s32.totalorder %s16, 1
      %p88 = por %p86, %p87
      %p90 = scmp.ne.s32.totalorder %s73, %s89
      %p91 = scmp.eq.s32.totalorder %s16, 0
      %p92 = por %p90, %p91
      %s93 = ssub.s32 %s18, %s32
      %p94 = scmp.eq.s32.totalorder %s93, 0
      %s96 = sadd.s32 %s95, 1
      %s97 = scalar_select %p94, %s95, %s96
      %p100 = pneg %p94
      %p101 = scmp.eq.s32.totalorder %s10, 1
      %p102 = por %p100, %p101
      %p103 = scmp.ne.s32.totalorder %s95, %s98
      %p104 = scmp.eq.s32.totalorder %s10, 0
      %p105 = por %p103, %p104
      %p106 = scmp.ne.s32.totalorder %s95, %s98
      %p107 = scmp.eq.s32.totalorder %s15, 1
      %p108 = por %p106, %p107
      %p109 = scmp.ne.s32.totalorder %s98, %s99
      %p110 = scmp.eq.s32.totalorder %s15, 0
      %p111 = por %p109, %p110
      %p112 = scmp.ne.s32.totalorder %s98, %s99
      %p113 = scmp.eq.s32.totalorder %s16, 1
      %p114 = por %p112, %p113
      %p116 = scmp.ne.s32.totalorder %s99, %s115
      %p117 = scmp.eq.s32.totalorder %s16, 0
      %p118 = por %p116, %p117
      %s119 = ssub.s32 %s18, %s32
      %p120 = scmp.eq.s32.totalorder %s119, 0
      %s122 = sadd.s32 %s121, 1
      %s123 = scalar_select %p120, %s121, %s122
      %p126 = pneg %p120
      %p127 = scmp.eq.s32.totalorder %s10, 1
      %p128 = por %p126, %p127
      %p129 = scmp.ne.s32.totalorder %s121, %s124
      %p130 = scmp.eq.s32.totalorder %s10, 0
      %p131 = por %p129, %p130
      %p132 = scmp.ne.s32.totalorder %s121, %s124
      %p133 = scmp.eq.s32.totalorder %s15, 1
      %p134 = por %p132, %p133
      %p135 = scmp.ne.s32.totalorder %s124, %s125
      %p136 = scmp.eq.s32.totalorder %s15, 0
      %p137 = por %p135, %p136
      %p138 = scmp.ne.s32.totalorder %s124, %s125
      %p139 = scmp.eq.s32.totalorder %s16, 1
      %p140 = por %p138, %p139
      %p142 = scmp.ne.s32.totalorder %s125, %s141
      %p143 = scmp.eq.s32.totalorder %s16, 0
      %p144 = por %p142, %p143
      %s145 = ssub.s32 %s17, %s36
      %s146 = ssub.s32 %s18, %s32
      %s147 = sor.u32 %s145, %s146
      %p148 = scmp.eq.s32.totalorder %s147, 0
      %s150 = sadd.s32 %s149, 1
      %s151 = scalar_select %p148, %s149, %s150
      %p154 = pneg %p148
      %p155 = scmp.eq.s32.totalorder %s10, 1
      %p156 = por %p154, %p155
      %p157 = scmp.ne.s32.totalorder %s149, %s152
      %p158 = scmp.eq.s32.totalorder %s10, 0
      %p159 = por %p157, %p158
      %p160 = scmp.ne.s32.totalorder %s149, %s152
      %p161 = scmp.eq.s32.totalorder %s15, 1
      %p162 = por %p160, %p161
      %p163 = scmp.ne.s32.totalorder %s152, %s153
      %p164 = scmp.eq.s32.totalorder %s15, 0
      %p165 = por %p163, %p164
      %p166 = scmp.ne.s32.totalorder %s152, %s153
      %p167 = scmp.eq.s32.totalorder %s16, 1
      %p168 = por %p166, %p167
      %p170 = scmp.ne.s32.totalorder %s153, %s169
      %p171 = scmp.eq.s32.totalorder %s16, 0
      %p172 = por %p170, %p171
      %p173 = scmp.le.s32.totalorder 1, %s10
      %p174 = scmp.lt.s32.totalorder %s10, 3
      %p175 = pnand %p173, %p174
      %p176 = pneg %p175
      // Predicated region
      $region9: #{discriminator_forward.5} parent=5 // pred_check
        _
      $region10: #{discriminator_forward.5} parent=5 // pred_check_branch
        %178 = sbr.rel (%p175) target = $region12
      $region11: #{discriminator_forward.5} parent=5 // pred_region
        %s179 = ssub.s32 %s10, 1
        // Predicated region
        $region13: #{discriminator_forward.5} parent=11 // pred_check
          %p180 = pneg %p111
        $region14: #{discriminator_forward.5} parent=11 // pred_check_branch
          %182 = sbr.rel (%p180) target = $region16
        $region15: #{discriminator_forward.5} parent=11 // pred_region
          %p183 = scmp.lt.s32.totalorder %s21, 0
          %s184 = scalar_select %p183, %s21, 0
          %s185 = scalar_lea.vmem %s2, %s184
        $region16: #{discriminator_forward.5} parent=11 // pred_fallthru
          _
        // Predicated region
        $region17: #{discriminator_forward.5} parent=11 // pred_check
          %p186 = pneg %p137
        $region18: #{discriminator_forward.5} parent=11 // pred_check_branch
          %188 = sbr.rel (%p186) target = $region20
        $region19: #{discriminator_forward.5} parent=11 // pred_region
          %p189 = scmp.lt.s32.totalorder %s21, 0
          %s190 = scalar_select %p189, %s21, 0
          %s191 = scalar_lea.vmem %s3, %s190
        $region20: #{discriminator_forward.5} parent=11 // pred_fallthru
          _
      $region12: #{discriminator_forward.5} parent=5 // pred_fallthru
        _
      %p192 = scmp.lt.s32.totalorder %s10, 2
      // Predicated region
      $region21: #{discriminator_forward.5} parent=5 // pred_check
        %p193 = pneg %p192
      $region22: #{discriminator_forward.5} parent=5 // pred_check_branch
        %195 = sbr.rel (%p193) target = $region24
      $region23: #{discriminator_forward.5} parent=5 // pred_region
        // Predicated region
        $region25: #{discriminator_forward.5} parent=23 // pred_check
          %p196 = pneg %p51
        $region26: #{discriminator_forward.5} parent=23 // pred_check_branch
          %198 = sbr.rel (%p196) target = $region28
        $region27: #{discriminator_forward.5} parent=23 // pred_region
          %s199 = sand.u32 %s41, 1
          %s200 = sand.u32 %s41, 1
          %s201 = smul.addr %s200, 256
          %s202 = scalar_lea.vmem [#allocation2], %s201
          %s203 = smul.u32 16, %s17
          %s204 = smul.u32 4, %s19
          %s205 = smul.addr %s203, 8
          %s206 = sadd.s32 %s204, %s205
          %s207 = smul.addr %s206, 4
          %s208 = scalar_lea.vmem %s0, %s207
          // Predicated region
          $region29: #{discriminator_forward.5} parent=27 // pred_check
            _
          $region30: #{discriminator_forward.5} parent=27 // pred_check_branch
            %210 = sbr.rel (0) target = $region32
          $region31: #{discriminator_forward.5} parent=27 // pred_region
            // Predicated region
            $region33: #{discriminator_forward.5} parent=31 // pred_check
              _
            $region34: #{discriminator_forward.5} parent=31 // pred_check_branch
              %212 = sbr.rel (0) target = $region36
            $region35: #{discriminator_forward.5} parent=31 // pred_region
              loop: start=0, step=1, limit=1
              $region37: #{discriminator_forward.5} parent=35 // loop_pre_header
                _
              $region38: #{discriminator_forward.5} parent=35 // loop_header
                %s214 = sphi 0, %s218
                %p215 = scmp.ge.s32.totalorder %s214, 1
                %s219 = sphi %s208, %s208
                %s220 = sphi %s202, %s202
              $region39: #{discriminator_forward.5} parent=35 // loop_header_branch
                %217 = sbr.rel (%p215) target = $region43
              $region40: #{discriminator_forward.5} parent=35 // loop_body
                %v221 = vld [vmem:[%s219] sm:$0xff]
                %222 = vst [vmem:[%s220] sm:$0xff] %v221
                %v223 = vld [vmem:[%s219 + $0x8] sm:$0xff]
                %224 = vst [vmem:[%s220 + $0x8] sm:$0xff] %v223
                %v225 = vld [vmem:[%s219 + $0x20] sm:$0xff]
                %226 = vst [vmem:[%s220 + $0x10] sm:$0xff] %v225
                %v227 = vld [vmem:[%s219 + $0x28] sm:$0xff]
                %228 = vst [vmem:[%s220 + $0x18] sm:$0xff] %v227
                %v229 = vld [vmem:[%s219 + $0x40] sm:$0xff]
                %230 = vst [vmem:[%s220 + $0x20] sm:$0xff] %v229
                %v231 = vld [vmem:[%s219 + $0x48] sm:$0xff]
                %232 = vst [vmem:[%s220 + $0x28] sm:$0xff] %v231
                %v233 = vld [vmem:[%s219 + $0x60] sm:$0xff]
                %234 = vst [vmem:[%s220 + $0x30] sm:$0xff] %v233
                %v235 = vld [vmem:[%s219 + $0x68] sm:$0xff]
                %236 = vst [vmem:[%s220 + $0x38] sm:$0xff] %v235
                %v237 = vld [vmem:[%s219 + $0x80] sm:$0xff]
                %238 = vst [vmem:[%s220 + $0x40] sm:$0xff] %v237
                %v239 = vld [vmem:[%s219 + $0x88] sm:$0xff]
                %240 = vst [vmem:[%s220 + $0x48] sm:$0xff] %v239
                %v241 = vld [vmem:[%s219 + $0xa0] sm:$0xff]
                %242 = vst [vmem:[%s220 + $0x50] sm:$0xff] %v241
                %v243 = vld [vmem:[%s219 + $0xa8] sm:$0xff]
                %244 = vst [vmem:[%s220 + $0x58] sm:$0xff] %v243
                %v245 = vld [vmem:[%s219 + $0xc0] sm:$0xff]
                %246 = vst [vmem:[%s220 + $0x60] sm:$0xff] %v245
                %v247 = vld [vmem:[%s219 + $0xc8] sm:$0xff]
                %248 = vst [vmem:[%s220 + $0x68] sm:$0xff] %v247
                %v249 = vld [vmem:[%s219 + $0xe0] sm:$0xff]
                %250 = vst [vmem:[%s220 + $0x70] sm:$0xff] %v249
                %v251 = vld [vmem:[%s219 + $0xe8] sm:$0xff]
                %252 = vst [vmem:[%s220 + $0x78] sm:$0xff] %v251
                %v253 = vld [vmem:[%s219 + $0x100] sm:$0xff]
                %254 = vst [vmem:[%s220 + $0x80] sm:$0xff] %v253
                %v255 = vld [vmem:[%s219 + $0x108] sm:$0xff]
                %256 = vst [vmem:[%s220 + $0x88] sm:$0xff] %v255
                %v257 = vld [vmem:[%s219 + $0x120] sm:$0xff]
                %258 = vst [vmem:[%s220 + $0x90] sm:$0xff] %v257
                %v259 = vld [vmem:[%s219 + $0x128] sm:$0xff]
                %260 = vst [vmem:[%s220 + $0x98] sm:$0xff] %v259
                %v261 = vld [vmem:[%s219 + $0x140] sm:$0xff]
                %262 = vst [vmem:[%s220 + $0xa0] sm:$0xff] %v261
                %v263 = vld [vmem:[%s219 + $0x148] sm:$0xff]
                %264 = vst [vmem:[%s220 + $0xa8] sm:$0xff] %v263
                %v265 = vld [vmem:[%s219 + $0x160] sm:$0xff]
                %266 = vst [vmem:[%s220 + $0xb0] sm:$0xff] %v265
                %v267 = vld [vmem:[%s219 + $0x168] sm:$0xff]
                %268 = vst [vmem:[%s220 + $0xb8] sm:$0xff] %v267
                %v269 = vld [vmem:[%s219 + $0x180] sm:$0xff]
                %270 = vst [vmem:[%s220 + $0xc0] sm:$0xff] %v269
                %v271 = vld [vmem:[%s219 + $0x188] sm:$0xff]
                %272 = vst [vmem:[%s220 + $0xc8] sm:$0xff] %v271
                %v273 = vld [vmem:[%s219 + $0x1a0] sm:$0xff]
                %274 = vst [vmem:[%s220 + $0xd0] sm:$0xff] %v273
                %v275 = vld [vmem:[%s219 + $0x1a8] sm:$0xff]
                %276 = vst [vmem:[%s220 + $0xd8] sm:$0xff] %v275
                %v277 = vld [vmem:[%s219 + $0x1c0] sm:$0xff]
                %278 = vst [vmem:[%s220 + $0xe0] sm:$0xff] %v277
                %v279 = vld [vmem:[%s219 + $0x1c8] sm:$0xff]
                %280 = vst [vmem:[%s220 + $0xe8] sm:$0xff] %v279
                %v281 = vld [vmem:[%s219 + $0x1e0] sm:$0xff]
                %282 = vst [vmem:[%s220 + $0xf0] sm:$0xff] %v281
                %v283 = vld [vmem:[%s219 + $0x1e8] sm:$0xff]
                %284 = vst [vmem:[%s220 + $0xf8] sm:$0xff] %v283
              $region41: #{discriminator_forward.5} parent=35 // loop_footer
                %s218 = sadd.s32 1, %s214
              $region42: #{discriminator_forward.5} parent=35 // loop_footer_branch
                %213 = sbr.rel target = $region38
              $region43: #{discriminator_forward.5} parent=35 // loop_exit
                _
            $region36: #{discriminator_forward.5} parent=31 // pred_fallthru
              _
            // Predicated region
            $region44: #{discriminator_forward.5} parent=31 // pred_check
              _
            $region45: #{discriminator_forward.5} parent=31 // pred_check_branch
              %286 = sbr.rel target = $region47
            $region46: #{discriminator_forward.5} parent=31 // pred_region
              _
            $region47: #{discriminator_forward.5} parent=31 // pred_fallthru
              _
          $region32: #{discriminator_forward.5} parent=27 // pred_fallthru
            _
          %287 = vnop
        $region28: #{discriminator_forward.5} parent=23 // pred_fallthru
          _
        // Predicated region
        $region48: #{discriminator_forward.5} parent=23 // pred_check
          %p288 = pneg %p79
        $region49: #{discriminator_forward.5} parent=23 // pred_check_branch
          %290 = sbr.rel (%p288) target = $region51
        $region50: #{discriminator_forward.5} parent=23 // pred_region
          %s291 = smul.u32 64, %s19
          %p292 = scmp.lt.s32.totalorder %s291, 127
          %s293 = scalar_select %p292, %s291, 127
          %p294 = scmp.lt.s32.totalorder %s18, 0
          %s295 = scalar_select %p294, %s18, 0
          %s296 = sadd.s32 %s295, %s293
          %s297 = smul.addr %s296, 4
          %s298 = scalar_lea.vmem %s1, %s297
          %s299 = smul.u32 64, %s19
        $region51: #{discriminator_forward.5} parent=23 // pred_fallthru
          _
      $region24: #{discriminator_forward.5} parent=5 // pred_fallthru
        _
      %p300 = scmp.le.s32.totalorder 1, %s10
      %p301 = scmp.lt.s32.totalorder %s10, 3
      %p302 = pnand %p300, %p301
      %p303 = pneg %p302
      // Predicated region
      $region52: #{discriminator_forward.5} parent=5 // pred_check
        _
      $region53: #{discriminator_forward.5} parent=5 // pred_check_branch
        %305 = sbr.rel (%p302) target = $region55
      $region54: #{discriminator_forward.5} parent=5 // pred_region
        %s306 = ssub.s32 %s10, 1
        %s307 = sand.u32 %s44, 1
        %s308 = sand.u32 %s44, 1
        %s309 = smul.addr %s308, 256
        %s310 = scalar_lea.vmem [#allocation2], %s309
        // Predicated region
        $region56: #{discriminator_forward.5} parent=54 // pred_check
          %p311 = pneg %p57
        $region57: #{discriminator_forward.5} parent=54 // pred_check_branch
          %313 = sbr.rel (%p311) target = $region59
        $region58: #{discriminator_forward.5} parent=54 // pred_region
          _
        $region59: #{discriminator_forward.5} parent=54 // pred_fallthru
          _
        %s314 = sand.u32 %s44, 1
        %s315 = sand.u32 %s44, 1
        %s316 = smul.addr %s315, 256
        %s317 = scalar_lea.vmem [#allocation2], %s316
        %p318 = pneg %p57
        %p319 = pneg %p54
        %s320 = smul.u32 64, %s22
        %p321 = scmp.lt.s32.totalorder %s320, 127
        %s322 = scalar_select %p321, %s320, 127
        %p323 = scmp.lt.s32.totalorder %s21, 0
        %s324 = scalar_select %p323, %s21, 0
        %s325 = sadd.s32 %s324, %s322
        %s326 = smul.addr %s325, 4
        %s327 = scalar_lea.vmem %s1, %s326
        %p328 = pneg %p85
        %p329 = pneg %p82
        %p330 = scmp.lt.s32.totalorder %s21, 0
        %s331 = scalar_select %p330, %s21, 0
        %s332 = scalar_lea.vmem %s2, %s331
        %p333 = pneg %p111
        %p334 = pneg %p108
        %p335 = scmp.lt.s32.totalorder %s21, 0
        %s336 = scalar_select %p335, %s21, 0
        %s337 = scalar_lea.vmem %s3, %s336
        %p338 = pneg %p137
        %p339 = pneg %p134
        %p340 = pneg %p165
        %p341 = pneg %p162
        %s342 = smul.u32 16, %s20
        %p343 = scmp.lt.s32.totalorder %s342, 15
        %s344 = scalar_select %p343, %s342, 15
        %p345 = scmp.lt.s32.totalorder %s21, 0
        %s346 = scalar_select %p345, %s21, 0
        %s347 = sadd.s32 %s346, %s344
        %s348 = smul.addr %s347, 8
        %s349 = scalar_lea.vmem %s4, %s348
        %s350 = smul.u32 16, %s20
        %s351 = smul.u32 4, %s22
        %s352 = smul.u32 64, %s22
        %p353 = scmp.lt.s32.totalorder %s352, 127
        %s354 = scalar_select %p353, %s352, 127
        %p355 = scmp.lt.s32.totalorder %s21, 0
        %s356 = scalar_select %p355, %s21, 0
        %s357 = sadd.s32 %s356, %s354
        %s358 = smul.addr %s357, 4
        %s359 = scalar_lea.vmem %s1, %s358
        %s360 = smul.u32 64, %s22
        %p361 = scmp.lt.s32.totalorder %s21, 0
        %s362 = scalar_select %p361, %s21, 0
        %s363 = scalar_lea.vmem %s2, %s362
        %p364 = scmp.lt.s32.totalorder %s21, 0
        %s365 = scalar_select %p364, %s21, 0
        %s366 = scalar_lea.vmem %s3, %s365
        %s367 = smul.u32 16, %s20
        %p368 = scmp.lt.s32.totalorder %s367, 15
        %s369 = scalar_select %p368, %s367, 15
        %p370 = scmp.lt.s32.totalorder %s21, 0
        %s371 = scalar_select %p370, %s21, 0
        %s372 = sadd.s32 %s371, %s369
        %s373 = smul.addr %s372, 8
        %s374 = scalar_lea.vmem %s4, %s373
        %s375 = smul.u32 16, %s20
        %p377 = scmp.eq.s32.totalorder %s22, 0
        // Predicated region
        $region60: #{discriminator_forward.5} parent=54 // pred_check
          %p378 = pneg %p377
        $region61: #{discriminator_forward.5} parent=54 // pred_check_branch
          %380 = sbr.rel (%p378) target = $region63
        $region62: #{discriminator_forward.5} parent=54 // pred_region
          %381 = vst [vmem:[%s374] sm:$0xff] 0.0
          %382 = vst [vmem:[%s374 + $0x8] sm:$0xff] 0.0
          %383 = vst [vmem:[%s374 + $0x10] sm:$0xff] 0.0
          %384 = vst [vmem:[%s374 + $0x18] sm:$0xff] 0.0
          %385 = vst [vmem:[%s374 + $0x20] sm:$0xff] 0.0
          %386 = vst [vmem:[%s374 + $0x28] sm:$0xff] 0.0
          %387 = vst [vmem:[%s374 + $0x30] sm:$0xff] 0.0
          %388 = vst [vmem:[%s374 + $0x38] sm:$0xff] 0.0
          %389 = vst [vmem:[%s374 + $0x40] sm:$0xff] 0.0
          %390 = vst [vmem:[%s374 + $0x48] sm:$0xff] 0.0
          %391 = vst [vmem:[%s374 + $0x50] sm:$0xff] 0.0
          %392 = vst [vmem:[%s374 + $0x58] sm:$0xff] 0.0
          %393 = vst [vmem:[%s374 + $0x60] sm:$0xff] 0.0
          %394 = vst [vmem:[%s374 + $0x68] sm:$0xff] 0.0
          %395 = vst [vmem:[%s374 + $0x70] sm:$0xff] 0.0
          %396 = vst [vmem:[%s374 + $0x78] sm:$0xff] 0.0
        $region63: #{discriminator_forward.5} parent=54 // pred_fallthru
          _
        %v397 = vld [vmem:[%s374] sm:$0xff]
        %v398 = vld [vmem:[%s374 + $0x8] sm:$0xff]
        %v399 = vld [vmem:[%s374 + $0x10] sm:$0xff]
        %v400 = vld [vmem:[%s374 + $0x18] sm:$0xff]
        %v401 = vld [vmem:[%s374 + $0x20] sm:$0xff]
        %v402 = vld [vmem:[%s374 + $0x28] sm:$0xff]
        %v403 = vld [vmem:[%s374 + $0x30] sm:$0xff]
        %v404 = vld [vmem:[%s374 + $0x38] sm:$0xff]
        %v405 = vld [vmem:[%s374 + $0x40] sm:$0xff]
        %v406 = vld [vmem:[%s374 + $0x48] sm:$0xff]
        %v407 = vld [vmem:[%s374 + $0x50] sm:$0xff]
        %v408 = vld [vmem:[%s374 + $0x58] sm:$0xff]
        %v409 = vld [vmem:[%s374 + $0x60] sm:$0xff]
        %v410 = vld [vmem:[%s374 + $0x68] sm:$0xff]
        %v411 = vld [vmem:[%s374 + $0x70] sm:$0xff]
        %v412 = vld [vmem:[%s374 + $0x78] sm:$0xff]
        %v413 = vld [vmem:[%s310] sm:$0xff]
        %v414 = vld [vmem:[%s310 + $0x8] sm:$0xff]
        %v415 = vld [vmem:[%s310 + $0x10] sm:$0xff]
        %v416 = vld [vmem:[%s310 + $0x18] sm:$0xff]
        %v417 = vld [vmem:[%s310 + $0x20] sm:$0xff]
        %v418 = vld [vmem:[%s310 + $0x28] sm:$0xff]
        %v419 = vld [vmem:[%s310 + $0x30] sm:$0xff]
        %v420 = vld [vmem:[%s310 + $0x38] sm:$0xff]
        %v421 = vld [vmem:[%s310 + $0x40] sm:$0xff]
        %v422 = vld [vmem:[%s310 + $0x48] sm:$0xff]
        %v423 = vld [vmem:[%s310 + $0x50] sm:$0xff]
        %v424 = vld [vmem:[%s310 + $0x58] sm:$0xff]
        %v425 = vld [vmem:[%s310 + $0x60] sm:$0xff]
        %v426 = vld [vmem:[%s310 + $0x68] sm:$0xff]
        %v427 = vld [vmem:[%s310 + $0x70] sm:$0xff]
        %v428 = vld [vmem:[%s310 + $0x78] sm:$0xff]
        %v429 = vld [vmem:[%s310 + $0x80] sm:$0xff]
        %v430 = vld [vmem:[%s310 + $0x88] sm:$0xff]
        %v431 = vld [vmem:[%s310 + $0x90] sm:$0xff]
        %v432 = vld [vmem:[%s310 + $0x98] sm:$0xff]
        %v433 = vld [vmem:[%s310 + $0xa0] sm:$0xff]
        %v434 = vld [vmem:[%s310 + $0xa8] sm:$0xff]
        %v435 = vld [vmem:[%s310 + $0xb0] sm:$0xff]
        %v436 = vld [vmem:[%s310 + $0xb8] sm:$0xff]
        %v437 = vld [vmem:[%s310 + $0xc0] sm:$0xff]
        %v438 = vld [vmem:[%s310 + $0xc8] sm:$0xff]
        %v439 = vld [vmem:[%s310 + $0xd0] sm:$0xff]
        %v440 = vld [vmem:[%s310 + $0xd8] sm:$0xff]
        %v441 = vld [vmem:[%s310 + $0xe0] sm:$0xff]
        %v442 = vld [vmem:[%s310 + $0xe8] sm:$0xff]
        %v443 = vld [vmem:[%s310 + $0xf0] sm:$0xff]
        %v444 = vld [vmem:[%s310 + $0xf8] sm:$0xff]
        %v445 = vld [vmem:[%s359] sm:$0xf]
        %v446 = vld [vmem:[%s359 + $0x4] sm:$0xf]
        %v447 = vld [vmem:[%s359 + $0x8] sm:$0xf]
        %v448 = vld [vmem:[%s359 + $0xc] sm:$0xf]
        %v449 = vld [vmem:[%s359 + $0x10] sm:$0xf]
        %v450 = vld [vmem:[%s359 + $0x14] sm:$0xf]
        %v451 = vld [vmem:[%s359 + $0x18] sm:$0xf]
        %v452 = vld [vmem:[%s359 + $0x1c] sm:$0xf]
        %v453 = vld [vmem:[%s359 + $0x20] sm:$0xf]
        %v454 = vld [vmem:[%s359 + $0x24] sm:$0xf]
        %v455 = vld [vmem:[%s359 + $0x28] sm:$0xf]
        %v456 = vld [vmem:[%s359 + $0x2c] sm:$0xf]
        %v457 = vld [vmem:[%s359 + $0x30] sm:$0xf]
        %v458 = vld [vmem:[%s359 + $0x34] sm:$0xf]
        %v459 = vld [vmem:[%s359 + $0x38] sm:$0xf]
        %v460 = vld [vmem:[%s359 + $0x3c] sm:$0xf]
        %v461 = vld [vmem:[%s359 + $0x40] sm:$0xf]
        %v462 = vld [vmem:[%s359 + $0x44] sm:$0xf]
        %v463 = vld [vmem:[%s359 + $0x48] sm:$0xf]
        %v464 = vld [vmem:[%s359 + $0x4c] sm:$0xf]
        %v465 = vld [vmem:[%s359 + $0x50] sm:$0xf]
        %v466 = vld [vmem:[%s359 + $0x54] sm:$0xf]
        %v467 = vld [vmem:[%s359 + $0x58] sm:$0xf]
        %v468 = vld [vmem:[%s359 + $0x5c] sm:$0xf]
        %v469 = vld [vmem:[%s359 + $0x60] sm:$0xf]
        %v470 = vld [vmem:[%s359 + $0x64] sm:$0xf]
        %v471 = vld [vmem:[%s359 + $0x68] sm:$0xf]
        %v472 = vld [vmem:[%s359 + $0x6c] sm:$0xf]
        %v473 = vld [vmem:[%s359 + $0x70] sm:$0xf]
        %v474 = vld [vmem:[%s359 + $0x74] sm:$0xf]
        %v475 = vld [vmem:[%s359 + $0x78] sm:$0xf]
        %v476 = vld [vmem:[%s359 + $0x7c] sm:$0xf]
        %v477 = vld [vmem:[%s359 + $0x80] sm:$0xf]
        %v478 = vld [vmem:[%s359 + $0x84] sm:$0xf]
        %v479 = vld [vmem:[%s359 + $0x88] sm:$0xf]
        %v480 = vld [vmem:[%s359 + $0x8c] sm:$0xf]
        %v481 = vld [vmem:[%s359 + $0x90] sm:$0xf]
        %v482 = vld [vmem:[%s359 + $0x94] sm:$0xf]
        %v483 = vld [vmem:[%s359 + $0x98] sm:$0xf]
        %v484 = vld [vmem:[%s359 + $0x9c] sm:$0xf]
        %v485 = vld [vmem:[%s359 + $0xa0] sm:$0xf]
        %v486 = vld [vmem:[%s359 + $0xa4] sm:$0xf]
        %v487 = vld [vmem:[%s359 + $0xa8] sm:$0xf]
        %v488 = vld [vmem:[%s359 + $0xac] sm:$0xf]
        %v489 = vld [vmem:[%s359 + $0xb0] sm:$0xf]
        %v490 = vld [vmem:[%s359 + $0xb4] sm:$0xf]
        %v491 = vld [vmem:[%s359 + $0xb8] sm:$0xf]
        %v492 = vld [vmem:[%s359 + $0xbc] sm:$0xf]
        %v493 = vld [vmem:[%s359 + $0xc0] sm:$0xf]
        %v494 = vld [vmem:[%s359 + $0xc4] sm:$0xf]
        %v495 = vld [vmem:[%s359 + $0xc8] sm:$0xf]
        %v496 = vld [vmem:[%s359 + $0xcc] sm:$0xf]
        %v497 = vld [vmem:[%s359 + $0xd0] sm:$0xf]
        %v498 = vld [vmem:[%s359 + $0xd4] sm:$0xf]
        %v499 = vld [vmem:[%s359 + $0xd8] sm:$0xf]
        %v500 = vld [vmem:[%s359 + $0xdc] sm:$0xf]
        %v501 = vld [vmem:[%s359 + $0xe0] sm:$0xf]
        %v502 = vld [vmem:[%s359 + $0xe4] sm:$0xf]
        %v503 = vld [vmem:[%s359 + $0xe8] sm:$0xf]
        %v504 = vld [vmem:[%s359 + $0xec] sm:$0xf]
        %v505 = vld [vmem:[%s359 + $0xf0] sm:$0xf]
        %v506 = vld [vmem:[%s359 + $0xf4] sm:$0xf]
        %v507 = vld [vmem:[%s359 + $0xf8] sm:$0xf]
        %v508 = vld [vmem:[%s359 + $0xfc] sm:$0xf]
        %v541 = vunpack.c.l.b16 %v413
        %v542 = vunpack.c.h.b16 %v413
        %v543 = vunpack.c.l.b16 %v414
        %v544 = vunpack.c.h.b16 %v414
        %v545 = vunpack.c.l.b16 %v415
        %v546 = vunpack.c.h.b16 %v415
        %v547 = vunpack.c.l.b16 %v416
        %v548 = vunpack.c.h.b16 %v416
        %v549 = vunpack.c.l.b16 %v417
        %v550 = vunpack.c.h.b16 %v417
        %v551 = vunpack.c.l.b16 %v418
        %v552 = vunpack.c.h.b16 %v418
        %v553 = vunpack.c.l.b16 %v419
        %v554 = vunpack.c.h.b16 %v419
        %v555 = vunpack.c.l.b16 %v420
        %v556 = vunpack.c.h.b16 %v420
        %v557 = vunpack.c.l.b16 %v421
        %v558 = vunpack.c.h.b16 %v421
        %v559 = vunpack.c.l.b16 %v422
        %v560 = vunpack.c.h.b16 %v422
        %v561 = vunpack.c.l.b16 %v423
        %v562 = vunpack.c.h.b16 %v423
        %v563 = vunpack.c.l.b16 %v424
        %v564 = vunpack.c.h.b16 %v424
        %v565 = vunpack.c.l.b16 %v425
        %v566 = vunpack.c.h.b16 %v425
        %v567 = vunpack.c.l.b16 %v426
        %v568 = vunpack.c.h.b16 %v426
        %v569 = vunpack.c.l.b16 %v427
        %v570 = vunpack.c.h.b16 %v427
        %v571 = vunpack.c.l.b16 %v428
        %v572 = vunpack.c.h.b16 %v428
        %v573 = vunpack.c.l.b16 %v429
        %v574 = vunpack.c.h.b16 %v429
        %v575 = vunpack.c.l.b16 %v430
        %v576 = vunpack.c.h.b16 %v430
        %v577 = vunpack.c.l.b16 %v431
        %v578 = vunpack.c.h.b16 %v431
        %v579 = vunpack.c.l.b16 %v432
        %v580 = vunpack.c.h.b16 %v432
        %v581 = vunpack.c.l.b16 %v433
        %v582 = vunpack.c.h.b16 %v433
        %v583 = vunpack.c.l.b16 %v434
        %v584 = vunpack.c.h.b16 %v434
        %v585 = vunpack.c.l.b16 %v435
        %v586 = vunpack.c.h.b16 %v435
        %v587 = vunpack.c.l.b16 %v436
        %v588 = vunpack.c.h.b16 %v436
        %v589 = vunpack.c.l.b16 %v437
        %v590 = vunpack.c.h.b16 %v437
        %v591 = vunpack.c.l.b16 %v438
        %v592 = vunpack.c.h.b16 %v438
        %v593 = vunpack.c.l.b16 %v439
        %v594 = vunpack.c.h.b16 %v439
        %v595 = vunpack.c.l.b16 %v440
        %v596 = vunpack.c.h.b16 %v440
        %v597 = vunpack.c.l.b16 %v441
        %v598 = vunpack.c.h.b16 %v441
        %v599 = vunpack.c.l.b16 %v442
        %v600 = vunpack.c.h.b16 %v442
        %v601 = vunpack.c.l.b16 %v443
        %v602 = vunpack.c.h.b16 %v443
        %v603 = vunpack.c.l.b16 %v444
        %v604 = vunpack.c.h.b16 %v444
        %v605 = vpack.c.b16 %v545, %v541
        %v606 = vpack.c.b16 %v546, %v542
        %v607 = vpack.c.b16 %v547, %v543
        %v608 = vpack.c.b16 %v548, %v544
        %v609 = vpack.c.b16 %v553, %v549
        %v610 = vpack.c.b16 %v554, %v550
        %v611 = vpack.c.b16 %v555, %v551
        %v612 = vpack.c.b16 %v556, %v552
        %v613 = vpack.c.b16 %v561, %v557
        %v614 = vpack.c.b16 %v562, %v558
        %v615 = vpack.c.b16 %v563, %v559
        %v616 = vpack.c.b16 %v564, %v560
        %v617 = vpack.c.b16 %v569, %v565
        %v618 = vpack.c.b16 %v570, %v566
        %v619 = vpack.c.b16 %v571, %v567
        %v620 = vpack.c.b16 %v572, %v568
        %v621 = vpack.c.b16 %v577, %v573
        %v622 = vpack.c.b16 %v578, %v574
        %v623 = vpack.c.b16 %v579, %v575
        %v624 = vpack.c.b16 %v580, %v576
        %v625 = vpack.c.b16 %v585, %v581
        %v626 = vpack.c.b16 %v586, %v582
        %v627 = vpack.c.b16 %v587, %v583
        %v628 = vpack.c.b16 %v588, %v584
        %v629 = vpack.c.b16 %v593, %v589
        %v630 = vpack.c.b16 %v594, %v590
        %v631 = vpack.c.b16 %v595, %v591
        %v632 = vpack.c.b16 %v596, %v592
        %v633 = vpack.c.b16 %v601, %v597
        %v634 = vpack.c.b16 %v602, %v598
        %v635 = vpack.c.b16 %v603, %v599
        %v636 = vpack.c.b16 %v604, %v600
        %v733 = vunpack.c.l.b16 %v445
        %v734 = vunpack.c.l.b16 %v446
        %v735 = vunpack.c.l.b16 %v447
        %v736 = vunpack.c.l.b16 %v448
        %v737 = vunpack.c.l.b16 %v449
        %v738 = vunpack.c.l.b16 %v450
        %v739 = vunpack.c.l.b16 %v451
        %v740 = vunpack.c.l.b16 %v452
        %v741 = vunpack.c.l.b16 %v453
        %v742 = vunpack.c.l.b16 %v454
        %v743 = vunpack.c.l.b16 %v455
        %v744 = vunpack.c.l.b16 %v456
        %v745 = vunpack.c.l.b16 %v457
        %v746 = vunpack.c.l.b16 %v458
        %v747 = vunpack.c.l.b16 %v459
        %v748 = vunpack.c.l.b16 %v460
        %v749 = vunpack.c.l.b16 %v461
        %v750 = vunpack.c.l.b16 %v462
        %v751 = vunpack.c.l.b16 %v463
        %v752 = vunpack.c.l.b16 %v464
        %v753 = vunpack.c.l.b16 %v465
        %v754 = vunpack.c.l.b16 %v466
        %v755 = vunpack.c.l.b16 %v467
        %v756 = vunpack.c.l.b16 %v468
        %v757 = vunpack.c.l.b16 %v469
        %v758 = vunpack.c.l.b16 %v470
        %v759 = vunpack.c.l.b16 %v471
        %v760 = vunpack.c.l.b16 %v472
        %v761 = vunpack.c.l.b16 %v473
        %v762 = vunpack.c.l.b16 %v474
        %v763 = vunpack.c.l.b16 %v475
        %v764 = vunpack.c.l.b16 %v476
        %v765 = vunpack.c.l.b16 %v477
        %v766 = vunpack.c.l.b16 %v478
        %v767 = vunpack.c.l.b16 %v479
        %v768 = vunpack.c.l.b16 %v480
        %v769 = vunpack.c.l.b16 %v481
        %v770 = vunpack.c.l.b16 %v482
        %v771 = vunpack.c.l.b16 %v483
        %v772 = vunpack.c.l.b16 %v484
        %v773 = vunpack.c.l.b16 %v485
        %v774 = vunpack.c.l.b16 %v486
        %v775 = vunpack.c.l.b16 %v487
        %v776 = vunpack.c.l.b16 %v488
        %v777 = vunpack.c.l.b16 %v489
        %v778 = vunpack.c.l.b16 %v490
        %v779 = vunpack.c.l.b16 %v491
        %v780 = vunpack.c.l.b16 %v492
        %v781 = vunpack.c.l.b16 %v493
        %v782 = vunpack.c.l.b16 %v494
        %v783 = vunpack.c.l.b16 %v495
        %v784 = vunpack.c.l.b16 %v496
        %v785 = vunpack.c.l.b16 %v497
        %v786 = vunpack.c.l.b16 %v498
        %v787 = vunpack.c.l.b16 %v499
        %v788 = vunpack.c.l.b16 %v500
        %v789 = vunpack.c.l.b16 %v501
        %v790 = vunpack.c.l.b16 %v502
        %v791 = vunpack.c.l.b16 %v503
        %v792 = vunpack.c.l.b16 %v504
        %v793 = vunpack.c.l.b16 %v505
        %v794 = vunpack.c.l.b16 %v506
        %v795 = vunpack.c.l.b16 %v507
        %v796 = vunpack.c.l.b16 %v508
        %v797 = vpack.c.b16 %v734, %v733
        %v798 = vpack.c.b16 %v736, %v735
        %v799 = vpack.c.b16 %v738, %v737
        %v800 = vpack.c.b16 %v740, %v739
        %v801 = vpack.c.b16 %v742, %v741
        %v802 = vpack.c.b16 %v744, %v743
        %v803 = vpack.c.b16 %v746, %v745
        %v804 = vpack.c.b16 %v748, %v747
        %v805 = vpack.c.b16 %v750, %v749
        %v806 = vpack.c.b16 %v752, %v751
        %v807 = vpack.c.b16 %v754, %v753
        %v808 = vpack.c.b16 %v756, %v755
        %v809 = vpack.c.b16 %v758, %v757
        %v810 = vpack.c.b16 %v760, %v759
        %v811 = vpack.c.b16 %v762, %v761
        %v812 = vpack.c.b16 %v764, %v763
        %v813 = vpack.c.b16 %v766, %v765
        %v814 = vpack.c.b16 %v768, %v767
        %v815 = vpack.c.b16 %v770, %v769
        %v816 = vpack.c.b16 %v772, %v771
        %v817 = vpack.c.b16 %v774, %v773
        %v818 = vpack.c.b16 %v776, %v775
        %v819 = vpack.c.b16 %v778, %v777
        %v820 = vpack.c.b16 %v780, %v779
        %v821 = vpack.c.b16 %v782, %v781
        %v822 = vpack.c.b16 %v784, %v783
        %v823 = vpack.c.b16 %v786, %v785
        %v824 = vpack.c.b16 %v788, %v787
        %v825 = vpack.c.b16 %v790, %v789
        %v826 = vpack.c.b16 %v792, %v791
        %v827 = vpack.c.b16 %v794, %v793
        %v828 = vpack.c.b16 %v796, %v795
        %861 = vmatprep.subr.bf16.mxu0 0
        %862 = vmatpush1.bf16.msra.mxu0 %v797
        %863 = vmatprep.subr.bf16.mxu0 0
        %864 = vmatpush1.bf16.msra.mxu0 %v798
        %865 = vmatprep.subr.bf16.mxu0 0
        %866 = vmatpush1.bf16.msra.mxu0 %v799
        %867 = vmatprep.subr.bf16.mxu0 0
        %868 = vmatpush1.bf16.msra.mxu0 %v800
        %869 = vmatprep.subr.bf16.mxu0 0
        %870 = vmatpush1.bf16.msra.mxu0 %v801
        %871 = vmatprep.subr.bf16.mxu0 0
        %872 = vmatpush1.bf16.msra.mxu0 %v802
        %873 = vmatprep.subr.bf16.mxu0 0
        %874 = vmatpush1.bf16.msra.mxu0 %v803
        %875 = vmatprep.subr.bf16.mxu0 0
        %876 = vmatpush1.bf16.msra.mxu0 %v804
        %877 = vmatprep.subr.bf16.mxu0 0
        %878 = vmatpush1.bf16.msra.mxu0 %v805
        %879 = vmatprep.subr.bf16.mxu0 0
        %880 = vmatpush1.bf16.msra.mxu0 %v806
        %881 = vmatprep.subr.bf16.mxu0 0
        %882 = vmatpush1.bf16.msra.mxu0 %v807
        %883 = vmatprep.subr.bf16.mxu0 0
        %884 = vmatpush1.bf16.msra.mxu0 %v808
        %885 = vmatprep.subr.bf16.mxu0 0
        %886 = vmatpush1.bf16.msra.mxu0 %v809
        %887 = vmatprep.subr.bf16.mxu0 0
        %888 = vmatpush1.bf16.msra.mxu0 %v810
        %889 = vmatprep.subr.bf16.mxu0 0
        %890 = vmatpush1.bf16.msra.mxu0 %v811
        %891 = vmatprep.subr.bf16.mxu0 0
        %892 = vmatpush1.bf16.msra.mxu0 %v812
        %893 = vmatprep.mubr.bf16.mxu0 %v606
        %894 = vmatmul.mubr.bf16.gmra.mrb[0].mxu0 %v605
        %v895 = vpop.f32.mrb[0].mxu0
        %v896 = vadd.f32 0.0, %v895
        %v897 = vpop.f32.mrb[0].mxu0
        %v898 = vpop.f32.mrb[0].mxu0
        %v899 = vadd.f32 0.0, %v898
        %v900 = vpop.f32.mrb[0].mxu0
        %901 = vmatprep.mubr.bf16.mxu0 %v610
        %902 = vmatmul.mubr.bf16.gmra.mrb[0].mxu0 %v609
        %v903 = vpop.f32.mrb[0].mxu0
        %v904 = vadd.f32 0.0, %v903
        %v905 = vpop.f32.mrb[0].mxu0
        %v906 = vpop.f32.mrb[0].mxu0
        %v907 = vadd.f32 0.0, %v906
        %v908 = vpop.f32.mrb[0].mxu0
        %909 = vmatprep.mubr.bf16.mxu0 %v614
        %910 = vmatmul.mubr.bf16.gmra.mrb[0].mxu0 %v613
        %v911 = vpop.f32.mrb[0].mxu0
        %v912 = vadd.f32 0.0, %v911
        %v913 = vpop.f32.mrb[0].mxu0
        %v914 = vpop.f32.mrb[0].mxu0
        %v915 = vadd.f32 0.0, %v914
        %v916 = vpop.f32.mrb[0].mxu0
        %917 = vmatprep.mubr.bf16.mxu0 %v618
        %918 = vmatmul.mubr.bf16.gmra.mrb[0].mxu0 %v617
        %v919 = vpop.f32.mrb[0].mxu0
        %v920 = vadd.f32 0.0, %v919
        %v921 = vpop.f32.mrb[0].mxu0
        %v922 = vpop.f32.mrb[0].mxu0
        %v923 = vadd.f32 0.0, %v922
        %v924 = vpop.f32.mrb[0].mxu0
        %925 = vmatprep.mubr.bf16.mxu0 %v622
        %926 = vmatmul.mubr.bf16.gmra.mrb[0].mxu0 %v621
        %v927 = vpop.f32.mrb[0].mxu0
        %v928 = vadd.f32 0.0, %v927
        %v929 = vpop.f32.mrb[0].mxu0
        %v930 = vpop.f32.mrb[0].mxu0
        %v931 = vadd.f32 0.0, %v930
        %v932 = vpop.f32.mrb[0].mxu0
        %933 = vmatprep.mubr.bf16.mxu0 %v626
        %934 = vmatmul.mubr.bf16.gmra.mrb[0].mxu0 %v625
        %v935 = vpop.f32.mrb[0].mxu0
        %v936 = vadd.f32 0.0, %v935
        %v937 = vpop.f32.mrb[0].mxu0
        %v938 = vpop.f32.mrb[0].mxu0
        %v939 = vadd.f32 0.0, %v938
        %v940 = vpop.f32.mrb[0].mxu0
        %941 = vmatprep.mubr.bf16.mxu0 %v630
        %942 = vmatmul.mubr.bf16.gmra.mrb[0].mxu0 %v629
        %v943 = vpop.f32.mrb[0].mxu0
        %v944 = vadd.f32 0.0, %v943
        %v945 = vpop.f32.mrb[0].mxu0
        %v946 = vpop.f32.mrb[0].mxu0
        %v947 = vadd.f32 0.0, %v946
        %v948 = vpop.f32.mrb[0].mxu0
        %949 = vmatprep.mubr.bf16.mxu0 %v634
        %950 = vmatmul.mubr.bf16.gmra.mrb[0].mxu0 %v633
        %v951 = vpop.f32.mrb[0].mxu0
        %v952 = vadd.f32 0.0, %v951
        %v953 = vpop.f32.mrb[0].mxu0
        %v954 = vpop.f32.mrb[0].mxu0
        %v955 = vadd.f32 0.0, %v954
        %v956 = vpop.f32.mrb[0].mxu0
        %957 = vdwg.mxu0
        %958 = vmatprep.subr.bf16.mxu0 0
        %959 = vmatpush1.bf16.msra.mxu0 %v813
        %960 = vmatprep.subr.bf16.mxu0 0
        %961 = vmatpush1.bf16.msra.mxu0 %v814
        %962 = vmatprep.subr.bf16.mxu0 0
        %963 = vmatpush1.bf16.msra.mxu0 %v815
        %964 = vmatprep.subr.bf16.mxu0 0
        %965 = vmatpush1.bf16.msra.mxu0 %v816
        %966 = vmatprep.subr.bf16.mxu0 0
        %967 = vmatpush1.bf16.msra.mxu0 %v817
        %968 = vmatprep.subr.bf16.mxu0 0
        %969 = vmatpush1.bf16.msra.mxu0 %v818
        %970 = vmatprep.subr.bf16.mxu0 0
        %971 = vmatpush1.bf16.msra.mxu0 %v819
        %972 = vmatprep.subr.bf16.mxu0 0
        %973 = vmatpush1.bf16.msra.mxu0 %v820
        %974 = vmatprep.subr.bf16.mxu0 0
        %975 = vmatpush1.bf16.msra.mxu0 %v821
        %976 = vmatprep.subr.bf16.mxu0 0
        %977 = vmatpush1.bf16.msra.mxu0 %v822
        %978 = vmatprep.subr.bf16.mxu0 0
        %979 = vmatpush1.bf16.msra.mxu0 %v823
        %980 = vmatprep.subr.bf16.mxu0 0
        %981 = vmatpush1.bf16.msra.mxu0 %v824
        %982 = vmatprep.subr.bf16.mxu0 0
        %983 = vmatpush1.bf16.msra.mxu0 %v825
        %984 = vmatprep.subr.bf16.mxu0 0
        %985 = vmatpush1.bf16.msra.mxu0 %v826
        %986 = vmatprep.subr.bf16.mxu0 0
        %987 = vmatpush1.bf16.msra.mxu0 %v827
        %988 = vmatprep.subr.bf16.mxu0 0
        %989 = vmatpush1.bf16.msra.mxu0 %v828
        %990 = vmatprep.mubr.bf16.mxu0 %v608
        %991 = vmatmul.mubr.bf16.gmra.mrb[0].mxu0 %v607
        %v992 = vpop.f32.mrb[0].mxu0
        %v993 = vadd.f32 %v896, %v992
        %v994 = vpop.f32.mrb[0].mxu0
        %v995 = vpop.f32.mrb[0].mxu0
        %v996 = vadd.f32 %v899, %v995
        %v997 = vpop.f32.mrb[0].mxu0
        %998 = vmatprep.mubr.bf16.mxu0 %v612
        %999 = vmatmul.mubr.bf16.gmra.mrb[0].mxu0 %v611
        %v1000 = vpop.f32.mrb[0].mxu0
        %v1001 = vadd.f32 %v904, %v1000
        %v1002 = vpop.f32.mrb[0].mxu0
        %v1003 = vpop.f32.mrb[0].mxu0
        %v1004 = vadd.f32 %v907, %v1003
        %v1005 = vpop.f32.mrb[0].mxu0
        %1006 = vmatprep.mubr.bf16.mxu0 %v616
        %1007 = vmatmul.mubr.bf16.gmra.mrb[0].mxu0 %v615
        %v1008 = vpop.f32.mrb[0].mxu0
        %v1009 = vadd.f32 %v912, %v1008
        %v1010 = vpop.f32.mrb[0].mxu0
        %v1011 = vpop.f32.mrb[0].mxu0
        %v1012 = vadd.f32 %v915, %v1011
        %v1013 = vpop.f32.mrb[0].mxu0
        %1014 = vmatprep.mubr.bf16.mxu0 %v620
        %1015 = vmatmul.mubr.bf16.gmra.mrb[0].mxu0 %v619
        %v1016 = vpop.f32.mrb[0].mxu0
        %v1017 = vadd.f32 %v920, %v1016
        %v1018 = vpop.f32.mrb[0].mxu0
        %v1019 = vpop.f32.mrb[0].mxu0
        %v1020 = vadd.f32 %v923, %v1019
        %v1021 = vpop.f32.mrb[0].mxu0
        %1022 = vmatprep.mubr.bf16.mxu0 %v624
        %1023 = vmatmul.mubr.bf16.gmra.mrb[0].mxu0 %v623
        %v1024 = vpop.f32.mrb[0].mxu0
        %v1025 = vadd.f32 %v928, %v1024
        %v1026 = vpop.f32.mrb[0].mxu0
        %v1027 = vpop.f32.mrb[0].mxu0
        %v1028 = vadd.f32 %v931, %v1027
        %v1029 = vpop.f32.mrb[0].mxu0
        %1030 = vmatprep.mubr.bf16.mxu0 %v628
        %1031 = vmatmul.mubr.bf16.gmra.mrb[0].mxu0 %v627
        %v1032 = vpop.f32.mrb[0].mxu0
        %v1033 = vadd.f32 %v936, %v1032
        %v1034 = vpop.f32.mrb[0].mxu0
        %v1035 = vpop.f32.mrb[0].mxu0
        %v1036 = vadd.f32 %v939, %v1035
        %v1037 = vpop.f32.mrb[0].mxu0
        %1038 = vmatprep.mubr.bf16.mxu0 %v632
        %1039 = vmatmul.mubr.bf16.gmra.mrb[0].mxu0 %v631
        %v1040 = vpop.f32.mrb[0].mxu0
        %v1041 = vadd.f32 %v944, %v1040
        %v1042 = vpop.f32.mrb[0].mxu0
        %v1043 = vpop.f32.mrb[0].mxu0
        %v1044 = vadd.f32 %v947, %v1043
        %v1045 = vpop.f32.mrb[0].mxu0
        %1046 = vmatprep.mubr.bf16.mxu0 %v636
        %1047 = vmatmul.mubr.bf16.gmra.mrb[0].mxu0 %v635
        %v1048 = vpop.f32.mrb[0].mxu0
        %v1049 = vadd.f32 %v952, %v1048
        %v1050 = vpop.f32.mrb[0].mxu0
        %v1051 = vpop.f32.mrb[0].mxu0
        %v1052 = vadd.f32 %v955, %v1051
        %v1053 = vpop.f32.mrb[0].mxu0
        %1054 = vdwg.mxu0
        %v1055 = vadd.f32 %v397, %v993
        %v1056 = vadd.f32 %v398, %v996
        %v1057 = vadd.f32 %v399, %v1001
        %v1058 = vadd.f32 %v400, %v1004
        %v1059 = vadd.f32 %v401, %v1009
        %v1060 = vadd.f32 %v402, %v1012
        %v1061 = vadd.f32 %v403, %v1017
        %v1062 = vadd.f32 %v404, %v1020
        %v1063 = vadd.f32 %v405, %v1025
        %v1064 = vadd.f32 %v406, %v1028
        %v1065 = vadd.f32 %v407, %v1033
        %v1066 = vadd.f32 %v408, %v1036
        %v1067 = vadd.f32 %v409, %v1041
        %v1068 = vadd.f32 %v410, %v1044
        %v1069 = vadd.f32 %v411, %v1049
        %v1070 = vadd.f32 %v412, %v1052
        %1071 = vst [vmem:[%s374] sm:$0xff] %v1055
        %1072 = vst [vmem:[%s374 + $0x8] sm:$0xff] %v1056
        %1073 = vst [vmem:[%s374 + $0x10] sm:$0xff] %v1057
        %1074 = vst [vmem:[%s374 + $0x18] sm:$0xff] %v1058
        %1075 = vst [vmem:[%s374 + $0x20] sm:$0xff] %v1059
        %1076 = vst [vmem:[%s374 + $0x28] sm:$0xff] %v1060
        %1077 = vst [vmem:[%s374 + $0x30] sm:$0xff] %v1061
        %1078 = vst [vmem:[%s374 + $0x38] sm:$0xff] %v1062
        %1079 = vst [vmem:[%s374 + $0x40] sm:$0xff] %v1063
        %1080 = vst [vmem:[%s374 + $0x48] sm:$0xff] %v1064
        %1081 = vst [vmem:[%s374 + $0x50] sm:$0xff] %v1065
        %1082 = vst [vmem:[%s374 + $0x58] sm:$0xff] %v1066
        %1083 = vst [vmem:[%s374 + $0x60] sm:$0xff] %v1067
        %1084 = vst [vmem:[%s374 + $0x68] sm:$0xff] %v1068
        %1085 = vst [vmem:[%s374 + $0x70] sm:$0xff] %v1069
        %1086 = vst [vmem:[%s374 + $0x78] sm:$0xff] %v1070
        %p1087 = scmp.eq.s32.totalorder %s22, 1
        // Predicated region
        $region64: #{discriminator_forward.5} parent=54 // pred_check
          %p1088 = pneg %p1087
        $region65: #{discriminator_forward.5} parent=54 // pred_check_branch
          %1090 = sbr.rel (%p1088) target = $region67
        $region66: #{discriminator_forward.5} parent=54 // pred_region
          %v1091 = vld [vmem:[%s374] sm:$0xff]
          %v1092 = vld [vmem:[%s374 + $0x8] sm:$0xff]
          %v1093 = vld [vmem:[%s374 + $0x10] sm:$0xff]
          %v1094 = vld [vmem:[%s374 + $0x18] sm:$0xff]
          %v1095 = vld [vmem:[%s374 + $0x20] sm:$0xff]
          %v1096 = vld [vmem:[%s374 + $0x28] sm:$0xff]
          %v1097 = vld [vmem:[%s374 + $0x30] sm:$0xff]
          %v1098 = vld [vmem:[%s374 + $0x38] sm:$0xff]
          %v1099 = vld [vmem:[%s374 + $0x40] sm:$0xff]
          %v1100 = vld [vmem:[%s374 + $0x48] sm:$0xff]
          %v1101 = vld [vmem:[%s374 + $0x50] sm:$0xff]
          %v1102 = vld [vmem:[%s374 + $0x58] sm:$0xff]
          %v1103 = vld [vmem:[%s374 + $0x60] sm:$0xff]
          %v1104 = vld [vmem:[%s374 + $0x68] sm:$0xff]
          %v1105 = vld [vmem:[%s374 + $0x70] sm:$0xff]
          %v1106 = vld [vmem:[%s374 + $0x78] sm:$0xff]
          %v1107 = vld [vmem:[%s363] sm:$0x1]
          %v1109 = vlaneseq
          %v1110 = vshrl.u32 %v1109, 7
          %v1111 = vsub.s32 0, %v1110
          %v1112 = vrot.slane %v1107, %v1111
          %v1114 = vmul.f32 %v1091, %v1112
          %v1115 = vmul.f32 %v1092, %v1112
          %v1116 = vmul.f32 %v1093, %v1112
          %v1117 = vmul.f32 %v1094, %v1112
          %v1118 = vmul.f32 %v1095, %v1112
          %v1119 = vmul.f32 %v1096, %v1112
          %v1120 = vmul.f32 %v1097, %v1112
          %v1121 = vmul.f32 %v1098, %v1112
          %v1122 = vmul.f32 %v1099, %v1112
          %v1123 = vmul.f32 %v1100, %v1112
          %v1124 = vmul.f32 %v1101, %v1112
          %v1125 = vmul.f32 %v1102, %v1112
          %v1126 = vmul.f32 %v1103, %v1112
          %v1127 = vmul.f32 %v1104, %v1112
          %v1128 = vmul.f32 %v1105, %v1112
          %v1129 = vmul.f32 %v1106, %v1112
          %v1130 = vld [vmem:[%s366] sm:$0x1]
          %v1132 = vlaneseq
          %v1133 = vshrl.u32 %v1132, 7
          %v1134 = vsub.s32 0, %v1133
          %v1135 = vrot.slane %v1130, %v1134
          %v1137 = vadd.f32 %v1114, %v1135
          %v1138 = vadd.f32 %v1115, %v1135
          %v1139 = vadd.f32 %v1116, %v1135
          %v1140 = vadd.f32 %v1117, %v1135
          %v1141 = vadd.f32 %v1118, %v1135
          %v1142 = vadd.f32 %v1119, %v1135
          %v1143 = vadd.f32 %v1120, %v1135
          %v1144 = vadd.f32 %v1121, %v1135
          %v1145 = vadd.f32 %v1122, %v1135
          %v1146 = vadd.f32 %v1123, %v1135
          %v1147 = vadd.f32 %v1124, %v1135
          %v1148 = vadd.f32 %v1125, %v1135
          %v1149 = vadd.f32 %v1126, %v1135
          %v1150 = vadd.f32 %v1127, %v1135
          %v1151 = vadd.f32 %v1128, %v1135
          %v1152 = vadd.f32 %v1129, %v1135
          %vm1153 = vcmp.ge.f32.partialorder %v1137, 0.0
          %vm1154 = vcmp.ge.f32.partialorder %v1138, 0.0
          %vm1155 = vcmp.ge.f32.partialorder %v1139, 0.0
          %vm1156 = vcmp.ge.f32.partialorder %v1140, 0.0
          %vm1157 = vcmp.ge.f32.partialorder %v1141, 0.0
          %vm1158 = vcmp.ge.f32.partialorder %v1142, 0.0
          %vm1159 = vcmp.ge.f32.partialorder %v1143, 0.0
          %vm1160 = vcmp.ge.f32.partialorder %v1144, 0.0
          %vm1161 = vcmp.ge.f32.partialorder %v1145, 0.0
          %vm1162 = vcmp.ge.f32.partialorder %v1146, 0.0
          %vm1163 = vcmp.ge.f32.partialorder %v1147, 0.0
          %vm1164 = vcmp.ge.f32.partialorder %v1148, 0.0
          %vm1165 = vcmp.ge.f32.partialorder %v1149, 0.0
          %vm1166 = vcmp.ge.f32.partialorder %v1150, 0.0
          %vm1167 = vcmp.ge.f32.partialorder %v1151, 0.0
          %vm1168 = vcmp.ge.f32.partialorder %v1152, 0.0
          %v1169 = vmul.f32 %v1137, 0.2
          %v1170 = vmul.f32 %v1138, 0.2
          %v1171 = vmul.f32 %v1139, 0.2
          %v1172 = vmul.f32 %v1140, 0.2
          %v1173 = vmul.f32 %v1141, 0.2
          %v1174 = vmul.f32 %v1142, 0.2
          %v1175 = vmul.f32 %v1143, 0.2
          %v1176 = vmul.f32 %v1144, 0.2
          %v1177 = vmul.f32 %v1145, 0.2
          %v1178 = vmul.f32 %v1146, 0.2
          %v1179 = vmul.f32 %v1147, 0.2
          %v1180 = vmul.f32 %v1148, 0.2
          %v1181 = vmul.f32 %v1149, 0.2
          %v1182 = vmul.f32 %v1150, 0.2
          %v1183 = vmul.f32 %v1151, 0.2
          %v1184 = vmul.f32 %v1152, 0.2
          %v1185 = vsel %vm1153, %v1137, %v1169
          %v1186 = vsel %vm1154, %v1138, %v1170
          %v1187 = vsel %vm1155, %v1139, %v1171
          %v1188 = vsel %vm1156, %v1140, %v1172
          %v1189 = vsel %vm1157, %v1141, %v1173
          %v1190 = vsel %vm1158, %v1142, %v1174
          %v1191 = vsel %vm1159, %v1143, %v1175
          %v1192 = vsel %vm1160, %v1144, %v1176
          %v1193 = vsel %vm1161, %v1145, %v1177
          %v1194 = vsel %vm1162, %v1146, %v1178
          %v1195 = vsel %vm1163, %v1147, %v1179
          %v1196 = vsel %vm1164, %v1148, %v1180
          %v1197 = vsel %vm1165, %v1149, %v1181
          %v1198 = vsel %vm1166, %v1150, %v1182
          %v1199 = vsel %vm1167, %v1151, %v1183
          %v1200 = vsel %vm1168, %v1152, %v1184
          %1201 = vst [vmem:[%s374] sm:$0xff] %v1185
          %1202 = vst [vmem:[%s374 + $0x8] sm:$0xff] %v1186
          %1203 = vst [vmem:[%s374 + $0x10] sm:$0xff] %v1187
          %1204 = vst [vmem:[%s374 + $0x18] sm:$0xff] %v1188
          %1205 = vst [vmem:[%s374 + $0x20] sm:$0xff] %v1189
          %1206 = vst [vmem:[%s374 + $0x28] sm:$0xff] %v1190
          %1207 = vst [vmem:[%s374 + $0x30] sm:$0xff] %v1191
          %1208 = vst [vmem:[%s374 + $0x38] sm:$0xff] %v1192
          %1209 = vst [vmem:[%s374 + $0x40] sm:$0xff] %v1193
          %1210 = vst [vmem:[%s374 + $0x48] sm:$0xff] %v1194
          %1211 = vst [vmem:[%s374 + $0x50] sm:$0xff] %v1195
          %1212 = vst [vmem:[%s374 + $0x58] sm:$0xff] %v1196
          %1213 = vst [vmem:[%s374 + $0x60] sm:$0xff] %v1197
          %1214 = vst [vmem:[%s374 + $0x68] sm:$0xff] %v1198
          %1215 = vst [vmem:[%s374 + $0x70] sm:$0xff] %v1199
          %1216 = vst [vmem:[%s374 + $0x78] sm:$0xff] %v1200
        $region67: #{discriminator_forward.5} parent=54 // pred_fallthru
          _
        %s1217 = smul.u32 16, %s20
        %p1218 = scmp.lt.s32.totalorder %s1217, 15
        %s1219 = scalar_select %p1218, %s1217, 15
        %p1220 = scmp.lt.s32.totalorder %s21, 0
        %s1221 = scalar_select %p1220, %s21, 0
        %s1222 = sadd.s32 %s1221, %s1219
        %s1223 = smul.addr %s1222, 8
        %s1224 = scalar_lea.vmem %s4, %s1223
        // Predicated region
        $region68: #{discriminator_forward.5} parent=54 // pred_check
          %p1225 = pneg %p162
        $region69: #{discriminator_forward.5} parent=54 // pred_check_branch
          %1227 = sbr.rel (%p1225) target = $region71
        $region70: #{discriminator_forward.5} parent=54 // pred_region
          %s1228 = smul.u32 16, %s20
        $region71: #{discriminator_forward.5} parent=54 // pred_fallthru
          _
        // Predicated region
        $region72: #{discriminator_forward.5} parent=54 // pred_check
          %p1229 = pneg %p162
        $region73: #{discriminator_forward.5} parent=54 // pred_check_branch
          %1231 = sbr.rel (%p1229) target = $region75
        $region74: #{discriminator_forward.5} parent=54 // pred_region
          %s1232 = smul.u32 16, %s20
          %p1233 = scmp.lt.s32.totalorder %s1232, 15
          %s1234 = scalar_select %p1233, %s1232, 15
          %p1235 = scmp.lt.s32.totalorder %s21, 0
          %s1236 = scalar_select %p1235, %s21, 0
          %s1237 = sadd.s32 %s1236, %s1234
          %s1238 = smul.addr %s1237, 8
          %s1239 = scalar_lea.vmem %s4, %s1238
        $region75: #{discriminator_forward.5} parent=54 // pred_fallthru
          _
      $region55: #{discriminator_forward.5} parent=5 // pred_fallthru
        _
      %p1240 = scmp.le.s32.totalorder 2, %s10
      // Predicated region
      $region76: #{discriminator_forward.5} parent=5 // pred_check
        %p1241 = pneg %p1240
      $region77: #{discriminator_forward.5} parent=5 // pred_check_branch
        %1243 = sbr.rel (%p1241) target = $region79
      $region78: #{discriminator_forward.5} parent=5 // pred_region
        %s1244 = ssub.s32 %s10, 2
      $region79: #{discriminator_forward.5} parent=5 // pred_fallthru
        _
    $region6: #{discriminator_forward.5} parent=1 // loop_footer
      %s14 = sadd.s32 1, %s10
    $region7: #{discriminator_forward.5} parent=1 // loop_footer_branch
      %9 = sbr.rel target = $region3
    $region8: #{discriminator_forward.5} parent=1 // loop_exit
      _

// kernel: discriminator_forward.4
$region0: #{discriminator_forward.4}
  #allocation0 [shape = 'u32[]', space=smem, size = 0x4, offset = 0x4, fixed_abs, tag = 'smem constant byte address 0x4 - core index']
  #allocation1 [shape = 'u32[144,128]{1,0:T(1,128)}', space=vmem, size = 0x12000, scoped, tag = 'internal scratch']
  %s0 = inlined_call_operand.vmem [shape: bf16[512,128], index: 0, kind: input, shape index: {}]
  %s1 = inlined_call_operand.vmem [shape: bf16[128,128], index: 1, kind: input, shape index: {}]
  %s2 = inlined_call_operand.vmem [shape: f32[1,128], index: 2, kind: input, shape index: {}]
  %s3 = inlined_call_operand.vmem [shape: f32[1,128], index: 3, kind: input, shape index: {}]
  %s4 = inlined_call_operand.vmem [shape: f32[512,128], index: 4, kind: output, shape index: {}]
  %s5 = sld [smem:[#allocation0]]
  $region34: #{discriminator_forward.4} parent=0
    _
  %s7 = ssub.s32 1, %s5
  %s8 = scalar_select 0, %s7, %s5
  // Predicated region
  $region2: #{discriminator_forward.4} parent=0 // pred_check
    _
  $region3: #{discriminator_forward.4} parent=0 // pred_check_branch
    %10 = sbr.rel (0) target = $region5
  $region4: #{discriminator_forward.4} parent=0 // pred_region
    _
  $region5: #{discriminator_forward.4} parent=0 // pred_fallthru
    _
  // Predicated region
  $region6: #{discriminator_forward.4} parent=0 // pred_check
    _
  $region7: #{discriminator_forward.4} parent=0 // pred_check_branch
    %12 = sbr.rel (0) target = $region9
  $region8: #{discriminator_forward.4} parent=0 // pred_region
    _
  $region9: #{discriminator_forward.4} parent=0 // pred_fallthru
    _
  // Predicated region
  $region10: #{discriminator_forward.4} parent=0 // pred_check
    _
  $region11: #{discriminator_forward.4} parent=0 // pred_check_branch
    %14 = sbr.rel (0) target = $region13
  $region12: #{discriminator_forward.4} parent=0 // pred_region
    _
  $region13: #{discriminator_forward.4} parent=0 // pred_fallthru
    _
  // Predicated region
  $region14: #{discriminator_forward.4} parent=0 // pred_check
    _
  $region15: #{discriminator_forward.4} parent=0 // pred_check_branch
    %16 = sbr.rel (0) target = $region17
  $region16: #{discriminator_forward.4} parent=0 // pred_region
    _
  $region17: #{discriminator_forward.4} parent=0 // pred_fallthru
    _
  %p18 = scmp.eq.s32.totalorder 0, 0
  // Predicated region
  $region18: #{discriminator_forward.4} parent=0 // pred_check
    %p19 = pneg %p18
  $region19: #{discriminator_forward.4} parent=0 // pred_check_branch
    %21 = sbr.rel (%p19) target = $region21
  $region20: #{discriminator_forward.4} parent=0 // pred_region
    %22 = vst [vmem:[%s4] sm:$0xff] 0.0
    %23 = vst [vmem:[%s4 + $0x8] sm:$0xff] 0.0
    %24 = vst [vmem:[%s4 + $0x10] sm:$0xff] 0.0
    %25 = vst [vmem:[%s4 + $0x18] sm:$0xff] 0.0
    %26 = vst [vmem:[%s4 + $0x20] sm:$0xff] 0.0
    %27 = vst [vmem:[%s4 + $0x28] sm:$0xff] 0.0
    %28 = vst [vmem:[%s4 + $0x30] sm:$0xff] 0.0
    %29 = vst [vmem:[%s4 + $0x38] sm:$0xff] 0.0
    %30 = vst [vmem:[%s4 + $0x40] sm:$0xff] 0.0
    %31 = vst [vmem:[%s4 + $0x48] sm:$0xff] 0.0
    %32 = vst [vmem:[%s4 + $0x50] sm:$0xff] 0.0
    %33 = vst [vmem:[%s4 + $0x58] sm:$0xff] 0.0
    %34 = vst [vmem:[%s4 + $0x60] sm:$0xff] 0.0
    %35 = vst [vmem:[%s4 + $0x68] sm:$0xff] 0.0
    %36 = vst [vmem:[%s4 + $0x70] sm:$0xff] 0.0
    %37 = vst [vmem:[%s4 + $0x78] sm:$0xff] 0.0
    %38 = vst [vmem:[%s4 + $0x80] sm:$0xff] 0.0
    %39 = vst [vmem:[%s4 + $0x88] sm:$0xff] 0.0
    %40 = vst [vmem:[%s4 + $0x90] sm:$0xff] 0.0
    %41 = vst [vmem:[%s4 + $0x98] sm:$0xff] 0.0
    %42 = vst [vmem:[%s4 + $0xa0] sm:$0xff] 0.0
    %43 = vst [vmem:[%s4 + $0xa8] sm:$0xff] 0.0
    %44 = vst [vmem:[%s4 + $0xb0] sm:$0xff] 0.0
    %45 = vst [vmem:[%s4 + $0xb8] sm:$0xff] 0.0
    %46 = vst [vmem:[%s4 + $0xc0] sm:$0xff] 0.0
    %47 = vst [vmem:[%s4 + $0xc8] sm:$0xff] 0.0
    %48 = vst [vmem:[%s4 + $0xd0] sm:$0xff] 0.0
    %49 = vst [vmem:[%s4 + $0xd8] sm:$0xff] 0.0
    %50 = vst [vmem:[%s4 + $0xe0] sm:$0xff] 0.0
    %51 = vst [vmem:[%s4 + $0xe8] sm:$0xff] 0.0
    %52 = vst [vmem:[%s4 + $0xf0] sm:$0xff] 0.0
    %53 = vst [vmem:[%s4 + $0xf8] sm:$0xff] 0.0
    %54 = vst [vmem:[%s4 + $0x100] sm:$0xff] 0.0
    %55 = vst [vmem:[%s4 + $0x108] sm:$0xff] 0.0
    %56 = vst [vmem:[%s4 + $0x110] sm:$0xff] 0.0
    %57 = vst [vmem:[%s4 + $0x118] sm:$0xff] 0.0
    %58 = vst [vmem:[%s4 + $0x120] sm:$0xff] 0.0
    %59 = vst [vmem:[%s4 + $0x128] sm:$0xff] 0.0
    %60 = vst [vmem:[%s4 + $0x130] sm:$0xff] 0.0
    %61 = vst [vmem:[%s4 + $0x138] sm:$0xff] 0.0
    %62 = vst [vmem:[%s4 + $0x140] sm:$0xff] 0.0
    %63 = vst [vmem:[%s4 + $0x148] sm:$0xff] 0.0
    %64 = vst [vmem:[%s4 + $0x150] sm:$0xff] 0.0
    %65 = vst [vmem:[%s4 + $0x158] sm:$0xff] 0.0
    %66 = vst [vmem:[%s4 + $0x160] sm:$0xff] 0.0
    %67 = vst [vmem:[%s4 + $0x168] sm:$0xff] 0.0
    %68 = vst [vmem:[%s4 + $0x170] sm:$0xff] 0.0
    %69 = vst [vmem:[%s4 + $0x178] sm:$0xff] 0.0
    %70 = vst [vmem:[%s4 + $0x180] sm:$0xff] 0.0
    %71 = vst [vmem:[%s4 + $0x188] sm:$0xff] 0.0
    %72 = vst [vmem:[%s4 + $0x190] sm:$0xff] 0.0
    %73 = vst [vmem:[%s4 + $0x198] sm:$0xff] 0.0
    %74 = vst [vmem:[%s4 + $0x1a0] sm:$0xff] 0.0
    %75 = vst [vmem:[%s4 + $0x1a8] sm:$0xff] 0.0
    %76 = vst [vmem:[%s4 + $0x1b0] sm:$0xff] 0.0
    %77 = vst [vmem:[%s4 + $0x1b8] sm:$0xff] 0.0
    %78 = vst [vmem:[%s4 + $0x1c0] sm:$0xff] 0.0
    %79 = vst [vmem:[%s4 + $0x1c8] sm:$0xff] 0.0
    %80 = vst [vmem:[%s4 + $0x1d0] sm:$0xff] 0.0
    %81 = vst [vmem:[%s4 + $0x1d8] sm:$0xff] 0.0
    %82 = vst [vmem:[%s4 + $0x1e0] sm:$0xff] 0.0
    %83 = vst [vmem:[%s4 + $0x1e8] sm:$0xff] 0.0
    %84 = vst [vmem:[%s4 + $0x1f0] sm:$0xff] 0.0
    %85 = vst [vmem:[%s4 + $0x1f8] sm:$0xff] 0.0
  $region21: #{discriminator_forward.4} parent=0 // pred_fallthru
    _
  %v86 = vld [vmem:[%s4] sm:$0xff]
  %v87 = vld [vmem:[%s4 + $0x8] sm:$0xff]
  %v88 = vld [vmem:[%s4 + $0x10] sm:$0xff]
  %v89 = vld [vmem:[%s4 + $0x18] sm:$0xff]
  %v90 = vld [vmem:[%s4 + $0x20] sm:$0xff]
  %v91 = vld [vmem:[%s4 + $0x28] sm:$0xff]
  %v92 = vld [vmem:[%s4 + $0x30] sm:$0xff]
  %v93 = vld [vmem:[%s4 + $0x38] sm:$0xff]
  %v94 = vld [vmem:[%s4 + $0x40] sm:$0xff]
  %v95 = vld [vmem:[%s4 + $0x48] sm:$0xff]
  %v96 = vld [vmem:[%s4 + $0x50] sm:$0xff]
  %v97 = vld [vmem:[%s4 + $0x58] sm:$0xff]
  %v98 = vld [vmem:[%s4 + $0x60] sm:$0xff]
  %v99 = vld [vmem:[%s4 + $0x68] sm:$0xff]
  %v100 = vld [vmem:[%s4 + $0x70] sm:$0xff]
  %v101 = vld [vmem:[%s4 + $0x78] sm:$0xff]
  %v102 = vld [vmem:[%s4 + $0x80] sm:$0xff]
  %v103 = vld [vmem:[%s4 + $0x88] sm:$0xff]
  %v104 = vld [vmem:[%s4 + $0x90] sm:$0xff]
  %v105 = vld [vmem:[%s4 + $0x98] sm:$0xff]
  %v106 = vld [vmem:[%s4 + $0xa0] sm:$0xff]
  %v107 = vld [vmem:[%s4 + $0xa8] sm:$0xff]
  %v108 = vld [vmem:[%s4 + $0xb0] sm:$0xff]
  %v109 = vld [vmem:[%s4 + $0xb8] sm:$0xff]
  %v110 = vld [vmem:[%s4 + $0xc0] sm:$0xff]
  %v111 = vld [vmem:[%s4 + $0xc8] sm:$0xff]
  %v112 = vld [vmem:[%s4 + $0xd0] sm:$0xff]
  %v113 = vld [vmem:[%s4 + $0xd8] sm:$0xff]
  %v114 = vld [vmem:[%s4 + $0xe0] sm:$0xff]
  %v115 = vld [vmem:[%s4 + $0xe8] sm:$0xff]
  %v116 = vld [vmem:[%s4 + $0xf0] sm:$0xff]
  %v117 = vld [vmem:[%s4 + $0xf8] sm:$0xff]
  %v118 = vld [vmem:[%s4 + $0x100] sm:$0xff]
  %v119 = vld [vmem:[%s4 + $0x108] sm:$0xff]
  %v120 = vld [vmem:[%s4 + $0x110] sm:$0xff]
  %v121 = vld [vmem:[%s4 + $0x118] sm:$0xff]
  %v122 = vld [vmem:[%s4 + $0x120] sm:$0xff]
  %v123 = vld [vmem:[%s4 + $0x128] sm:$0xff]
  %v124 = vld [vmem:[%s4 + $0x130] sm:$0xff]
  %v125 = vld [vmem:[%s4 + $0x138] sm:$0xff]
  %v126 = vld [vmem:[%s4 + $0x140] sm:$0xff]
  %v127 = vld [vmem:[%s4 + $0x148] sm:$0xff]
  %v128 = vld [vmem:[%s4 + $0x150] sm:$0xff]
  %v129 = vld [vmem:[%s4 + $0x158] sm:$0xff]
  %v130 = vld [vmem:[%s4 + $0x160] sm:$0xff]
  %v131 = vld [vmem:[%s4 + $0x168] sm:$0xff]
  %v132 = vld [vmem:[%s4 + $0x170] sm:$0xff]
  %v133 = vld [vmem:[%s4 + $0x178] sm:$0xff]
  %v134 = vld [vmem:[%s4 + $0x180] sm:$0xff]
  %v135 = vld [vmem:[%s4 + $0x188] sm:$0xff]
  %v136 = vld [vmem:[%s4 + $0x190] sm:$0xff]
  %v137 = vld [vmem:[%s4 + $0x198] sm:$0xff]
  %v138 = vld [vmem:[%s4 + $0x1a0] sm:$0xff]
  %v139 = vld [vmem:[%s4 + $0x1a8] sm:$0xff]
  %v140 = vld [vmem:[%s4 + $0x1b0] sm:$0xff]
  %v141 = vld [vmem:[%s4 + $0x1b8] sm:$0xff]
  %v142 = vld [vmem:[%s4 + $0x1c0] sm:$0xff]
  %v143 = vld [vmem:[%s4 + $0x1c8] sm:$0xff]
  %v144 = vld [vmem:[%s4 + $0x1d0] sm:$0xff]
  %v145 = vld [vmem:[%s4 + $0x1d8] sm:$0xff]
  %v146 = vld [vmem:[%s4 + $0x1e0] sm:$0xff]
  %v147 = vld [vmem:[%s4 + $0x1e8] sm:$0xff]
  %v148 = vld [vmem:[%s4 + $0x1f0] sm:$0xff]
  %v149 = vld [vmem:[%s4 + $0x1f8] sm:$0xff]
  %v150 = vld [vmem:[%s0] sm:$0xf]
  %v151 = vld [vmem:[%s0 + $0x4] sm:$0xf]
  %v152 = vld [vmem:[%s0 + $0x8] sm:$0xf]
  %v153 = vld [vmem:[%s0 + $0xc] sm:$0xf]
  %v154 = vld [vmem:[%s0 + $0x10] sm:$0xf]
  %v155 = vld [vmem:[%s0 + $0x14] sm:$0xf]
  %v156 = vld [vmem:[%s0 + $0x18] sm:$0xf]
  %v157 = vld [vmem:[%s0 + $0x1c] sm:$0xf]
  %v158 = vld [vmem:[%s0 + $0x20] sm:$0xf]
  %v159 = vld [vmem:[%s0 + $0x24] sm:$0xf]
  %v160 = vld [vmem:[%s0 + $0x28] sm:$0xf]
  %v161 = vld [vmem:[%s0 + $0x2c] sm:$0xf]
  %v162 = vld [vmem:[%s0 + $0x30] sm:$0xf]
  %v163 = vld [vmem:[%s0 + $0x34] sm:$0xf]
  %v164 = vld [vmem:[%s0 + $0x38] sm:$0xf]
  %v165 = vld [vmem:[%s0 + $0x3c] sm:$0xf]
  %v166 = vld [vmem:[%s0 + $0x40] sm:$0xf]
  %v167 = vld [vmem:[%s0 + $0x44] sm:$0xf]
  %v168 = vld [vmem:[%s0 + $0x48] sm:$0xf]
  %v169 = vld [vmem:[%s0 + $0x4c] sm:$0xf]
  %v170 = vld [vmem:[%s0 + $0x50] sm:$0xf]
  %v171 = vld [vmem:[%s0 + $0x54] sm:$0xf]
  %v172 = vld [vmem:[%s0 + $0x58] sm:$0xf]
  %v173 = vld [vmem:[%s0 + $0x5c] sm:$0xf]
  %v174 = vld [vmem:[%s0 + $0x60] sm:$0xf]
  %v175 = vld [vmem:[%s0 + $0x64] sm:$0xf]
  %v176 = vld [vmem:[%s0 + $0x68] sm:$0xf]
  %v177 = vld [vmem:[%s0 + $0x6c] sm:$0xf]
  %v178 = vld [vmem:[%s0 + $0x70] sm:$0xf]
  %v179 = vld [vmem:[%s0 + $0x74] sm:$0xf]
  %v180 = vld [vmem:[%s0 + $0x78] sm:$0xf]
  %v181 = vld [vmem:[%s0 + $0x7c] sm:$0xf]
  %v182 = vld [vmem:[%s0 + $0x80] sm:$0xf]
  %v183 = vld [vmem:[%s0 + $0x84] sm:$0xf]
  %v184 = vld [vmem:[%s0 + $0x88] sm:$0xf]
  %v185 = vld [vmem:[%s0 + $0x8c] sm:$0xf]
  %v186 = vld [vmem:[%s0 + $0x90] sm:$0xf]
  %v187 = vld [vmem:[%s0 + $0x94] sm:$0xf]
  %v188 = vld [vmem:[%s0 + $0x98] sm:$0xf]
  %v189 = vld [vmem:[%s0 + $0x9c] sm:$0xf]
  %v190 = vld [vmem:[%s0 + $0xa0] sm:$0xf]
  %v191 = vld [vmem:[%s0 + $0xa4] sm:$0xf]
  %v192 = vld [vmem:[%s0 + $0xa8] sm:$0xf]
  %v193 = vld [vmem:[%s0 + $0xac] sm:$0xf]
  %v194 = vld [vmem:[%s0 + $0xb0] sm:$0xf]
  %v195 = vld [vmem:[%s0 + $0xb4] sm:$0xf]
  %v196 = vld [vmem:[%s0 + $0xb8] sm:$0xf]
  %v197 = vld [vmem:[%s0 + $0xbc] sm:$0xf]
  %v198 = vld [vmem:[%s0 + $0xc0] sm:$0xf]
  %v199 = vld [vmem:[%s0 + $0xc4] sm:$0xf]
  %v200 = vld [vmem:[%s0 + $0xc8] sm:$0xf]
  %v201 = vld [vmem:[%s0 + $0xcc] sm:$0xf]
  %v202 = vld [vmem:[%s0 + $0xd0] sm:$0xf]
  %v203 = vld [vmem:[%s0 + $0xd4] sm:$0xf]
  %v204 = vld [vmem:[%s0 + $0xd8] sm:$0xf]
  %v205 = vld [vmem:[%s0 + $0xdc] sm:$0xf]
  %v206 = vld [vmem:[%s0 + $0xe0] sm:$0xf]
  %v207 = vld [vmem:[%s0 + $0xe4] sm:$0xf]
  %v208 = vld [vmem:[%s0 + $0xe8] sm:$0xf]
  %v209 = vld [vmem:[%s0 + $0xec] sm:$0xf]
  %v210 = vld [vmem:[%s0 + $0xf0] sm:$0xf]
  %v211 = vld [vmem:[%s0 + $0xf4] sm:$0xf]
  %v212 = vld [vmem:[%s0 + $0xf8] sm:$0xf]
  %v213 = vld [vmem:[%s0 + $0xfc] sm:$0xf]
  %v214 = vld [vmem:[%s1] sm:$0xf]
  %v215 = vld [vmem:[%s1 + $0x4] sm:$0xf]
  %v216 = vld [vmem:[%s1 + $0x8] sm:$0xf]
  %v217 = vld [vmem:[%s1 + $0xc] sm:$0xf]
  %v218 = vld [vmem:[%s1 + $0x10] sm:$0xf]
  %v219 = vld [vmem:[%s1 + $0x14] sm:$0xf]
  %v220 = vld [vmem:[%s1 + $0x18] sm:$0xf]
  %v221 = vld [vmem:[%s1 + $0x1c] sm:$0xf]
  %v222 = vld [vmem:[%s1 + $0x20] sm:$0xf]
  %v223 = vld [vmem:[%s1 + $0x24] sm:$0xf]
  %v224 = vld [vmem:[%s1 + $0x28] sm:$0xf]
  %v225 = vld [vmem:[%s1 + $0x2c] sm:$0xf]
  %v226 = vld [vmem:[%s1 + $0x30] sm:$0xf]
  %v227 = vld [vmem:[%s1 + $0x34] sm:$0xf]
  %v228 = vld [vmem:[%s1 + $0x38] sm:$0xf]
  %v229 = vld [vmem:[%s1 + $0x3c] sm:$0xf]
  %v294 = vunpack.c.l.b16 %v150
  %v295 = vunpack.c.l.b16 %v151
  %v296 = vunpack.c.l.b16 %v152
  %v297 = vunpack.c.l.b16 %v153
  %v298 = vunpack.c.l.b16 %v154
  %v299 = vunpack.c.l.b16 %v155
  %v300 = vunpack.c.l.b16 %v156
  %v301 = vunpack.c.l.b16 %v157
  %v302 = vunpack.c.l.b16 %v158
  %v303 = vunpack.c.l.b16 %v159
  %v304 = vunpack.c.l.b16 %v160
  %v305 = vunpack.c.l.b16 %v161
  %v306 = vunpack.c.l.b16 %v162
  %v307 = vunpack.c.l.b16 %v163
  %v308 = vunpack.c.l.b16 %v164
  %v309 = vunpack.c.l.b16 %v165
  %v310 = vunpack.c.l.b16 %v166
  %v311 = vunpack.c.l.b16 %v167
  %v312 = vunpack.c.l.b16 %v168
  %v313 = vunpack.c.l.b16 %v169
  %v314 = vunpack.c.l.b16 %v170
  %v315 = vunpack.c.l.b16 %v171
  %v316 = vunpack.c.l.b16 %v172
  %v317 = vunpack.c.l.b16 %v173
  %v318 = vunpack.c.l.b16 %v174
  %v319 = vunpack.c.l.b16 %v175
  %v320 = vunpack.c.l.b16 %v176
  %v321 = vunpack.c.l.b16 %v177
  %v322 = vunpack.c.l.b16 %v178
  %v323 = vunpack.c.l.b16 %v179
  %v324 = vunpack.c.l.b16 %v180
  %v325 = vunpack.c.l.b16 %v181
  %v326 = vunpack.c.l.b16 %v182
  %v327 = vunpack.c.l.b16 %v183
  %v328 = vunpack.c.l.b16 %v184
  %v329 = vunpack.c.l.b16 %v185
  %v330 = vunpack.c.l.b16 %v186
  %v331 = vunpack.c.l.b16 %v187
  %v332 = vunpack.c.l.b16 %v188
  %v333 = vunpack.c.l.b16 %v189
  %v334 = vunpack.c.l.b16 %v190
  %v335 = vunpack.c.l.b16 %v191
  %v336 = vunpack.c.l.b16 %v192
  %v337 = vunpack.c.l.b16 %v193
  %v338 = vunpack.c.l.b16 %v194
  %v339 = vunpack.c.l.b16 %v195
  %v340 = vunpack.c.l.b16 %v196
  %v341 = vunpack.c.l.b16 %v197
  %v342 = vunpack.c.l.b16 %v198
  %v343 = vunpack.c.l.b16 %v199
  %v344 = vunpack.c.l.b16 %v200
  %v345 = vunpack.c.l.b16 %v201
  %v346 = vunpack.c.l.b16 %v202
  %v347 = vunpack.c.l.b16 %v203
  %v348 = vunpack.c.l.b16 %v204
  %v349 = vunpack.c.l.b16 %v205
  %v350 = vunpack.c.l.b16 %v206
  %v351 = vunpack.c.l.b16 %v207
  %v352 = vunpack.c.l.b16 %v208
  %v353 = vunpack.c.l.b16 %v209
  %v354 = vunpack.c.l.b16 %v210
  %v355 = vunpack.c.l.b16 %v211
  %v356 = vunpack.c.l.b16 %v212
  %v357 = vunpack.c.l.b16 %v213
  %v358 = vpack.c.b16 %v295, %v294
  %v359 = vpack.c.b16 %v297, %v296
  %v360 = vpack.c.b16 %v299, %v298
  %v361 = vpack.c.b16 %v301, %v300
  %v362 = vpack.c.b16 %v303, %v302
  %v363 = vpack.c.b16 %v305, %v304
  %v364 = vpack.c.b16 %v307, %v306
  %v365 = vpack.c.b16 %v309, %v308
  %v366 = vpack.c.b16 %v311, %v310
  %v367 = vpack.c.b16 %v313, %v312
  %v368 = vpack.c.b16 %v315, %v314
  %v369 = vpack.c.b16 %v317, %v316
  %v370 = vpack.c.b16 %v319, %v318
  %v371 = vpack.c.b16 %v321, %v320
  %v372 = vpack.c.b16 %v323, %v322
  %v373 = vpack.c.b16 %v325, %v324
  %v374 = vpack.c.b16 %v327, %v326
  %v375 = vpack.c.b16 %v329, %v328
  %v376 = vpack.c.b16 %v331, %v330
  %v377 = vpack.c.b16 %v333, %v332
  %v378 = vpack.c.b16 %v335, %v334
  %v379 = vpack.c.b16 %v337, %v336
  %v380 = vpack.c.b16 %v339, %v338
  %v381 = vpack.c.b16 %v341, %v340
  %v382 = vpack.c.b16 %v343, %v342
  %v383 = vpack.c.b16 %v345, %v344
  %v384 = vpack.c.b16 %v347, %v346
  %v385 = vpack.c.b16 %v349, %v348
  %v386 = vpack.c.b16 %v351, %v350
  %v387 = vpack.c.b16 %v353, %v352
  %v388 = vpack.c.b16 %v355, %v354
  %v389 = vpack.c.b16 %v357, %v356
  %v438 = vunpack.c.l.b16 %v214
  %v439 = vunpack.c.l.b16 %v215
  %v440 = vunpack.c.l.b16 %v216
  %v441 = vunpack.c.l.b16 %v217
  %v442 = vunpack.c.l.b16 %v218
  %v443 = vunpack.c.l.b16 %v219
  %v444 = vunpack.c.l.b16 %v220
  %v445 = vunpack.c.l.b16 %v221
  %v446 = vunpack.c.l.b16 %v222
  %v447 = vunpack.c.l.b16 %v223
  %v448 = vunpack.c.l.b16 %v224
  %v449 = vunpack.c.l.b16 %v225
  %v450 = vunpack.c.l.b16 %v226
  %v451 = vunpack.c.l.b16 %v227
  %v452 = vunpack.c.l.b16 %v228
  %v453 = vunpack.c.l.b16 %v229
  %v454 = vpack.c.b16 %v439, %v438
  %v455 = vpack.c.b16 %v441, %v440
  %v456 = vpack.c.b16 %v443, %v442
  %v457 = vpack.c.b16 %v445, %v444
  %v458 = vpack.c.b16 %v447, %v446
  %v459 = vpack.c.b16 %v449, %v448
  %v460 = vpack.c.b16 %v451, %v450
  %v461 = vpack.c.b16 %v453, %v452
  %470 = vmatprep.subr.bf16.mxu0 0
  %471 = vmatpush1.bf16.msra.mxu0 %v454
  %472 = vmatprep.subr.bf16.mxu0 0
  %473 = vmatpush1.bf16.msra.mxu0 %v455
  %474 = vmatprep.subr.bf16.mxu0 0
  %475 = vmatpush1.bf16.msra.mxu0 %v456
  %476 = vmatprep.subr.bf16.mxu0 0
  %477 = vmatpush1.bf16.msra.mxu0 %v457
  %478 = vmatprep.subr.bf16.mxu0 0
  %479 = vmatpush1.bf16.msra.mxu0 %v458
  %480 = vmatprep.subr.bf16.mxu0 0
  %481 = vmatpush1.bf16.msra.mxu0 %v459
  %482 = vmatprep.subr.bf16.mxu0 0
  %483 = vmatpush1.bf16.msra.mxu0 %v460
  %484 = vmatprep.subr.bf16.mxu0 0
  %485 = vmatpush1.bf16.msra.mxu0 %v461
  %486 = vmatprep.subr.bf16.mxu0 0
  %487 = vmatpush1.bf16.msra.mxu0 0
  %488 = vmatprep.subr.bf16.mxu0 0
  %489 = vmatpush1.bf16.msra.mxu0 0
  %490 = vmatprep.subr.bf16.mxu0 0
  %491 = vmatpush1.bf16.msra.mxu0 0
  %492 = vmatprep.subr.bf16.mxu0 0
  %493 = vmatpush1.bf16.msra.mxu0 0
  %494 = vmatprep.subr.bf16.mxu0 0
  %495 = vmatpush1.bf16.msra.mxu0 0
  %496 = vmatprep.subr.bf16.mxu0 0
  %497 = vmatpush1.bf16.msra.mxu0 0
  %498 = vmatprep.subr.bf16.mxu0 0
  %499 = vmatpush1.bf16.msra.mxu0 0
  %500 = vmatprep.subr.bf16.mxu0 0
  %501 = vmatpush1.bf16.msra.mxu0 0
  %502 = vmatprep.mubr.bf16.mxu0 0
  %503 = vmatmul.mubr.bf16.gmra.mrb[0].mxu0 %v358
  %v504 = vpop.f32.mrb[0].mxu0
  %v505 = vadd.f32 0.0, %v504
  %v506 = vpop.f32.mrb[0].mxu0
  %v507 = vpop.f32.mrb[0].mxu0
  %v508 = vadd.f32 0.0, %v507
  %v509 = vpop.f32.mrb[0].mxu0
  %510 = vmatprep.mubr.bf16.mxu0 0
  %511 = vmatmul.mubr.bf16.gmra.mrb[0].mxu0 %v359
  %v512 = vpop.f32.mrb[0].mxu0
  %v513 = vadd.f32 0.0, %v512
  %v514 = vpop.f32.mrb[0].mxu0
  %v515 = vpop.f32.mrb[0].mxu0
  %v516 = vadd.f32 0.0, %v515
  %v517 = vpop.f32.mrb[0].mxu0
  %518 = vmatprep.mubr.bf16.mxu0 0
  %519 = vmatmul.mubr.bf16.gmra.mrb[0].mxu0 %v360
  %v520 = vpop.f32.mrb[0].mxu0
  %v521 = vadd.f32 0.0, %v520
  %v522 = vpop.f32.mrb[0].mxu0
  %v523 = vpop.f32.mrb[0].mxu0
  %v524 = vadd.f32 0.0, %v523
  %v525 = vpop.f32.mrb[0].mxu0
  %526 = vmatprep.mubr.bf16.mxu0 0
  %527 = vmatmul.mubr.bf16.gmra.mrb[0].mxu0 %v361
  %v528 = vpop.f32.mrb[0].mxu0
  %v529 = vadd.f32 0.0, %v528
  %v530 = vpop.f32.mrb[0].mxu0
  %v531 = vpop.f32.mrb[0].mxu0
  %v532 = vadd.f32 0.0, %v531
  %v533 = vpop.f32.mrb[0].mxu0
  %534 = vmatprep.mubr.bf16.mxu0 0
  %535 = vmatmul.mubr.bf16.gmra.mrb[0].mxu0 %v362
  %v536 = vpop.f32.mrb[0].mxu0
  %v537 = vadd.f32 0.0, %v536
  %v538 = vpop.f32.mrb[0].mxu0
  %v539 = vpop.f32.mrb[0].mxu0
  %v540 = vadd.f32 0.0, %v539
  %v541 = vpop.f32.mrb[0].mxu0
  %542 = vmatprep.mubr.bf16.mxu0 0
  %543 = vmatmul.mubr.bf16.gmra.mrb[0].mxu0 %v363
  %v544 = vpop.f32.mrb[0].mxu0
  %v545 = vadd.f32 0.0, %v544
  %v546 = vpop.f32.mrb[0].mxu0
  %v547 = vpop.f32.mrb[0].mxu0
  %v548 = vadd.f32 0.0, %v547
  %v549 = vpop.f32.mrb[0].mxu0
  %550 = vmatprep.mubr.bf16.mxu0 0
  %551 = vmatmul.mubr.bf16.gmra.mrb[0].mxu0 %v364
  %v552 = vpop.f32.mrb[0].mxu0
  %v553 = vadd.f32 0.0, %v552
  %v554 = vpop.f32.mrb[0].mxu0
  %v555 = vpop.f32.mrb[0].mxu0
  %v556 = vadd.f32 0.0, %v555
  %v557 = vpop.f32.mrb[0].mxu0
  %558 = vmatprep.mubr.bf16.mxu0 0
  %559 = vmatmul.mubr.bf16.gmra.mrb[0].mxu0 %v365
  %v560 = vpop.f32.mrb[0].mxu0
  %v561 = vadd.f32 0.0, %v560
  %v562 = vpop.f32.mrb[0].mxu0
  %v563 = vpop.f32.mrb[0].mxu0
  %v564 = vadd.f32 0.0, %v563
  %v565 = vpop.f32.mrb[0].mxu0
  %566 = vmatprep.mubr.bf16.mxu0 0
  %567 = vmatmul.mubr.bf16.gmra.mrb[0].mxu0 %v366
  %v568 = vpop.f32.mrb[0].mxu0
  %v569 = vadd.f32 0.0, %v568
  %v570 = vpop.f32.mrb[0].mxu0
  %v571 = vpop.f32.mrb[0].mxu0
  %v572 = vadd.f32 0.0, %v571
  %v573 = vpop.f32.mrb[0].mxu0
  %574 = vmatprep.mubr.bf16.mxu0 0
  %575 = vmatmul.mubr.bf16.gmra.mrb[0].mxu0 %v367
  %v576 = vpop.f32.mrb[0].mxu0
  %v577 = vadd.f32 0.0, %v576
  %v578 = vpop.f32.mrb[0].mxu0
  %v579 = vpop.f32.mrb[0].mxu0
  %v580 = vadd.f32 0.0, %v579
  %v581 = vpop.f32.mrb[0].mxu0
  %582 = vmatprep.mubr.bf16.mxu0 0
  %583 = vmatmul.mubr.bf16.gmra.mrb[0].mxu0 %v368
  %v584 = vpop.f32.mrb[0].mxu0
  %v585 = vadd.f32 0.0, %v584
  %v586 = vpop.f32.mrb[0].mxu0
  %v587 = vpop.f32.mrb[0].mxu0
  %v588 = vadd.f32 0.0, %v587
  %v589 = vpop.f32.mrb[0].mxu0
  %590 = vmatprep.mubr.bf16.mxu0 0
  %591 = vmatmul.mubr.bf16.gmra.mrb[0].mxu0 %v369
  %v592 = vpop.f32.mrb[0].mxu0
  %v593 = vadd.f32 0.0, %v592
  %v594 = vpop.f32.mrb[0].mxu0
  %v595 = vpop.f32.mrb[0].mxu0
  %v596 = vadd.f32 0.0, %v595
  %v597 = vpop.f32.mrb[0].mxu0
  %598 = vmatprep.mubr.bf16.mxu0 0
  %599 = vmatmul.mubr.bf16.gmra.mrb[0].mxu0 %v370
  %v600 = vpop.f32.mrb[0].mxu0
  %v601 = vadd.f32 0.0, %v600
  %v602 = vpop.f32.mrb[0].mxu0
  %v603 = vpop.f32.mrb[0].mxu0
  %v604 = vadd.f32 0.0, %v603
  %v605 = vpop.f32.mrb[0].mxu0
  %606 = vmatprep.mubr.bf16.mxu0 0
  %607 = vmatmul.mubr.bf16.gmra.mrb[0].mxu0 %v371
  %v608 = vpop.f32.mrb[0].mxu0
  %v609 = vadd.f32 0.0, %v608
  %v610 = vpop.f32.mrb[0].mxu0
  %v611 = vpop.f32.mrb[0].mxu0
  %v612 = vadd.f32 0.0, %v611
  %v613 = vpop.f32.mrb[0].mxu0
  %614 = vmatprep.mubr.bf16.mxu0 0
  %615 = vmatmul.mubr.bf16.gmra.mrb[0].mxu0 %v372
  %v616 = vpop.f32.mrb[0].mxu0
  %v617 = vadd.f32 0.0, %v616
  %v618 = vpop.f32.mrb[0].mxu0
  %v619 = vpop.f32.mrb[0].mxu0
  %v620 = vadd.f32 0.0, %v619
  %v621 = vpop.f32.mrb[0].mxu0
  %622 = vmatprep.mubr.bf16.mxu0 0
  %623 = vmatmul.mubr.bf16.gmra.mrb[0].mxu0 %v373
  %v624 = vpop.f32.mrb[0].mxu0
  %v625 = vadd.f32 0.0, %v624
  %v626 = vpop.f32.mrb[0].mxu0
  %v627 = vpop.f32.mrb[0].mxu0
  %v628 = vadd.f32 0.0, %v627
  %v629 = vpop.f32.mrb[0].mxu0
  %630 = vmatprep.mubr.bf16.mxu0 0
  %631 = vmatmul.mubr.bf16.gmra.mrb[0].mxu0 %v374
  %v632 = vpop.f32.mrb[0].mxu0
  %v633 = vadd.f32 0.0, %v632
  %v634 = vpop.f32.mrb[0].mxu0
  %v635 = vpop.f32.mrb[0].mxu0
  %v636 = vadd.f32 0.0, %v635
  %v637 = vpop.f32.mrb[0].mxu0
  %638 = vmatprep.mubr.bf16.mxu0 0
  %639 = vmatmul.mubr.bf16.gmra.mrb[0].mxu0 %v375
  %v640 = vpop.f32.mrb[0].mxu0
  %v641 = vadd.f32 0.0, %v640
  %v642 = vpop.f32.mrb[0].mxu0
  %v643 = vpop.f32.mrb[0].mxu0
  %v644 = vadd.f32 0.0, %v643
  %v645 = vpop.f32.mrb[0].mxu0
  %646 = vmatprep.mubr.bf16.mxu0 0
  %647 = vmatmul.mubr.bf16.gmra.mrb[0].mxu0 %v376
  %v648 = vpop.f32.mrb[0].mxu0
  %v649 = vadd.f32 0.0, %v648
  %v650 = vpop.f32.mrb[0].mxu0
  %v651 = vpop.f32.mrb[0].mxu0
  %v652 = vadd.f32 0.0, %v651
  %v653 = vpop.f32.mrb[0].mxu0
  %654 = vmatprep.mubr.bf16.mxu0 0
  %655 = vmatmul.mubr.bf16.gmra.mrb[0].mxu0 %v377
  %v656 = vpop.f32.mrb[0].mxu0
  %v657 = vadd.f32 0.0, %v656
  %v658 = vpop.f32.mrb[0].mxu0
  %v659 = vpop.f32.mrb[0].mxu0
  %v660 = vadd.f32 0.0, %v659
  %v661 = vpop.f32.mrb[0].mxu0
  %662 = vmatprep.mubr.bf16.mxu0 0
  %663 = vmatmul.mubr.bf16.gmra.mrb[0].mxu0 %v378
  %v664 = vpop.f32.mrb[0].mxu0
  %v665 = vadd.f32 0.0, %v664
  %v666 = vpop.f32.mrb[0].mxu0
  %v667 = vpop.f32.mrb[0].mxu0
  %v668 = vadd.f32 0.0, %v667
  %v669 = vpop.f32.mrb[0].mxu0
  %670 = vmatprep.mubr.bf16.mxu0 0
  %671 = vmatmul.mubr.bf16.gmra.mrb[0].mxu0 %v379
  %v672 = vpop.f32.mrb[0].mxu0
  %v673 = vadd.f32 0.0, %v672
  %v674 = vpop.f32.mrb[0].mxu0
  %v675 = vpop.f32.mrb[0].mxu0
  %v676 = vadd.f32 0.0, %v675
  %v677 = vpop.f32.mrb[0].mxu0
  %678 = vmatprep.mubr.bf16.mxu0 0
  %679 = vmatmul.mubr.bf16.gmra.mrb[0].mxu0 %v380
  %v680 = vpop.f32.mrb[0].mxu0
  %v681 = vadd.f32 0.0, %v680
  %v682 = vpop.f32.mrb[0].mxu0
  %v683 = vpop.f32.mrb[0].mxu0
  %v684 = vadd.f32 0.0, %v683
  %v685 = vpop.f32.mrb[0].mxu0
  %686 = vmatprep.mubr.bf16.mxu0 0
  %687 = vmatmul.mubr.bf16.gmra.mrb[0].mxu0 %v381
  %v688 = vpop.f32.mrb[0].mxu0
  %v689 = vadd.f32 0.0, %v688
  %v690 = vpop.f32.mrb[0].mxu0
  %v691 = vpop.f32.mrb[0].mxu0
  %v692 = vadd.f32 0.0, %v691
  %v693 = vpop.f32.mrb[0].mxu0
  %694 = vmatprep.mubr.bf16.mxu0 0
  %695 = vmatmul.mubr.bf16.gmra.mrb[0].mxu0 %v382
  %v696 = vpop.f32.mrb[0].mxu0
  %v697 = vadd.f32 0.0, %v696
  %v698 = vpop.f32.mrb[0].mxu0
  %v699 = vpop.f32.mrb[0].mxu0
  %v700 = vadd.f32 0.0, %v699
  %v701 = vpop.f32.mrb[0].mxu0
  %702 = vmatprep.mubr.bf16.mxu0 0
  %703 = vmatmul.mubr.bf16.gmra.mrb[0].mxu0 %v383
  %v704 = vpop.f32.mrb[0].mxu0
  %v705 = vadd.f32 0.0, %v704
  %v706 = vpop.f32.mrb[0].mxu0
  %v707 = vpop.f32.mrb[0].mxu0
  %v708 = vadd.f32 0.0, %v707
  %v709 = vpop.f32.mrb[0].mxu0
  %710 = vmatprep.mubr.bf16.mxu0 0
  %711 = vmatmul.mubr.bf16.gmra.mrb[0].mxu0 %v384
  %v712 = vpop.f32.mrb[0].mxu0
  %v713 = vadd.f32 0.0, %v712
  %v714 = vpop.f32.mrb[0].mxu0
  %v715 = vpop.f32.mrb[0].mxu0
  %v716 = vadd.f32 0.0, %v715
  %v717 = vpop.f32.mrb[0].mxu0
  %718 = vmatprep.mubr.bf16.mxu0 0
  %719 = vmatmul.mubr.bf16.gmra.mrb[0].mxu0 %v385
  %v720 = vpop.f32.mrb[0].mxu0
  %v721 = vadd.f32 0.0, %v720
  %v722 = vpop.f32.mrb[0].mxu0
  %v723 = vpop.f32.mrb[0].mxu0
  %v724 = vadd.f32 0.0, %v723
  %v725 = vpop.f32.mrb[0].mxu0
  %726 = vmatprep.mubr.bf16.mxu0 0
  %727 = vmatmul.mubr.bf16.gmra.mrb[0].mxu0 %v386
  %v728 = vpop.f32.mrb[0].mxu0
  %v729 = vadd.f32 0.0, %v728
  %v730 = vpop.f32.mrb[0].mxu0
  %v731 = vpop.f32.mrb[0].mxu0
  %v732 = vadd.f32 0.0, %v731
  %v733 = vpop.f32.mrb[0].mxu0
  %734 = vmatprep.mubr.bf16.mxu0 0
  %735 = vmatmul.mubr.bf16.gmra.mrb[0].mxu0 %v387
  %v736 = vpop.f32.mrb[0].mxu0
  %v737 = vadd.f32 0.0, %v736
  %v738 = vpop.f32.mrb[0].mxu0
  %v739 = vpop.f32.mrb[0].mxu0
  %v740 = vadd.f32 0.0, %v739
  %v741 = vpop.f32.mrb[0].mxu0
  %742 = vmatprep.mubr.bf16.mxu0 0
  %743 = vmatmul.mubr.bf16.gmra.mrb[0].mxu0 %v388
  %v744 = vpop.f32.mrb[0].mxu0
  %v745 = vadd.f32 0.0, %v744
  %v746 = vpop.f32.mrb[0].mxu0
  %v747 = vpop.f32.mrb[0].mxu0
  %v748 = vadd.f32 0.0, %v747
  %v749 = vpop.f32.mrb[0].mxu0
  %750 = vmatprep.mubr.bf16.mxu0 0
  %751 = vmatmul.mubr.bf16.gmra.mrb[0].mxu0 %v389
  %v752 = vpop.f32.mrb[0].mxu0
  %v753 = vadd.f32 0.0, %v752
  %v754 = vpop.f32.mrb[0].mxu0
  %v755 = vpop.f32.mrb[0].mxu0
  %v756 = vadd.f32 0.0, %v755
  %v757 = vpop.f32.mrb[0].mxu0
  %758 = vdwg.mxu0
  %v759 = vadd.f32 %v86, %v505
  %v760 = vadd.f32 %v87, %v508
  %v761 = vadd.f32 %v88, %v513
  %v762 = vadd.f32 %v89, %v516
  %v763 = vadd.f32 %v90, %v521
  %v764 = vadd.f32 %v91, %v524
  %v765 = vadd.f32 %v92, %v529
  %v766 = vadd.f32 %v93, %v532
  %v767 = vadd.f32 %v94, %v537
  %v768 = vadd.f32 %v95, %v540
  %v769 = vadd.f32 %v96, %v545
  %v770 = vadd.f32 %v97, %v548
  %v771 = vadd.f32 %v98, %v553
  %v772 = vadd.f32 %v99, %v556
  %v773 = vadd.f32 %v100, %v561
  %v774 = vadd.f32 %v101, %v564
  %v775 = vadd.f32 %v102, %v569
  %v776 = vadd.f32 %v103, %v572
  %v777 = vadd.f32 %v104, %v577
  %v778 = vadd.f32 %v105, %v580
  %v779 = vadd.f32 %v106, %v585
  %v780 = vadd.f32 %v107, %v588
  %v781 = vadd.f32 %v108, %v593
  %v782 = vadd.f32 %v109, %v596
  %v783 = vadd.f32 %v110, %v601
  %v784 = vadd.f32 %v111, %v604
  %v785 = vadd.f32 %v112, %v609
  %v786 = vadd.f32 %v113, %v612
  %v787 = vadd.f32 %v114, %v617
  %v788 = vadd.f32 %v115, %v620
  %v789 = vadd.f32 %v116, %v625
  %v790 = vadd.f32 %v117, %v628
  %v791 = vadd.f32 %v118, %v633
  %v792 = vadd.f32 %v119, %v636
  %v793 = vadd.f32 %v120, %v641
  %v794 = vadd.f32 %v121, %v644
  %v795 = vadd.f32 %v122, %v649
  %v796 = vadd.f32 %v123, %v652
  %v797 = vadd.f32 %v124, %v657
  %v798 = vadd.f32 %v125, %v660
  %v799 = vadd.f32 %v126, %v665
  %v800 = vadd.f32 %v127, %v668
  %v801 = vadd.f32 %v128, %v673
  %v802 = vadd.f32 %v129, %v676
  %v803 = vadd.f32 %v130, %v681
  %v804 = vadd.f32 %v131, %v684
  %v805 = vadd.f32 %v132, %v689
  %v806 = vadd.f32 %v133, %v692
  %v807 = vadd.f32 %v134, %v697
  %v808 = vadd.f32 %v135, %v700
  %v809 = vadd.f32 %v136, %v705
  %v810 = vadd.f32 %v137, %v708
  %v811 = vadd.f32 %v138, %v713
  %v812 = vadd.f32 %v139, %v716
  %v813 = vadd.f32 %v140, %v721
  %v814 = vadd.f32 %v141, %v724
  %v815 = vadd.f32 %v142, %v729
  %v816 = vadd.f32 %v143, %v732
  %v817 = vadd.f32 %v144, %v737
  %v818 = vadd.f32 %v145, %v740
  %v819 = vadd.f32 %v146, %v745
  %v820 = vadd.f32 %v147, %v748
  %v821 = vadd.f32 %v148, %v753
  %v822 = vadd.f32 %v149, %v756
  %823 = vst [vmem:[%s4] sm:$0xff] %v759
  %824 = vst [vmem:[%s4 + $0x8] sm:$0xff] %v760
  %825 = vst [vmem:[%s4 + $0x10] sm:$0xff] %v761
  %826 = vst [vmem:[%s4 + $0x18] sm:$0xff] %v762
  %827 = vst [vmem:[%s4 + $0x20] sm:$0xff] %v763
  %828 = vst [vmem:[%s4 + $0x28] sm:$0xff] %v764
  %829 = vst [vmem:[%s4 + $0x30] sm:$0xff] %v765
  %830 = vst [vmem:[%s4 + $0x38] sm:$0xff] %v766
  %831 = vst [vmem:[%s4 + $0x40] sm:$0xff] %v767
  %832 = vst [vmem:[%s4 + $0x48] sm:$0xff] %v768
  %833 = vst [vmem:[%s4 + $0x50] sm:$0xff] %v769
  %834 = vst [vmem:[%s4 + $0x58] sm:$0xff] %v770
  %835 = vst [vmem:[%s4 + $0x60] sm:$0xff] %v771
  %836 = vst [vmem:[%s4 + $0x68] sm:$0xff] %v772
  %837 = vst [vmem:[%s4 + $0x70] sm:$0xff] %v773
  %838 = vst [vmem:[%s4 + $0x78] sm:$0xff] %v774
  %839 = vst [vmem:[%s4 + $0x80] sm:$0xff] %v775
  %840 = vst [vmem:[%s4 + $0x88] sm:$0xff] %v776
  %841 = vst [vmem:[%s4 + $0x90] sm:$0xff] %v777
  %842 = vst [vmem:[%s4 + $0x98] sm:$0xff] %v778
  %843 = vst [vmem:[%s4 + $0xa0] sm:$0xff] %v779
  %844 = vst [vmem:[%s4 + $0xa8] sm:$0xff] %v780
  %845 = vst [vmem:[%s4 + $0xb0] sm:$0xff] %v781
  %846 = vst [vmem:[%s4 + $0xb8] sm:$0xff] %v782
  %847 = vst [vmem:[%s4 + $0xc0] sm:$0xff] %v783
  %848 = vst [vmem:[%s4 + $0xc8] sm:$0xff] %v784
  %849 = vst [vmem:[%s4 + $0xd0] sm:$0xff] %v785
  %850 = vst [vmem:[%s4 + $0xd8] sm:$0xff] %v786
  %851 = vst [vmem:[%s4 + $0xe0] sm:$0xff] %v787
  %852 = vst [vmem:[%s4 + $0xe8] sm:$0xff] %v788
  %853 = vst [vmem:[%s4 + $0xf0] sm:$0xff] %v789
  %854 = vst [vmem:[%s4 + $0xf8] sm:$0xff] %v790
  %855 = vst [vmem:[%s4 + $0x100] sm:$0xff] %v791
  %856 = vst [vmem:[%s4 + $0x108] sm:$0xff] %v792
  %857 = vst [vmem:[%s4 + $0x110] sm:$0xff] %v793
  %858 = vst [vmem:[%s4 + $0x118] sm:$0xff] %v794
  %859 = vst [vmem:[%s4 + $0x120] sm:$0xff] %v795
  %860 = vst [vmem:[%s4 + $0x128] sm:$0xff] %v796
  %861 = vst [vmem:[%s4 + $0x130] sm:$0xff] %v797
  %862 = vst [vmem:[%s4 + $0x138] sm:$0xff] %v798
  %863 = vst [vmem:[%s4 + $0x140] sm:$0xff] %v799
  %864 = vst [vmem:[%s4 + $0x148] sm:$0xff] %v800
  %865 = vst [vmem:[%s4 + $0x150] sm:$0xff] %v801
  %866 = vst [vmem:[%s4 + $0x158] sm:$0xff] %v802
  %867 = vst [vmem:[%s4 + $0x160] sm:$0xff] %v803
  %868 = vst [vmem:[%s4 + $0x168] sm:$0xff] %v804
  %869 = vst [vmem:[%s4 + $0x170] sm:$0xff] %v805
  %870 = vst [vmem:[%s4 + $0x178] sm:$0xff] %v806
  %871 = vst [vmem:[%s4 + $0x180] sm:$0xff] %v807
  %872 = vst [vmem:[%s4 + $0x188] sm:$0xff] %v808
  %873 = vst [vmem:[%s4 + $0x190] sm:$0xff] %v809
  %874 = vst [vmem:[%s4 + $0x198] sm:$0xff] %v810
  %875 = vst [vmem:[%s4 + $0x1a0] sm:$0xff] %v811
  %876 = vst [vmem:[%s4 + $0x1a8] sm:$0xff] %v812
  %877 = vst [vmem:[%s4 + $0x1b0] sm:$0xff] %v813
  %878 = vst [vmem:[%s4 + $0x1b8] sm:$0xff] %v814
  %879 = vst [vmem:[%s4 + $0x1c0] sm:$0xff] %v815
  %880 = vst [vmem:[%s4 + $0x1c8] sm:$0xff] %v816
  %881 = vst [vmem:[%s4 + $0x1d0] sm:$0xff] %v817
  %882 = vst [vmem:[%s4 + $0x1d8] sm:$0xff] %v818
  %883 = vst [vmem:[%s4 + $0x1e0] sm:$0xff] %v819
  %884 = vst [vmem:[%s4 + $0x1e8] sm:$0xff] %v820
  %885 = vst [vmem:[%s4 + $0x1f0] sm:$0xff] %v821
  %886 = vst [vmem:[%s4 + $0x1f8] sm:$0xff] %v822
  // Predicated region
  $region22: #{discriminator_forward.4} parent=0 // pred_check
    %p887 = pneg %p18
  $region23: #{discriminator_forward.4} parent=0 // pred_check_branch
    %889 = sbr.rel (%p887) target = $region25
  $region24: #{discriminator_forward.4} parent=0 // pred_region
    %v890 = vld [vmem:[%s4] sm:$0xff]
    %v891 = vld [vmem:[%s4 + $0x8] sm:$0xff]
    %v892 = vld [vmem:[%s4 + $0x10] sm:$0xff]
    %v893 = vld [vmem:[%s4 + $0x18] sm:$0xff]
    %v894 = vld [vmem:[%s4 + $0x20] sm:$0xff]
    %v895 = vld [vmem:[%s4 + $0x28] sm:$0xff]
    %v896 = vld [vmem:[%s4 + $0x30] sm:$0xff]
    %v897 = vld [vmem:[%s4 + $0x38] sm:$0xff]
    %v898 = vld [vmem:[%s4 + $0x40] sm:$0xff]
    %v899 = vld [vmem:[%s4 + $0x48] sm:$0xff]
    %v900 = vld [vmem:[%s4 + $0x50] sm:$0xff]
    %v901 = vld [vmem:[%s4 + $0x58] sm:$0xff]
    %v902 = vld [vmem:[%s4 + $0x60] sm:$0xff]
    %v903 = vld [vmem:[%s4 + $0x68] sm:$0xff]
    %v904 = vld [vmem:[%s4 + $0x70] sm:$0xff]
    %v905 = vld [vmem:[%s4 + $0x78] sm:$0xff]
    %v906 = vld [vmem:[%s4 + $0x80] sm:$0xff]
    %v907 = vld [vmem:[%s4 + $0x88] sm:$0xff]
    %v908 = vld [vmem:[%s4 + $0x90] sm:$0xff]
    %v909 = vld [vmem:[%s4 + $0x98] sm:$0xff]
    %v910 = vld [vmem:[%s4 + $0xa0] sm:$0xff]
    %v911 = vld [vmem:[%s4 + $0xa8] sm:$0xff]
    %v912 = vld [vmem:[%s4 + $0xb0] sm:$0xff]
    %v913 = vld [vmem:[%s4 + $0xb8] sm:$0xff]
    %v914 = vld [vmem:[%s4 + $0xc0] sm:$0xff]
    %v915 = vld [vmem:[%s4 + $0xc8] sm:$0xff]
    %v916 = vld [vmem:[%s4 + $0xd0] sm:$0xff]
    %v917 = vld [vmem:[%s4 + $0xd8] sm:$0xff]
    %v918 = vld [vmem:[%s4 + $0xe0] sm:$0xff]
    %v919 = vld [vmem:[%s4 + $0xe8] sm:$0xff]
    %v920 = vld [vmem:[%s4 + $0xf0] sm:$0xff]
    %v921 = vld [vmem:[%s4 + $0xf8] sm:$0xff]
    %v922 = vld [vmem:[%s4 + $0x100] sm:$0xff]
    %v923 = vld [vmem:[%s4 + $0x108] sm:$0xff]
    %v924 = vld [vmem:[%s4 + $0x110] sm:$0xff]
    %v925 = vld [vmem:[%s4 + $0x118] sm:$0xff]
    %v926 = vld [vmem:[%s4 + $0x120] sm:$0xff]
    %v927 = vld [vmem:[%s4 + $0x128] sm:$0xff]
    %v928 = vld [vmem:[%s4 + $0x130] sm:$0xff]
    %v929 = vld [vmem:[%s4 + $0x138] sm:$0xff]
    %v930 = vld [vmem:[%s4 + $0x140] sm:$0xff]
    %v931 = vld [vmem:[%s4 + $0x148] sm:$0xff]
    %v932 = vld [vmem:[%s4 + $0x150] sm:$0xff]
    %v933 = vld [vmem:[%s4 + $0x158] sm:$0xff]
    %v934 = vld [vmem:[%s4 + $0x160] sm:$0xff]
    %v935 = vld [vmem:[%s4 + $0x168] sm:$0xff]
    %v936 = vld [vmem:[%s4 + $0x170] sm:$0xff]
    %v937 = vld [vmem:[%s4 + $0x178] sm:$0xff]
    %v938 = vld [vmem:[%s4 + $0x180] sm:$0xff]
    %v939 = vld [vmem:[%s4 + $0x188] sm:$0xff]
    %v940 = vld [vmem:[%s4 + $0x190] sm:$0xff]
    %v941 = vld [vmem:[%s4 + $0x198] sm:$0xff]
    %v942 = vld [vmem:[%s4 + $0x1a0] sm:$0xff]
    %v943 = vld [vmem:[%s4 + $0x1a8] sm:$0xff]
    %v944 = vld [vmem:[%s4 + $0x1b0] sm:$0xff]
    %v945 = vld [vmem:[%s4 + $0x1b8] sm:$0xff]
    %v946 = vld [vmem:[%s4 + $0x1c0] sm:$0xff]
    %v947 = vld [vmem:[%s4 + $0x1c8] sm:$0xff]
    %v948 = vld [vmem:[%s4 + $0x1d0] sm:$0xff]
    %v949 = vld [vmem:[%s4 + $0x1d8] sm:$0xff]
    %v950 = vld [vmem:[%s4 + $0x1e0] sm:$0xff]
    %v951 = vld [vmem:[%s4 + $0x1e8] sm:$0xff]
    %v952 = vld [vmem:[%s4 + $0x1f0] sm:$0xff]
    %v953 = vld [vmem:[%s4 + $0x1f8] sm:$0xff]
    %v954 = vld [vmem:[%s2] sm:$0x1]
    %v956 = vlaneseq
    %v957 = vshrl.u32 %v956, 7
    %v958 = vsub.s32 0, %v957
    %v959 = vrot.slane %v954, %v958
    %v961 = vmul.f32 %v890, %v959
    %v962 = vmul.f32 %v891, %v959
    %v963 = vmul.f32 %v892, %v959
    %v964 = vmul.f32 %v893, %v959
    %v965 = vmul.f32 %v894, %v959
    %v966 = vmul.f32 %v895, %v959
    %v967 = vmul.f32 %v896, %v959
    %v968 = vmul.f32 %v897, %v959
    %v969 = vmul.f32 %v898, %v959
    %v970 = vmul.f32 %v899, %v959
    %v971 = vmul.f32 %v900, %v959
    %v972 = vmul.f32 %v901, %v959
    %v973 = vmul.f32 %v902, %v959
    %v974 = vmul.f32 %v903, %v959
    %v975 = vmul.f32 %v904, %v959
    %v976 = vmul.f32 %v905, %v959
    %v977 = vmul.f32 %v906, %v959
    %v978 = vmul.f32 %v907, %v959
    %v979 = vmul.f32 %v908, %v959
    %v980 = vmul.f32 %v909, %v959
    %v981 = vmul.f32 %v910, %v959
    %v982 = vmul.f32 %v911, %v959
    %v983 = vmul.f32 %v912, %v959
    %v984 = vmul.f32 %v913, %v959
    %v985 = vmul.f32 %v914, %v959
    %v986 = vmul.f32 %v915, %v959
    %v987 = vmul.f32 %v916, %v959
    %v988 = vmul.f32 %v917, %v959
    %v989 = vmul.f32 %v918, %v959
    %v990 = vmul.f32 %v919, %v959
    %v991 = vmul.f32 %v920, %v959
    %v992 = vmul.f32 %v921, %v959
    %v993 = vmul.f32 %v922, %v959
    %v994 = vmul.f32 %v923, %v959
    %v995 = vmul.f32 %v924, %v959
    %v996 = vmul.f32 %v925, %v959
    %v997 = vmul.f32 %v926, %v959
    %v998 = vmul.f32 %v927, %v959
    %v999 = vmul.f32 %v928, %v959
    %v1000 = vmul.f32 %v929, %v959
    %v1001 = vmul.f32 %v930, %v959
    %v1002 = vmul.f32 %v931, %v959
    %v1003 = vmul.f32 %v932, %v959
    %v1004 = vmul.f32 %v933, %v959
    %v1005 = vmul.f32 %v934, %v959
    %v1006 = vmul.f32 %v935, %v959
    %v1007 = vmul.f32 %v936, %v959
    %v1008 = vmul.f32 %v937, %v959
    %v1009 = vmul.f32 %v938, %v959
    %v1010 = vmul.f32 %v939, %v959
    %v1011 = vmul.f32 %v940, %v959
    %v1012 = vmul.f32 %v941, %v959
    %v1013 = vmul.f32 %v942, %v959
    %v1014 = vmul.f32 %v943, %v959
    %v1015 = vmul.f32 %v944, %v959
    %v1016 = vmul.f32 %v945, %v959
    %v1017 = vmul.f32 %v946, %v959
    %v1018 = vmul.f32 %v947, %v959
    %v1019 = vmul.f32 %v948, %v959
    %v1020 = vmul.f32 %v949, %v959
    %v1021 = vmul.f32 %v950, %v959
    %v1022 = vmul.f32 %v951, %v959
    %v1023 = vmul.f32 %v952, %v959
    %v1024 = vmul.f32 %v953, %v959
    %v1025 = vld [vmem:[%s3] sm:$0x1]
    %v1027 = vlaneseq
    %v1028 = vshrl.u32 %v1027, 7
    %v1029 = vsub.s32 0, %v1028
    %v1030 = vrot.slane %v1025, %v1029
    %v1032 = vadd.f32 %v961, %v1030
    %v1033 = vadd.f32 %v962, %v1030
    %v1034 = vadd.f32 %v963, %v1030
    %v1035 = vadd.f32 %v964, %v1030
    %v1036 = vadd.f32 %v965, %v1030
    %v1037 = vadd.f32 %v966, %v1030
    %v1038 = vadd.f32 %v967, %v1030
    %v1039 = vadd.f32 %v968, %v1030
    %v1040 = vadd.f32 %v969, %v1030
    %v1041 = vadd.f32 %v970, %v1030
    %v1042 = vadd.f32 %v971, %v1030
    %v1043 = vadd.f32 %v972, %v1030
    %v1044 = vadd.f32 %v973, %v1030
    %v1045 = vadd.f32 %v974, %v1030
    %v1046 = vadd.f32 %v975, %v1030
    %v1047 = vadd.f32 %v976, %v1030
    %v1048 = vadd.f32 %v977, %v1030
    %v1049 = vadd.f32 %v978, %v1030
    %v1050 = vadd.f32 %v979, %v1030
    %v1051 = vadd.f32 %v980, %v1030
    %v1052 = vadd.f32 %v981, %v1030
    %v1053 = vadd.f32 %v982, %v1030
    %v1054 = vadd.f32 %v983, %v1030
    %v1055 = vadd.f32 %v984, %v1030
    %v1056 = vadd.f32 %v985, %v1030
    %v1057 = vadd.f32 %v986, %v1030
    %v1058 = vadd.f32 %v987, %v1030
    %v1059 = vadd.f32 %v988, %v1030
    %v1060 = vadd.f32 %v989, %v1030
    %v1061 = vadd.f32 %v990, %v1030
    %v1062 = vadd.f32 %v991, %v1030
    %v1063 = vadd.f32 %v992, %v1030
    %v1064 = vadd.f32 %v993, %v1030
    %v1065 = vadd.f32 %v994, %v1030
    %v1066 = vadd.f32 %v995, %v1030
    %v1067 = vadd.f32 %v996, %v1030
    %v1068 = vadd.f32 %v997, %v1030
    %v1069 = vadd.f32 %v998, %v1030
    %v1070 = vadd.f32 %v999, %v1030
    %v1071 = vadd.f32 %v1000, %v1030
    %v1072 = vadd.f32 %v1001, %v1030
    %v1073 = vadd.f32 %v1002, %v1030
    %v1074 = vadd.f32 %v1003, %v1030
    %v1075 = vadd.f32 %v1004, %v1030
    %v1076 = vadd.f32 %v1005, %v1030
    %v1077 = vadd.f32 %v1006, %v1030
    %v1078 = vadd.f32 %v1007, %v1030
    %v1079 = vadd.f32 %v1008, %v1030
    %v1080 = vadd.f32 %v1009, %v1030
    %v1081 = vadd.f32 %v1010, %v1030
    %v1082 = vadd.f32 %v1011, %v1030
    %v1083 = vadd.f32 %v1012, %v1030
    %v1084 = vadd.f32 %v1013, %v1030
    %v1085 = vadd.f32 %v1014, %v1030
    %v1086 = vadd.f32 %v1015, %v1030
    %v1087 = vadd.f32 %v1016, %v1030
    %v1088 = vadd.f32 %v1017, %v1030
    %v1089 = vadd.f32 %v1018, %v1030
    %v1090 = vadd.f32 %v1019, %v1030
    %v1091 = vadd.f32 %v1020, %v1030
    %v1092 = vadd.f32 %v1021, %v1030
    %v1093 = vadd.f32 %v1022, %v1030
    %v1094 = vadd.f32 %v1023, %v1030
    %v1095 = vadd.f32 %v1024, %v1030
    %vm1096 = vcmp.ge.f32.partialorder %v1032, 0.0
    %vm1097 = vcmp.ge.f32.partialorder %v1033, 0.0
    %vm1098 = vcmp.ge.f32.partialorder %v1034, 0.0
    %vm1099 = vcmp.ge.f32.partialorder %v1035, 0.0
    %vm1100 = vcmp.ge.f32.partialorder %v1036, 0.0
    %vm1101 = vcmp.ge.f32.partialorder %v1037, 0.0
    %vm1102 = vcmp.ge.f32.partialorder %v1038, 0.0
    %vm1103 = vcmp.ge.f32.partialorder %v1039, 0.0
    %vm1104 = vcmp.ge.f32.partialorder %v1040, 0.0
    %vm1105 = vcmp.ge.f32.partialorder %v1041, 0.0
    %vm1106 = vcmp.ge.f32.partialorder %v1042, 0.0
    %vm1107 = vcmp.ge.f32.partialorder %v1043, 0.0
    %vm1108 = vcmp.ge.f32.partialorder %v1044, 0.0
    %vm1109 = vcmp.ge.f32.partialorder %v1045, 0.0
    %vm1110 = vcmp.ge.f32.partialorder %v1046, 0.0
    %vm1111 = vcmp.ge.f32.partialorder %v1047, 0.0
    %vm1112 = vcmp.ge.f32.partialorder %v1048, 0.0
    %vm1113 = vcmp.ge.f32.partialorder %v1049, 0.0
    %vm1114 = vcmp.ge.f32.partialorder %v1050, 0.0
    %vm1115 = vcmp.ge.f32.partialorder %v1051, 0.0
    %vm1116 = vcmp.ge.f32.partialorder %v1052, 0.0
    %vm1117 = vcmp.ge.f32.partialorder %v1053, 0.0
    %vm1118 = vcmp.ge.f32.partialorder %v1054, 0.0
    %vm1119 = vcmp.ge.f32.partialorder %v1055, 0.0
    %vm1120 = vcmp.ge.f32.partialorder %v1056, 0.0
    %vm1121 = vcmp.ge.f32.partialorder %v1057, 0.0
    %vm1122 = vcmp.ge.f32.partialorder %v1058, 0.0
    %vm1123 = vcmp.ge.f32.partialorder %v1059, 0.0
    %vm1124 = vcmp.ge.f32.partialorder %v1060, 0.0
    %vm1125 = vcmp.ge.f32.partialorder %v1061, 0.0
    %vm1126 = vcmp.ge.f32.partialorder %v1062, 0.0
    %vm1127 = vcmp.ge.f32.partialorder %v1063, 0.0
    %vm1128 = vcmp.ge.f32.partialorder %v1064, 0.0
    %vm1129 = vcmp.ge.f32.partialorder %v1065, 0.0
    %vm1130 = vcmp.ge.f32.partialorder %v1066, 0.0
    %vm1131 = vcmp.ge.f32.partialorder %v1067, 0.0
    %vm1132 = vcmp.ge.f32.partialorder %v1068, 0.0
    %vm1133 = vcmp.ge.f32.partialorder %v1069, 0.0
    %vm1134 = vcmp.ge.f32.partialorder %v1070, 0.0
    %vm1135 = vcmp.ge.f32.partialorder %v1071, 0.0
    %vm1136 = vcmp.ge.f32.partialorder %v1072, 0.0
    %vm1137 = vcmp.ge.f32.partialorder %v1073, 0.0
    %vm1138 = vcmp.ge.f32.partialorder %v1074, 0.0
    %vm1139 = vcmp.ge.f32.partialorder %v1075, 0.0
    %vm1140 = vcmp.ge.f32.partialorder %v1076, 0.0
    %vm1141 = vcmp.ge.f32.partialorder %v1077, 0.0
    %vm1142 = vcmp.ge.f32.partialorder %v1078, 0.0
    %vm1143 = vcmp.ge.f32.partialorder %v1079, 0.0
    %vm1144 = vcmp.ge.f32.partialorder %v1080, 0.0
    %vm1145 = vcmp.ge.f32.partialorder %v1081, 0.0
    %vm1146 = vcmp.ge.f32.partialorder %v1082, 0.0
    %vm1147 = vcmp.ge.f32.partialorder %v1083, 0.0
    %vm1148 = vcmp.ge.f32.partialorder %v1084, 0.0
    %vm1149 = vcmp.ge.f32.partialorder %v1085, 0.0
    %vm1150 = vcmp.ge.f32.partialorder %v1086, 0.0
    %vm1151 = vcmp.ge.f32.partialorder %v1087, 0.0
    %vm1152 = vcmp.ge.f32.partialorder %v1088, 0.0
    %vm1153 = vcmp.ge.f32.partialorder %v1089, 0.0
    %vm1154 = vcmp.ge.f32.partialorder %v1090, 0.0
    %vm1155 = vcmp.ge.f32.partialorder %v1091, 0.0
    %vm1156 = vcmp.ge.f32.partialorder %v1092, 0.0
    %vm1157 = vcmp.ge.f32.partialorder %v1093, 0.0
    %vm1158 = vcmp.ge.f32.partialorder %v1094, 0.0
    %vm1159 = vcmp.ge.f32.partialorder %v1095, 0.0
    %v1160 = vmul.f32 %v1032, 0.2
    %v1161 = vmul.f32 %v1033, 0.2
    %v1162 = vmul.f32 %v1034, 0.2
    %v1163 = vmul.f32 %v1035, 0.2
    %v1164 = vmul.f32 %v1036, 0.2
    %v1165 = vmul.f32 %v1037, 0.2
    %v1166 = vmul.f32 %v1038, 0.2
    %v1167 = vmul.f32 %v1039, 0.2
    %v1168 = vmul.f32 %v1040, 0.2
    %v1169 = vmul.f32 %v1041, 0.2
    %v1170 = vmul.f32 %v1042, 0.2
    %v1171 = vmul.f32 %v1043, 0.2
    %v1172 = vmul.f32 %v1044, 0.2
    %v1173 = vmul.f32 %v1045, 0.2
    %v1174 = vmul.f32 %v1046, 0.2
    %v1175 = vmul.f32 %v1047, 0.2
    %v1176 = vmul.f32 %v1048, 0.2
    %v1177 = vmul.f32 %v1049, 0.2
    %v1178 = vmul.f32 %v1050, 0.2
    %v1179 = vmul.f32 %v1051, 0.2
    %v1180 = vmul.f32 %v1052, 0.2
    %v1181 = vmul.f32 %v1053, 0.2
    %v1182 = vmul.f32 %v1054, 0.2
    %v1183 = vmul.f32 %v1055, 0.2
    %v1184 = vmul.f32 %v1056, 0.2
    %v1185 = vmul.f32 %v1057, 0.2
    %v1186 = vmul.f32 %v1058, 0.2
    %v1187 = vmul.f32 %v1059, 0.2
    %v1188 = vmul.f32 %v1060, 0.2
    %v1189 = vmul.f32 %v1061, 0.2
    %v1190 = vmul.f32 %v1062, 0.2
    %v1191 = vmul.f32 %v1063, 0.2
    %v1192 = vmul.f32 %v1064, 0.2
    %v1193 = vmul.f32 %v1065, 0.2
    %v1194 = vmul.f32 %v1066, 0.2
    %v1195 = vmul.f32 %v1067, 0.2
    %v1196 = vmul.f32 %v1068, 0.2
    %v1197 = vmul.f32 %v1069, 0.2
    %v1198 = vmul.f32 %v1070, 0.2
    %v1199 = vmul.f32 %v1071, 0.2
    %v1200 = vmul.f32 %v1072, 0.2
    %v1201 = vmul.f32 %v1073, 0.2
    %v1202 = vmul.f32 %v1074, 0.2
    %v1203 = vmul.f32 %v1075, 0.2
    %v1204 = vmul.f32 %v1076, 0.2
    %v1205 = vmul.f32 %v1077, 0.2
    %v1206 = vmul.f32 %v1078, 0.2
    %v1207 = vmul.f32 %v1079, 0.2
    %v1208 = vmul.f32 %v1080, 0.2
    %v1209 = vmul.f32 %v1081, 0.2
    %v1210 = vmul.f32 %v1082, 0.2
    %v1211 = vmul.f32 %v1083, 0.2
    %v1212 = vmul.f32 %v1084, 0.2
    %v1213 = vmul.f32 %v1085, 0.2
    %v1214 = vmul.f32 %v1086, 0.2
    %v1215 = vmul.f32 %v1087, 0.2
    %v1216 = vmul.f32 %v1088, 0.2
    %v1217 = vmul.f32 %v1089, 0.2
    %v1218 = vmul.f32 %v1090, 0.2
    %v1219 = vmul.f32 %v1091, 0.2
    %v1220 = vmul.f32 %v1092, 0.2
    %v1221 = vmul.f32 %v1093, 0.2
    %v1222 = vmul.f32 %v1094, 0.2
    %v1223 = vmul.f32 %v1095, 0.2
    %v1224 = vsel %vm1096, %v1032, %v1160
    %v1225 = vsel %vm1097, %v1033, %v1161
    %v1226 = vsel %vm1098, %v1034, %v1162
    %v1227 = vsel %vm1099, %v1035, %v1163
    %v1228 = vsel %vm1100, %v1036, %v1164
    %v1229 = vsel %vm1101, %v1037, %v1165
    %v1230 = vsel %vm1102, %v1038, %v1166
    %v1231 = vsel %vm1103, %v1039, %v1167
    %v1232 = vsel %vm1104, %v1040, %v1168
    %v1233 = vsel %vm1105, %v1041, %v1169
    %v1234 = vsel %vm1106, %v1042, %v1170
    %v1235 = vsel %vm1107, %v1043, %v1171
    %v1236 = vsel %vm1108, %v1044, %v1172
    %v1237 = vsel %vm1109, %v1045, %v1173
    %v1238 = vsel %vm1110, %v1046, %v1174
    %v1239 = vsel %vm1111, %v1047, %v1175
    %v1240 = vsel %vm1112, %v1048, %v1176
    %v1241 = vsel %vm1113, %v1049, %v1177
    %v1242 = vsel %vm1114, %v1050, %v1178
    %v1243 = vsel %vm1115, %v1051, %v1179
    %v1244 = vsel %vm1116, %v1052, %v1180
    %v1245 = vsel %vm1117, %v1053, %v1181
    %v1246 = vsel %vm1118, %v1054, %v1182
    %v1247 = vsel %vm1119, %v1055, %v1183
    %v1248 = vsel %vm1120, %v1056, %v1184
    %v1249 = vsel %vm1121, %v1057, %v1185
    %v1250 = vsel %vm1122, %v1058, %v1186
    %v1251 = vsel %vm1123, %v1059, %v1187
    %v1252 = vsel %vm1124, %v1060, %v1188
    %v1253 = vsel %vm1125, %v1061, %v1189
    %v1254 = vsel %vm1126, %v1062, %v1190
    %v1255 = vsel %vm1127, %v1063, %v1191
    %v1256 = vsel %vm1128, %v1064, %v1192
    %v1257 = vsel %vm1129, %v1065, %v1193
    %v1258 = vsel %vm1130, %v1066, %v1194
    %v1259 = vsel %vm1131, %v1067, %v1195
    %v1260 = vsel %vm1132, %v1068, %v1196
    %v1261 = vsel %vm1133, %v1069, %v1197
    %v1262 = vsel %vm1134, %v1070, %v1198
    %v1263 = vsel %vm1135, %v1071, %v1199
    %v1264 = vsel %vm1136, %v1072, %v1200
    %v1265 = vsel %vm1137, %v1073, %v1201
    %v1266 = vsel %vm1138, %v1074, %v1202
    %v1267 = vsel %vm1139, %v1075, %v1203
    %v1268 = vsel %vm1140, %v1076, %v1204
    %v1269 = vsel %vm1141, %v1077, %v1205
    %v1270 = vsel %vm1142, %v1078, %v1206
    %v1271 = vsel %vm1143, %v1079, %v1207
    %v1272 = vsel %vm1144, %v1080, %v1208
    %v1273 = vsel %vm1145, %v1081, %v1209
    %v1274 = vsel %vm1146, %v1082, %v1210
    %v1275 = vsel %vm1147, %v1083, %v1211
    %v1276 = vsel %vm1148, %v1084, %v1212
    %v1277 = vsel %vm1149, %v1085, %v1213
    %v1278 = vsel %vm1150, %v1086, %v1214
    %v1279 = vsel %vm1151, %v1087, %v1215
    %v1280 = vsel %vm1152, %v1088, %v1216
    %v1281 = vsel %vm1153, %v1089, %v1217
    %v1282 = vsel %vm1154, %v1090, %v1218
    %v1283 = vsel %vm1155, %v1091, %v1219
    %v1284 = vsel %vm1156, %v1092, %v1220
    %v1285 = vsel %vm1157, %v1093, %v1221
    %v1286 = vsel %vm1158, %v1094, %v1222
    %v1287 = vsel %vm1159, %v1095, %v1223
    %1288 = vst [vmem:[%s4] sm:$0xff] %v1224
    %1289 = vst [vmem:[%s4 + $0x8] sm:$0xff] %v1225
    %1290 = vst [vmem:[%s4 + $0x10] sm:$0xff] %v1226
    %1291 = vst [vmem:[%s4 + $0x18] sm:$0xff] %v1227
    %1292 = vst [vmem:[%s4 + $0x20] sm:$0xff] %v1228
    %1293 = vst [vmem:[%s4 + $0x28] sm:$0xff] %v1229
    %1294 = vst [vmem:[%s4 + $0x30] sm:$0xff] %v1230
    %1295 = vst [vmem:[%s4 + $0x38] sm:$0xff] %v1231
    %1296 = vst [vmem:[%s4 + $0x40] sm:$0xff] %v1232
    %1297 = vst [vmem:[%s4 + $0x48] sm:$0xff] %v1233
    %1298 = vst [vmem:[%s4 + $0x50] sm:$0xff] %v1234
    %1299 = vst [vmem:[%s4 + $0x58] sm:$0xff] %v1235
    %1300 = vst [vmem:[%s4 + $0x60] sm:$0xff] %v1236
    %1301 = vst [vmem:[%s4 + $0x68] sm:$0xff] %v1237
    %1302 = vst [vmem:[%s4 + $0x70] sm:$0xff] %v1238
    %1303 = vst [vmem:[%s4 + $0x78] sm:$0xff] %v1239
    %1304 = vst [vmem:[%s4 + $0x80] sm:$0xff] %v1240
    %1305 = vst [vmem:[%s4 + $0x88] sm:$0xff] %v1241
    %1306 = vst [vmem:[%s4 + $0x90] sm:$0xff] %v1242
    %1307 = vst [vmem:[%s4 + $0x98] sm:$0xff] %v1243
    %1308 = vst [vmem:[%s4 + $0xa0] sm:$0xff] %v1244
    %1309 = vst [vmem:[%s4 + $0xa8] sm:$0xff] %v1245
    %1310 = vst [vmem:[%s4 + $0xb0] sm:$0xff] %v1246
    %1311 = vst [vmem:[%s4 + $0xb8] sm:$0xff] %v1247
    %1312 = vst [vmem:[%s4 + $0xc0] sm:$0xff] %v1248
    %1313 = vst [vmem:[%s4 + $0xc8] sm:$0xff] %v1249
    %1314 = vst [vmem:[%s4 + $0xd0] sm:$0xff] %v1250
    %1315 = vst [vmem:[%s4 + $0xd8] sm:$0xff] %v1251
    %1316 = vst [vmem:[%s4 + $0xe0] sm:$0xff] %v1252
    %1317 = vst [vmem:[%s4 + $0xe8] sm:$0xff] %v1253
    %1318 = vst [vmem:[%s4 + $0xf0] sm:$0xff] %v1254
    %1319 = vst [vmem:[%s4 + $0xf8] sm:$0xff] %v1255
    %1320 = vst [vmem:[%s4 + $0x100] sm:$0xff] %v1256
    %1321 = vst [vmem:[%s4 + $0x108] sm:$0xff] %v1257
    %1322 = vst [vmem:[%s4 + $0x110] sm:$0xff] %v1258
    %1323 = vst [vmem:[%s4 + $0x118] sm:$0xff] %v1259
    %1324 = vst [vmem:[%s4 + $0x120] sm:$0xff] %v1260
    %1325 = vst [vmem:[%s4 + $0x128] sm:$0xff] %v1261
    %1326 = vst [vmem:[%s4 + $0x130] sm:$0xff] %v1262
    %1327 = vst [vmem:[%s4 + $0x138] sm:$0xff] %v1263
    %1328 = vst [vmem:[%s4 + $0x140] sm:$0xff] %v1264
    %1329 = vst [vmem:[%s4 + $0x148] sm:$0xff] %v1265
    %1330 = vst [vmem:[%s4 + $0x150] sm:$0xff] %v1266
    %1331 = vst [vmem:[%s4 + $0x158] sm:$0xff] %v1267
    %1332 = vst [vmem:[%s4 + $0x160] sm:$0xff] %v1268
    %1333 = vst [vmem:[%s4 + $0x168] sm:$0xff] %v1269
    %1334 = vst [vmem:[%s4 + $0x170] sm:$0xff] %v1270
    %1335 = vst [vmem:[%s4 + $0x178] sm:$0xff] %v1271
    %1336 = vst [vmem:[%s4 + $0x180] sm:$0xff] %v1272
    %1337 = vst [vmem:[%s4 + $0x188] sm:$0xff] %v1273
    %1338 = vst [vmem:[%s4 + $0x190] sm:$0xff] %v1274
    %1339 = vst [vmem:[%s4 + $0x198] sm:$0xff] %v1275
    %1340 = vst [vmem:[%s4 + $0x1a0] sm:$0xff] %v1276
    %1341 = vst [vmem:[%s4 + $0x1a8] sm:$0xff] %v1277
    %1342 = vst [vmem:[%s4 + $0x1b0] sm:$0xff] %v1278
    %1343 = vst [vmem:[%s4 + $0x1b8] sm:$0xff] %v1279
    %1344 = vst [vmem:[%s4 + $0x1c0] sm:$0xff] %v1280
    %1345 = vst [vmem:[%s4 + $0x1c8] sm:$0xff] %v1281
    %1346 = vst [vmem:[%s4 + $0x1d0] sm:$0xff] %v1282
    %1347 = vst [vmem:[%s4 + $0x1d8] sm:$0xff] %v1283
    %1348 = vst [vmem:[%s4 + $0x1e0] sm:$0xff] %v1284
    %1349 = vst [vmem:[%s4 + $0x1e8] sm:$0xff] %v1285
    %1350 = vst [vmem:[%s4 + $0x1f0] sm:$0xff] %v1286
    %1351 = vst [vmem:[%s4 + $0x1f8] sm:$0xff] %v1287
  $region25: #{discriminator_forward.4} parent=0 // pred_fallthru
    _
  // Predicated region
  $region26: #{discriminator_forward.4} parent=0 // pred_check
    _
  $region27: #{discriminator_forward.4} parent=0 // pred_check_branch
    %1353 = sbr.rel (0) target = $region29
  $region28: #{discriminator_forward.4} parent=0 // pred_region
    _
  $region29: #{discriminator_forward.4} parent=0 // pred_fallthru
    _
  // Predicated region
  $region30: #{discriminator_forward.4} parent=0 // pred_check
    _
  $region31: #{discriminator_forward.4} parent=0 // pred_check_branch
    %1355 = sbr.rel (0) target = $region33
  $region32: #{discriminator_forward.4} parent=0 // pred_region
    _
  $region33: #{discriminator_forward.4} parent=0 // pred_fallthru
    _

// kernel: discriminator_forward.6
$region0: #{discriminator_forward.6}
  #allocation0 [shape = 'u32[]', space=smem, size = 0x4, offset = 0x4, fixed_abs, tag = 'smem constant byte address 0x4 - core index']
  #allocation1 [shape = 'u32[144,128]{1,0:T(1,128)}', space=vmem, size = 0x12000, scoped, tag = 'internal scratch']
  %s0 = inlined_call_operand.vmem [shape: bf16[32,2048], index: 0, kind: input, shape index: {}]
  %s1 = inlined_call_operand.vmem [shape: bf16[2048,256], index: 1, kind: input, shape index: {}]
  %s2 = inlined_call_operand.vmem [shape: f32[1,256], index: 2, kind: input, shape index: {}]
  %s3 = inlined_call_operand.vmem [shape: f32[1,256], index: 3, kind: input, shape index: {}]
  %s4 = inlined_call_operand.vmem [shape: f32[32,256], index: 4, kind: output, shape index: {}]
  %s5 = sld [smem:[#allocation0]]
  $region80: #{discriminator_forward.6} parent=0
    _
  %s7 = ssub.s32 1, %s5
  %s8 = scalar_select 0, %s7, %s5
  $region1: #{discriminator_forward.6} parent=0
    #allocation2 [shape = 'u8[65536]{0}', space=vmem, size = 0x10000, scoped, tag = 'input window, operand 0']
    loop: start=0, step=1, limit=6
    $region2: #{discriminator_forward.6} parent=1 // loop_pre_header
      _
    $region3: #{discriminator_forward.6} parent=1 // loop_header
      %s10 = sphi 0, %s14
      %p11 = scmp.ge.s32.totalorder %s10, 6
      %s17 = sphi 0, %s36
      %s18 = sphi 0, %s32
      %s19 = sphi 0, %s28
      %s20 = sphi 0, %s17
      %s21 = sphi 0, %s18
      %s22 = sphi 0, %s19
      %s23 = sphi 0, %s20
      %s24 = sphi 0, %s21
      %s25 = sphi 0, %s22
      %s41 = sphi 0, %s43
      %s44 = sphi 0, %s41
      %s45 = sphi 0, %s44
      %s61 = sphi 0, %s45
      %s69 = sphi 0, %s71
      %s72 = sphi 0, %s69
      %s73 = sphi 0, %s72
      %s89 = sphi 0, %s73
      %s95 = sphi 0, %s97
      %s98 = sphi 0, %s95
      %s99 = sphi 0, %s98
      %s115 = sphi 0, %s99
      %s121 = sphi 0, %s123
      %s124 = sphi 0, %s121
      %s125 = sphi 0, %s124
      %s141 = sphi 0, %s125
      %s149 = sphi 0, %s151
      %s152 = sphi 0, %s149
      %s153 = sphi 0, %s152
      %s169 = sphi 0, %s153
    $region4: #{discriminator_forward.6} parent=1 // loop_header_branch
      %13 = sbr.rel (%p11) target = $region8
    $region5: #{discriminator_forward.6} parent=1 // loop_body
      %s15 = ssub.s32 %s10, 1
      %s16 = ssub.s32 %s10, 2
      %s26 = sadd.s32 1, %s19
      %p27 = scmp.ge.s32.totalorder %s26, 4
      %s28 = scalar_select %p27, 0, %s26
      %s29 = sadd.s32 1, %s18
      %s30 = scalar_select %p27, %s29, %s18
      %p31 = scmp.ge.s32.totalorder %s30, 1
      %s32 = scalar_select %p31, 0, %s30
      %s33 = sadd.s32 1, %s17
      %s34 = scalar_select %p31, %s33, %s17
      %p35 = scmp.ge.s32.totalorder %s34, 1
      %s36 = scalar_select %p35, 0, %s34
      %s37 = ssub.s32 %s17, %s36
      %s38 = ssub.s32 %s19, %s28
      %s39 = sor.u32 %s37, %s38
      %p40 = scmp.eq.s32.totalorder %s39, 0
      %s42 = sadd.s32 %s41, 1
      %s43 = scalar_select %p40, %s41, %s42
      %p46 = pneg %p40
      %p47 = scmp.eq.s32.totalorder %s10, 3
      %p48 = por %p46, %p47
      %p49 = scmp.ne.s32.totalorder %s41, %s44
      %p50 = scmp.eq.s32.totalorder %s10, 0
      %p51 = por %p49, %p50
      %p52 = scmp.ne.s32.totalorder %s41, %s44
      %p53 = scmp.eq.s32.totalorder %s15, 3
      %p54 = por %p52, %p53
      %p55 = scmp.ne.s32.totalorder %s44, %s45
      %p56 = scmp.eq.s32.totalorder %s15, 0
      %p57 = por %p55, %p56
      %p58 = scmp.ne.s32.totalorder %s44, %s45
      %p59 = scmp.eq.s32.totalorder %s16, 3
      %p60 = por %p58, %p59
      %p62 = scmp.ne.s32.totalorder %s45, %s61
      %p63 = scmp.eq.s32.totalorder %s16, 0
      %p64 = por %p62, %p63
      %s65 = ssub.s32 %s19, %s28
      %s66 = ssub.s32 %s18, %s32
      %s67 = sor.u32 %s65, %s66
      %p68 = scmp.eq.s32.totalorder %s67, 0
      %s70 = sadd.s32 %s69, 1
      %s71 = scalar_select %p68, %s69, %s70
      %p74 = pneg %p68
      %p75 = scmp.eq.s32.totalorder %s10, 3
      %p76 = por %p74, %p75
      %p77 = scmp.ne.s32.totalorder %s69, %s72
      %p78 = scmp.eq.s32.totalorder %s10, 0
      %p79 = por %p77, %p78
      %p80 = scmp.ne.s32.totalorder %s69, %s72
      %p81 = scmp.eq.s32.totalorder %s15, 3
      %p82 = por %p80, %p81
      %p83 = scmp.ne.s32.totalorder %s72, %s73
      %p84 = scmp.eq.s32.totalorder %s15, 0
      %p85 = por %p83, %p84
      %p86 = scmp.ne.s32.totalorder %s72, %s73
      %p87 = scmp.eq.s32.totalorder %s16, 3
      %p88 = por %p86, %p87
      %p90 = scmp.ne.s32.totalorder %s73, %s89
      %p91 = scmp.eq.s32.totalorder %s16, 0
      %p92 = por %p90, %p91
      %s93 = ssub.s32 %s18, %s32
      %p94 = scmp.eq.s32.totalorder %s93, 0
      %s96 = sadd.s32 %s95, 1
      %s97 = scalar_select %p94, %s95, %s96
      %p100 = pneg %p94
      %p101 = scmp.eq.s32.totalorder %s10, 3
      %p102 = por %p100, %p101
      %p103 = scmp.ne.s32.totalorder %s95, %s98
      %p104 = scmp.eq.s32.totalorder %s10, 0
      %p105 = por %p103, %p104
      %p106 = scmp.ne.s32.totalorder %s95, %s98
      %p107 = scmp.eq.s32.totalorder %s15, 3
      %p108 = por %p106, %p107
      %p109 = scmp.ne.s32.totalorder %s98, %s99
      %p110 = scmp.eq.s32.totalorder %s15, 0
      %p111 = por %p109, %p110
      %p112 = scmp.ne.s32.totalorder %s98, %s99
      %p113 = scmp.eq.s32.totalorder %s16, 3
      %p114 = por %p112, %p113
      %p116 = scmp.ne.s32.totalorder %s99, %s115
      %p117 = scmp.eq.s32.totalorder %s16, 0
      %p118 = por %p116, %p117
      %s119 = ssub.s32 %s18, %s32
      %p120 = scmp.eq.s32.totalorder %s119, 0
      %s122 = sadd.s32 %s121, 1
      %s123 = scalar_select %p120, %s121, %s122
      %p126 = pneg %p120
      %p127 = scmp.eq.s32.totalorder %s10, 3
      %p128 = por %p126, %p127
      %p129 = scmp.ne.s32.totalorder %s121, %s124
      %p130 = scmp.eq.s32.totalorder %s10, 0
      %p131 = por %p129, %p130
      %p132 = scmp.ne.s32.totalorder %s121, %s124
      %p133 = scmp.eq.s32.totalorder %s15, 3
      %p134 = por %p132, %p133
      %p135 = scmp.ne.s32.totalorder %s124, %s125
      %p136 = scmp.eq.s32.totalorder %s15, 0
      %p137 = por %p135, %p136
      %p138 = scmp.ne.s32.totalorder %s124, %s125
      %p139 = scmp.eq.s32.totalorder %s16, 3
      %p140 = por %p138, %p139
      %p142 = scmp.ne.s32.totalorder %s125, %s141
      %p143 = scmp.eq.s32.totalorder %s16, 0
      %p144 = por %p142, %p143
      %s145 = ssub.s32 %s17, %s36
      %s146 = ssub.s32 %s18, %s32
      %s147 = sor.u32 %s145, %s146
      %p148 = scmp.eq.s32.totalorder %s147, 0
      %s150 = sadd.s32 %s149, 1
      %s151 = scalar_select %p148, %s149, %s150
      %p154 = pneg %p148
      %p155 = scmp.eq.s32.totalorder %s10, 3
      %p156 = por %p154, %p155
      %p157 = scmp.ne.s32.totalorder %s149, %s152
      %p158 = scmp.eq.s32.totalorder %s10, 0
      %p159 = por %p157, %p158
      %p160 = scmp.ne.s32.totalorder %s149, %s152
      %p161 = scmp.eq.s32.totalorder %s15, 3
      %p162 = por %p160, %p161
      %p163 = scmp.ne.s32.totalorder %s152, %s153
      %p164 = scmp.eq.s32.totalorder %s15, 0
      %p165 = por %p163, %p164
      %p166 = scmp.ne.s32.totalorder %s152, %s153
      %p167 = scmp.eq.s32.totalorder %s16, 3
      %p168 = por %p166, %p167
      %p170 = scmp.ne.s32.totalorder %s153, %s169
      %p171 = scmp.eq.s32.totalorder %s16, 0
      %p172 = por %p170, %p171
      %p173 = scmp.le.s32.totalorder 1, %s10
      %p174 = scmp.lt.s32.totalorder %s10, 5
      %p175 = pnand %p173, %p174
      %p176 = pneg %p175
      // Predicated region
      $region9: #{discriminator_forward.6} parent=5 // pred_check
        _
      $region10: #{discriminator_forward.6} parent=5 // pred_check_branch
        %178 = sbr.rel (%p175) target = $region12
      $region11: #{discriminator_forward.6} parent=5 // pred_region
        %s179 = ssub.s32 %s10, 1
        // Predicated region
        $region13: #{discriminator_forward.6} parent=11 // pred_check
          %p180 = pneg %p111
        $region14: #{discriminator_forward.6} parent=11 // pred_check_branch
          %182 = sbr.rel (%p180) target = $region16
        $region15: #{discriminator_forward.6} parent=11 // pred_region
          %s183 = smul.u32 2, %s21
          %p184 = scmp.lt.s32.totalorder %s183, 1
          %s185 = scalar_select %p184, %s183, 1
          %s186 = scalar_lea.vmem %s2, %s185
          %s187 = smul.u32 2, %s21
        $region16: #{discriminator_forward.6} parent=11 // pred_fallthru
          _
        // Predicated region
        $region17: #{discriminator_forward.6} parent=11 // pred_check
          %p188 = pneg %p137
        $region18: #{discriminator_forward.6} parent=11 // pred_check_branch
          %190 = sbr.rel (%p188) target = $region20
        $region19: #{discriminator_forward.6} parent=11 // pred_region
          %s191 = smul.u32 2, %s21
          %p192 = scmp.lt.s32.totalorder %s191, 1
          %s193 = scalar_select %p192, %s191, 1
          %s194 = scalar_lea.vmem %s3, %s193
          %s195 = smul.u32 2, %s21
        $region20: #{discriminator_forward.6} parent=11 // pred_fallthru
          _
      $region12: #{discriminator_forward.6} parent=5 // pred_fallthru
        _
      %p196 = scmp.lt.s32.totalorder %s10, 4
      // Predicated region
      $region21: #{discriminator_forward.6} parent=5 // pred_check
        %p197 = pneg %p196
      $region22: #{discriminator_forward.6} parent=5 // pred_check_branch
        %199 = sbr.rel (%p197) target = $region24
      $region23: #{discriminator_forward.6} parent=5 // pred_region
        // Predicated region
        $region25: #{discriminator_forward.6} parent=23 // pred_check
          %p200 = pneg %p51
        $region26: #{discriminator_forward.6} parent=23 // pred_check_branch
          %202 = sbr.rel (%p200) target = $region28
        $region27: #{discriminator_forward.6} parent=23 // pred_region
          %s203 = sand.u32 %s41, 1
          %s204 = sand.u32 %s41, 1
          %s205 = smul.addr %s204, 64
          %s206 = scalar_lea.vmem [#allocation2], %s205
          %s207 = smul.u32 4, %s17
          %s208 = smul.u32 4, %s19
          %s209 = smul.addr %s207, 16
          %s210 = sadd.s32 %s208, %s209
          %s211 = smul.addr %s210, 4
          %s212 = scalar_lea.vmem %s0, %s211
          // Predicated region
          $region29: #{discriminator_forward.6} parent=27 // pred_check
            _
          $region30: #{discriminator_forward.6} parent=27 // pred_check_branch
            %214 = sbr.rel (0) target = $region32
          $region31: #{discriminator_forward.6} parent=27 // pred_region
            // Predicated region
            $region33: #{discriminator_forward.6} parent=31 // pred_check
              _
            $region34: #{discriminator_forward.6} parent=31 // pred_check_branch
              %216 = sbr.rel (0) target = $region36
            $region35: #{discriminator_forward.6} parent=31 // pred_region
              loop: start=0, step=1, limit=1
              $region37: #{discriminator_forward.6} parent=35 // loop_pre_header
                _
              $region38: #{discriminator_forward.6} parent=35 // loop_header
                %s218 = sphi 0, %s222
                %p219 = scmp.ge.s32.totalorder %s218, 1
                %s223 = sphi %s212, %s212
                %s224 = sphi %s206, %s206
              $region39: #{discriminator_forward.6} parent=35 // loop_header_branch
                %221 = sbr.rel (%p219) target = $region43
              $region40: #{discriminator_forward.6} parent=35 // loop_body
                %v225 = vld [vmem:[%s223] sm:$0xff]
                %226 = vst [vmem:[%s224] sm:$0xff] %v225
                %v227 = vld [vmem:[%s223 + $0x8] sm:$0xff]
                %228 = vst [vmem:[%s224 + $0x8] sm:$0xff] %v227
                %v229 = vld [vmem:[%s223 + $0x40] sm:$0xff]
                %230 = vst [vmem:[%s224 + $0x10] sm:$0xff] %v229
                %v231 = vld [vmem:[%s223 + $0x48] sm:$0xff]
                %232 = vst [vmem:[%s224 + $0x18] sm:$0xff] %v231
                %v233 = vld [vmem:[%s223 + $0x80] sm:$0xff]
                %234 = vst [vmem:[%s224 + $0x20] sm:$0xff] %v233
                %v235 = vld [vmem:[%s223 + $0x88] sm:$0xff]
                %236 = vst [vmem:[%s224 + $0x28] sm:$0xff] %v235
                %v237 = vld [vmem:[%s223 + $0xc0] sm:$0xff]
                %238 = vst [vmem:[%s224 + $0x30] sm:$0xff] %v237
                %v239 = vld [vmem:[%s223 + $0xc8] sm:$0xff]
                %240 = vst [vmem:[%s224 + $0x38] sm:$0xff] %v239
              $region41: #{discriminator_forward.6} parent=35 // loop_footer
                %s222 = sadd.s32 1, %s218
              $region42: #{discriminator_forward.6} parent=35 // loop_footer_branch
                %217 = sbr.rel target = $region38
              $region43: #{discriminator_forward.6} parent=35 // loop_exit
                _
            $region36: #{discriminator_forward.6} parent=31 // pred_fallthru
              _
            // Predicated region
            $region44: #{discriminator_forward.6} parent=31 // pred_check
              _
            $region45: #{discriminator_forward.6} parent=31 // pred_check_branch
              %242 = sbr.rel target = $region47
            $region46: #{discriminator_forward.6} parent=31 // pred_region
              _
            $region47: #{discriminator_forward.6} parent=31 // pred_fallthru
              _
          $region32: #{discriminator_forward.6} parent=27 // pred_fallthru
            _
          %243 = vnop
        $region28: #{discriminator_forward.6} parent=23 // pred_fallthru
          _
        // Predicated region
        $region48: #{discriminator_forward.6} parent=23 // pred_check
          %p244 = pneg %p79
        $region49: #{discriminator_forward.6} parent=23 // pred_check_branch
          %246 = sbr.rel (%p244) target = $region51
        $region50: #{discriminator_forward.6} parent=23 // pred_region
          %s247 = smul.u32 64, %s19
          %s248 = smul.u32 2, %s18
          %p249 = scmp.lt.s32.totalorder %s247, 255
          %s250 = scalar_select %p249, %s247, 255
          %p251 = scmp.lt.s32.totalorder %s248, 1
          %s252 = scalar_select %p251, %s248, 1
          %s253 = smul.addr %s250, 2
          %s254 = sadd.s32 %s252, %s253
          %s255 = smul.addr %s254, 4
          %s256 = scalar_lea.vmem %s1, %s255
          %s257 = smul.u32 64, %s19
          %s258 = smul.u32 2, %s18
        $region51: #{discriminator_forward.6} parent=23 // pred_fallthru
          _
      $region24: #{discriminator_forward.6} parent=5 // pred_fallthru
        _
      %p259 = scmp.le.s32.totalorder 1, %s10
      %p260 = scmp.lt.s32.totalorder %s10, 5
      %p261 = pnand %p259, %p260
      %p262 = pneg %p261
      // Predicated region
      $region52: #{discriminator_forward.6} parent=5 // pred_check
        _
      $region53: #{discriminator_forward.6} parent=5 // pred_check_branch
        %264 = sbr.rel (%p261) target = $region55
      $region54: #{discriminator_forward.6} parent=5 // pred_region
        %s265 = ssub.s32 %s10, 1
        %s266 = sand.u32 %s44, 1
        %s267 = sand.u32 %s44, 1
        %s268 = smul.addr %s267, 64
        %s269 = scalar_lea.vmem [#allocation2], %s268
        // Predicated region
        $region56: #{discriminator_forward.6} parent=54 // pred_check
          %p270 = pneg %p57
        $region57: #{discriminator_forward.6} parent=54 // pred_check_branch
          %272 = sbr.rel (%p270) target = $region59
        $region58: #{discriminator_forward.6} parent=54 // pred_region
          _
        $region59: #{discriminator_forward.6} parent=54 // pred_fallthru
          _
        %s273 = sand.u32 %s44, 1
        %s274 = sand.u32 %s44, 1
        %s275 = smul.addr %s274, 64
        %s276 = scalar_lea.vmem [#allocation2], %s275
        %p277 = pneg %p57
        %p278 = pneg %p54
        %s279 = smul.u32 64, %s22
        %s280 = smul.u32 2, %s21
        %p281 = scmp.lt.s32.totalorder %s279, 255
        %s282 = scalar_select %p281, %s279, 255
        %p283 = scmp.lt.s32.totalorder %s280, 1
        %s284 = scalar_select %p283, %s280, 1
        %s285 = smul.addr %s282, 2
        %s286 = sadd.s32 %s284, %s285
        %s287 = smul.addr %s286, 4
        %s288 = scalar_lea.vmem %s1, %s287
        %p289 = pneg %p85
        %p290 = pneg %p82
        %s291 = smul.u32 2, %s21
        %p292 = scmp.lt.s32.totalorder %s291, 1
        %s293 = scalar_select %p292, %s291, 1
        %s294 = scalar_lea.vmem %s2, %s293
        %p295 = pneg %p111
        %p296 = pneg %p108
        %s297 = smul.u32 2, %s21
        %p298 = scmp.lt.s32.totalorder %s297, 1
        %s299 = scalar_select %p298, %s297, 1
        %s300 = scalar_lea.vmem %s3, %s299
        %p301 = pneg %p137
        %p302 = pneg %p134
        %p303 = pneg %p165
        %p304 = pneg %p162
        %s305 = smul.u32 4, %s20
        %s306 = smul.u32 2, %s21
        %p307 = scmp.lt.s32.totalorder %s305, 3
        %s308 = scalar_select %p307, %s305, 3
        %p309 = scmp.lt.s32.totalorder %s306, 1
        %s310 = scalar_select %p309, %s306, 1
        %s311 = smul.addr %s308, 2
        %s312 = sadd.s32 %s310, %s311
        %s313 = smul.addr %s312, 8
        %s314 = scalar_lea.vmem %s4, %s313
        %s315 = smul.u32 4, %s20
        %s316 = smul.u32 4, %s22
        %s317 = smul.u32 64, %s22
        %s318 = smul.u32 2, %s21
        %p319 = scmp.lt.s32.totalorder %s317, 255
        %s320 = scalar_select %p319, %s317, 255
        %p321 = scmp.lt.s32.totalorder %s318, 1
        %s322 = scalar_select %p321, %s318, 1
        %s323 = smul.addr %s320, 2
        %s324 = sadd.s32 %s322, %s323
        %s325 = smul.addr %s324, 4
        %s326 = scalar_lea.vmem %s1, %s325
        %s327 = smul.u32 64, %s22
        %s328 = smul.u32 2, %s21
        %s329 = smul.u32 2, %s21
        %p330 = scmp.lt.s32.totalorder %s329, 1
        %s331 = scalar_select %p330, %s329, 1
        %s332 = scalar_lea.vmem %s2, %s331
        %s333 = smul.u32 2, %s21
        %s334 = smul.u32 2, %s21
        %p335 = scmp.lt.s32.totalorder %s334, 1
        %s336 = scalar_select %p335, %s334, 1
        %s337 = scalar_lea.vmem %s3, %s336
        %s338 = smul.u32 2, %s21
        %s339 = smul.u32 4, %s20
        %s340 = smul.u32 2, %s21
        %p341 = scmp.lt.s32.totalorder %s339, 3
        %s342 = scalar_select %p341, %s339, 3
        %p343 = scmp.lt.s32.totalorder %s340, 1
        %s344 = scalar_select %p343, %s340, 1
        %s345 = smul.addr %s342, 2
        %s346 = sadd.s32 %s344, %s345
        %s347 = smul.addr %s346, 8
        %s348 = scalar_lea.vmem %s4, %s347
        %s349 = smul.u32 4, %s20
        %s350 = smul.u32 2, %s21
        %p351 = scmp.eq.s32.totalorder %s22, 0
        // Predicated region
        $region60: #{discriminator_forward.6} parent=54 // pred_check
          %p352 = pneg %p351
        $region61: #{discriminator_forward.6} parent=54 // pred_check_branch
          %354 = sbr.rel (%p352) target = $region63
        $region62: #{discriminator_forward.6} parent=54 // pred_region
          %355 = vst [vmem:[%s348] sm:$0xff] 0.0
          %356 = vst [vmem:[%s348 + $0x8] sm:$0xff] 0.0
          %357 = vst [vmem:[%s348 + $0x10] sm:$0xff] 0.0
          %358 = vst [vmem:[%s348 + $0x18] sm:$0xff] 0.0
          %359 = vst [vmem:[%s348 + $0x20] sm:$0xff] 0.0
          %360 = vst [vmem:[%s348 + $0x28] sm:$0xff] 0.0
          %361 = vst [vmem:[%s348 + $0x30] sm:$0xff] 0.0
          %362 = vst [vmem:[%s348 + $0x38] sm:$0xff] 0.0
        $region63: #{discriminator_forward.6} parent=54 // pred_fallthru
          _
        %v363 = vld [vmem:[%s348] sm:$0xff]
        %v364 = vld [vmem:[%s348 + $0x8] sm:$0xff]
        %v365 = vld [vmem:[%s348 + $0x10] sm:$0xff]
        %v366 = vld [vmem:[%s348 + $0x18] sm:$0xff]
        %v367 = vld [vmem:[%s348 + $0x20] sm:$0xff]
        %v368 = vld [vmem:[%s348 + $0x28] sm:$0xff]
        %v369 = vld [vmem:[%s348 + $0x30] sm:$0xff]
        %v370 = vld [vmem:[%s348 + $0x38] sm:$0xff]
        %v371 = vld [vmem:[%s269] sm:$0xff]
        %v372 = vld [vmem:[%s269 + $0x8] sm:$0xff]
        %v373 = vld [vmem:[%s269 + $0x10] sm:$0xff]
        %v374 = vld [vmem:[%s269 + $0x18] sm:$0xff]
        %v375 = vld [vmem:[%s269 + $0x20] sm:$0xff]
        %v376 = vld [vmem:[%s269 + $0x28] sm:$0xff]
        %v377 = vld [vmem:[%s269 + $0x30] sm:$0xff]
        %v378 = vld [vmem:[%s269 + $0x38] sm:$0xff]
        %v379 = vld [vmem:[%s326] sm:$0xff]
        %v380 = vld [vmem:[%s326 + $0x8] sm:$0xff]
        %v381 = vld [vmem:[%s326 + $0x10] sm:$0xff]
        %v382 = vld [vmem:[%s326 + $0x18] sm:$0xff]
        %v383 = vld [vmem:[%s326 + $0x20] sm:$0xff]
        %v384 = vld [vmem:[%s326 + $0x28] sm:$0xff]
        %v385 = vld [vmem:[%s326 + $0x30] sm:$0xff]
        %v386 = vld [vmem:[%s326 + $0x38] sm:$0xff]
        %v387 = vld [vmem:[%s326 + $0x40] sm:$0xff]
        %v388 = vld [vmem:[%s326 + $0x48] sm:$0xff]
        %v389 = vld [vmem:[%s326 + $0x50] sm:$0xff]
        %v390 = vld [vmem:[%s326 + $0x58] sm:$0xff]
        %v391 = vld [vmem:[%s326 + $0x60] sm:$0xff]
        %v392 = vld [vmem:[%s326 + $0x68] sm:$0xff]
        %v393 = vld [vmem:[%s326 + $0x70] sm:$0xff]
        %v394 = vld [vmem:[%s326 + $0x78] sm:$0xff]
        %v395 = vld [vmem:[%s326 + $0x80] sm:$0xff]
        %v396 = vld [vmem:[%s326 + $0x88] sm:$0xff]
        %v397 = vld [vmem:[%s326 + $0x90] sm:$0xff]
        %v398 = vld [vmem:[%s326 + $0x98] sm:$0xff]
        %v399 = vld [vmem:[%s326 + $0xa0] sm:$0xff]
        %v400 = vld [vmem:[%s326 + $0xa8] sm:$0xff]
        %v401 = vld [vmem:[%s326 + $0xb0] sm:$0xff]
        %v402 = vld [vmem:[%s326 + $0xb8] sm:$0xff]
        %v403 = vld [vmem:[%s326 + $0xc0] sm:$0xff]
        %v404 = vld [vmem:[%s326 + $0xc8] sm:$0xff]
        %v405 = vld [vmem:[%s326 + $0xd0] sm:$0xff]
        %v406 = vld [vmem:[%s326 + $0xd8] sm:$0xff]
        %v407 = vld [vmem:[%s326 + $0xe0] sm:$0xff]
        %v408 = vld [vmem:[%s326 + $0xe8] sm:$0xff]
        %v409 = vld [vmem:[%s326 + $0xf0] sm:$0xff]
        %v410 = vld [vmem:[%s326 + $0xf8] sm:$0xff]
        %v411 = vld [vmem:[%s326 + $0x100] sm:$0xff]
        %v412 = vld [vmem:[%s326 + $0x108] sm:$0xff]
        %v413 = vld [vmem:[%s326 + $0x110] sm:$0xff]
        %v414 = vld [vmem:[%s326 + $0x118] sm:$0xff]
        %v415 = vld [vmem:[%s326 + $0x120] sm:$0xff]
        %v416 = vld [vmem:[%s326 + $0x128] sm:$0xff]
        %v417 = vld [vmem:[%s326 + $0x130] sm:$0xff]
        %v418 = vld [vmem:[%s326 + $0x138] sm:$0xff]
        %v419 = vld [vmem:[%s326 + $0x140] sm:$0xff]
        %v420 = vld [vmem:[%s326 + $0x148] sm:$0xff]
        %v421 = vld [vmem:[%s326 + $0x150] sm:$0xff]
        %v422 = vld [vmem:[%s326 + $0x158] sm:$0xff]
        %v423 = vld [vmem:[%s326 + $0x160] sm:$0xff]
        %v424 = vld [vmem:[%s326 + $0x168] sm:$0xff]
        %v425 = vld [vmem:[%s326 + $0x170] sm:$0xff]
        %v426 = vld [vmem:[%s326 + $0x178] sm:$0xff]
        %v427 = vld [vmem:[%s326 + $0x180] sm:$0xff]
        %v428 = vld [vmem:[%s326 + $0x188] sm:$0xff]
        %v429 = vld [vmem:[%s326 + $0x190] sm:$0xff]
        %v430 = vld [vmem:[%s326 + $0x198] sm:$0xff]
        %v431 = vld [vmem:[%s326 + $0x1a0] sm:$0xff]
        %v432 = vld [vmem:[%s326 + $0x1a8] sm:$0xff]
        %v433 = vld [vmem:[%s326 + $0x1b0] sm:$0xff]
        %v434 = vld [vmem:[%s326 + $0x1b8] sm:$0xff]
        %v435 = vld [vmem:[%s326 + $0x1c0] sm:$0xff]
        %v436 = vld [vmem:[%s326 + $0x1c8] sm:$0xff]
        %v437 = vld [vmem:[%s326 + $0x1d0] sm:$0xff]
        %v438 = vld [vmem:[%s326 + $0x1d8] sm:$0xff]
        %v439 = vld [vmem:[%s326 + $0x1e0] sm:$0xff]
        %v440 = vld [vmem:[%s326 + $0x1e8] sm:$0xff]
        %v441 = vld [vmem:[%s326 + $0x1f0] sm:$0xff]
        %v442 = vld [vmem:[%s326 + $0x1f8] sm:$0xff]
        %v451 = vunpack.c.l.b16 %v371
        %v452 = vunpack.c.h.b16 %v371
        %v453 = vunpack.c.l.b16 %v372
        %v454 = vunpack.c.h.b16 %v372
        %v455 = vunpack.c.l.b16 %v373
        %v456 = vunpack.c.h.b16 %v373
        %v457 = vunpack.c.l.b16 %v374
        %v458 = vunpack.c.h.b16 %v374
        %v459 = vunpack.c.l.b16 %v375
        %v460 = vunpack.c.h.b16 %v375
        %v461 = vunpack.c.l.b16 %v376
        %v462 = vunpack.c.h.b16 %v376
        %v463 = vunpack.c.l.b16 %v377
        %v464 = vunpack.c.h.b16 %v377
        %v465 = vunpack.c.l.b16 %v378
        %v466 = vunpack.c.h.b16 %v378
        %v467 = vpack.c.b16 %v455, %v451
        %v468 = vpack.c.b16 %v456, %v452
        %v469 = vpack.c.b16 %v457, %v453
        %v470 = vpack.c.b16 %v458, %v454
        %v471 = vpack.c.b16 %v463, %v459
        %v472 = vpack.c.b16 %v464, %v460
        %v473 = vpack.c.b16 %v465, %v461
        %v474 = vpack.c.b16 %v466, %v462
        %v547 = vunpack.c.l.b16 %v379
        %v548 = vunpack.c.h.b16 %v379
        %v549 = vunpack.c.l.b16 %v380
        %v550 = vunpack.c.h.b16 %v380
        %v551 = vunpack.c.l.b16 %v381
        %v552 = vunpack.c.h.b16 %v381
        %v553 = vunpack.c.l.b16 %v382
        %v554 = vunpack.c.h.b16 %v382
        %v555 = vunpack.c.l.b16 %v383
        %v556 = vunpack.c.h.b16 %v383
        %v557 = vunpack.c.l.b16 %v384
        %v558 = vunpack.c.h.b16 %v384
        %v559 = vunpack.c.l.b16 %v385
        %v560 = vunpack.c.h.b16 %v385
        %v561 = vunpack.c.l.b16 %v386
        %v562 = vunpack.c.h.b16 %v386
        %v563 = vunpack.c.l.b16 %v387
        %v564 = vunpack.c.h.b16 %v387
        %v565 = vunpack.c.l.b16 %v388
        %v566 = vunpack.c.h.b16 %v388
        %v567 = vunpack.c.l.b16 %v389
        %v568 = vunpack.c.h.b16 %v389
        %v569 = vunpack.c.l.b16 %v390
        %v570 = vunpack.c.h.b16 %v390
        %v571 = vunpack.c.l.b16 %v391
        %v572 = vunpack.c.h.b16 %v391
        %v573 = vunpack.c.l.b16 %v392
        %v574 = vunpack.c.h.b16 %v392
        %v575 = vunpack.c.l.b16 %v393
        %v576 = vunpack.c.h.b16 %v393
        %v577 = vunpack.c.l.b16 %v394
        %v578 = vunpack.c.h.b16 %v394
        %v579 = vunpack.c.l.b16 %v395
        %v580 = vunpack.c.h.b16 %v395
        %v581 = vunpack.c.l.b16 %v396
        %v582 = vunpack.c.h.b16 %v396
        %v583 = vunpack.c.l.b16 %v397
        %v584 = vunpack.c.h.b16 %v397
        %v585 = vunpack.c.l.b16 %v398
        %v586 = vunpack.c.h.b16 %v398
        %v587 = vunpack.c.l.b16 %v399
        %v588 = vunpack.c.h.b16 %v399
        %v589 = vunpack.c.l.b16 %v400
        %v590 = vunpack.c.h.b16 %v400
        %v591 = vunpack.c.l.b16 %v401
        %v592 = vunpack.c.h.b16 %v401
        %v593 = vunpack.c.l.b16 %v402
        %v594 = vunpack.c.h.b16 %v402
        %v595 = vunpack.c.l.b16 %v403
        %v596 = vunpack.c.h.b16 %v403
        %v597 = vunpack.c.l.b16 %v404
        %v598 = vunpack.c.h.b16 %v404
        %v599 = vunpack.c.l.b16 %v405
        %v600 = vunpack.c.h.b16 %v405
        %v601 = vunpack.c.l.b16 %v406
        %v602 = vunpack.c.h.b16 %v406
        %v603 = vunpack.c.l.b16 %v407
        %v604 = vunpack.c.h.b16 %v407
        %v605 = vunpack.c.l.b16 %v408
        %v606 = vunpack.c.h.b16 %v408
        %v607 = vunpack.c.l.b16 %v409
        %v608 = vunpack.c.h.b16 %v409
        %v609 = vunpack.c.l.b16 %v410
        %v610 = vunpack.c.h.b16 %v410
        %v611 = vunpack.c.l.b16 %v411
        %v612 = vunpack.c.h.b16 %v411
        %v613 = vunpack.c.l.b16 %v412
        %v614 = vunpack.c.h.b16 %v412
        %v615 = vunpack.c.l.b16 %v413
        %v616 = vunpack.c.h.b16 %v413
        %v617 = vunpack.c.l.b16 %v414
        %v618 = vunpack.c.h.b16 %v414
        %v619 = vunpack.c.l.b16 %v415
        %v620 = vunpack.c.h.b16 %v415
        %v621 = vunpack.c.l.b16 %v416
        %v622 = vunpack.c.h.b16 %v416
        %v623 = vunpack.c.l.b16 %v417
        %v624 = vunpack.c.h.b16 %v417
        %v625 = vunpack.c.l.b16 %v418
        %v626 = vunpack.c.h.b16 %v418
        %v627 = vunpack.c.l.b16 %v419
        %v628 = vunpack.c.h.b16 %v419
        %v629 = vunpack.c.l.b16 %v420
        %v630 = vunpack.c.h.b16 %v420
        %v631 = vunpack.c.l.b16 %v421
        %v632 = vunpack.c.h.b16 %v421
        %v633 = vunpack.c.l.b16 %v422
        %v634 = vunpack.c.h.b16 %v422
        %v635 = vunpack.c.l.b16 %v423
        %v636 = vunpack.c.h.b16 %v423
        %v637 = vunpack.c.l.b16 %v424
        %v638 = vunpack.c.h.b16 %v424
        %v639 = vunpack.c.l.b16 %v425
        %v640 = vunpack.c.h.b16 %v425
        %v641 = vunpack.c.l.b16 %v426
        %v642 = vunpack.c.h.b16 %v426
        %v643 = vunpack.c.l.b16 %v427
        %v644 = vunpack.c.h.b16 %v427
        %v645 = vunpack.c.l.b16 %v428
        %v646 = vunpack.c.h.b16 %v428
        %v647 = vunpack.c.l.b16 %v429
        %v648 = vunpack.c.h.b16 %v429
        %v649 = vunpack.c.l.b16 %v430
        %v650 = vunpack.c.h.b16 %v430
        %v651 = vunpack.c.l.b16 %v431
        %v652 = vunpack.c.h.b16 %v431
        %v653 = vunpack.c.l.b16 %v432
        %v654 = vunpack.c.h.b16 %v432
        %v655 = vunpack.c.l.b16 %v433
        %v656 = vunpack.c.h.b16 %v433
        %v657 = vunpack.c.l.b16 %v434
        %v658 = vunpack.c.h.b16 %v434
        %v659 = vunpack.c.l.b16 %v435
        %v660 = vunpack.c.h.b16 %v435
        %v661 = vunpack.c.l.b16 %v436
        %v662 = vunpack.c.h.b16 %v436
        %v663 = vunpack.c.l.b16 %v437
        %v664 = vunpack.c.h.b16 %v437
        %v665 = vunpack.c.l.b16 %v438
        %v666 = vunpack.c.h.b16 %v438
        %v667 = vunpack.c.l.b16 %v439
        %v668 = vunpack.c.h.b16 %v439
        %v669 = vunpack.c.l.b16 %v440
        %v670 = vunpack.c.h.b16 %v440
        %v671 = vunpack.c.l.b16 %v441
        %v672 = vunpack.c.h.b16 %v441
        %v673 = vunpack.c.l.b16 %v442
        %v674 = vunpack.c.h.b16 %v442
        %v675 = vpack.c.b16 %v549, %v547
        %v676 = vpack.c.b16 %v550, %v548
        %v677 = vpack.c.b16 %v553, %v551
        %v678 = vpack.c.b16 %v554, %v552
        %v679 = vpack.c.b16 %v557, %v555
        %v680 = vpack.c.b16 %v558, %v556
        %v681 = vpack.c.b16 %v561, %v559
        %v682 = vpack.c.b16 %v562, %v560
        %v683 = vpack.c.b16 %v565, %v563
        %v684 = vpack.c.b16 %v566, %v564
        %v685 = vpack.c.b16 %v569, %v567
        %v686 = vpack.c.b16 %v570, %v568
        %v687 = vpack.c.b16 %v573, %v571
        %v688 = vpack.c.b16 %v574, %v572
        %v689 = vpack.c.b16 %v577, %v575
        %v690 = vpack.c.b16 %v578, %v576
        %v691 = vpack.c.b16 %v581, %v579
        %v692 = vpack.c.b16 %v582, %v580
        %v693 = vpack.c.b16 %v585, %v583
        %v694 = vpack.c.b16 %v586, %v584
        %v695 = vpack.c.b16 %v589, %v587
        %v696 = vpack.c.b16 %v590, %v588
        %v697 = vpack.c.b16 %v593, %v591
        %v698 = vpack.c.b16 %v594, %v592
        %v699 = vpack.c.b16 %v597, %v595
        %v700 = vpack.c.b16 %v598, %v596
        %v701 = vpack.c.b16 %v601, %v599
        %v702 = vpack.c.b16 %v602, %v600
        %v703 = vpack.c.b16 %v605, %v603
        %v704 = vpack.c.b16 %v606, %v604
        %v705 = vpack.c.b16 %v609, %v607
        %v706 = vpack.c.b16 %v610, %v608
        %v707 = vpack.c.b16 %v613, %v611
        %v708 = vpack.c.b16 %v614, %v612
        %v709 = vpack.c.b16 %v617, %v615
        %v710 = vpack.c.b16 %v618, %v616
        %v711 = vpack.c.b16 %v621, %v619
        %v712 = vpack.c.b16 %v622, %v620
        %v713 = vpack.c.b16 %v625, %v623
        %v714 = vpack.c.b16 %v626, %v624
        %v715 = vpack.c.b16 %v629, %v627
        %v716 = vpack.c.b16 %v630, %v628
        %v717 = vpack.c.b16 %v633, %v631
        %v718 = vpack.c.b16 %v634, %v632
        %v719 = vpack.c.b16 %v637, %v635
        %v720 = vpack.c.b16 %v638, %v636
        %v721 = vpack.c.b16 %v641, %v639
        %v722 = vpack.c.b16 %v642, %v640
        %v723 = vpack.c.b16 %v645, %v643
        %v724 = vpack.c.b16 %v646, %v644
        %v725 = vpack.c.b16 %v649, %v647
        %v726 = vpack.c.b16 %v650, %v648
        %v727 = vpack.c.b16 %v653, %v651
        %v728 = vpack.c.b16 %v654, %v652
        %v729 = vpack.c.b16 %v657, %v655
        %v730 = vpack.c.b16 %v658, %v656
        %v731 = vpack.c.b16 %v661, %v659
        %v732 = vpack.c.b16 %v662, %v660
        %v733 = vpack.c.b16 %v665, %v663
        %v734 = vpack.c.b16 %v666, %v664
        %v735 = vpack.c.b16 %v669, %v667
        %v736 = vpack.c.b16 %v670, %v668
        %v737 = vpack.c.b16 %v673, %v671
        %v738 = vpack.c.b16 %v674, %v672
        %803 = vmatprep.subr.bf16.mxu0 %v676
        %804 = vmatpush1.bf16.msra.mxu0 %v675
        %805 = vmatprep.subr.bf16.mxu0 %v678
        %806 = vmatpush1.bf16.msra.mxu0 %v677
        %807 = vmatprep.subr.bf16.mxu0 %v680
        %808 = vmatpush1.bf16.msra.mxu0 %v679
        %809 = vmatprep.subr.bf16.mxu0 %v682
        %810 = vmatpush1.bf16.msra.mxu0 %v681
        %811 = vmatprep.subr.bf16.mxu0 %v684
        %812 = vmatpush1.bf16.msra.mxu0 %v683
        %813 = vmatprep.subr.bf16.mxu0 %v686
        %814 = vmatpush1.bf16.msra.mxu0 %v685
        %815 = vmatprep.subr.bf16.mxu0 %v688
        %816 = vmatpush1.bf16.msra.mxu0 %v687
        %817 = vmatprep.subr.bf16.mxu0 %v690
        %818 = vmatpush1.bf16.msra.mxu0 %v689
        %819 = vmatprep.subr.bf16.mxu0 %v692
        %820 = vmatpush1.bf16.msra.mxu0 %v691
        %821 = vmatprep.subr.bf16.mxu0 %v694
        %822 = vmatpush1.bf16.msra.mxu0 %v693
        %823 = vmatprep.subr.bf16.mxu0 %v696
        %824 = vmatpush1.bf16.msra.mxu0 %v695
        %825 = vmatprep.subr.bf16.mxu0 %v698
        %826 = vmatpush1.bf16.msra.mxu0 %v697
        %827 = vmatprep.subr.bf16.mxu0 %v700
        %828 = vmatpush1.bf16.msra.mxu0 %v699
        %829 = vmatprep.subr.bf16.mxu0 %v702
        %830 = vmatpush1.bf16.msra.mxu0 %v701
        %831 = vmatprep.subr.bf16.mxu0 %v704
        %832 = vmatpush1.bf16.msra.mxu0 %v703
        %833 = vmatprep.subr.bf16.mxu0 %v706
        %834 = vmatpush1.bf16.msra.mxu0 %v705
        %835 = vmatprep.mubr.bf16.mxu0 %v468
        %836 = vmatmul.mubr.bf16.gmra.mrb[0].mxu0 %v467
        %v837 = vpop.f32.mrb[0].mxu0
        %v838 = vadd.f32 0.0, %v837
        %v839 = vpop.f32.mrb[0].mxu0
        %v840 = vadd.f32 0.0, %v839
        %v841 = vpop.f32.mrb[0].mxu0
        %v842 = vadd.f32 0.0, %v841
        %v843 = vpop.f32.mrb[0].mxu0
        %v844 = vadd.f32 0.0, %v843
        %845 = vmatprep.mubr.bf16.mxu0 %v472
        %846 = vmatmul.mubr.bf16.gmra.mrb[0].mxu0 %v471
        %v847 = vpop.f32.mrb[0].mxu0
        %v848 = vadd.f32 0.0, %v847
        %v849 = vpop.f32.mrb[0].mxu0
        %v850 = vadd.f32 0.0, %v849
        %v851 = vpop.f32.mrb[0].mxu0
        %v852 = vadd.f32 0.0, %v851
        %v853 = vpop.f32.mrb[0].mxu0
        %v854 = vadd.f32 0.0, %v853
        %855 = vdwg.mxu0
        %856 = vmatprep.subr.bf16.mxu0 %v708
        %857 = vmatpush1.bf16.msra.mxu0 %v707
        %858 = vmatprep.subr.bf16.mxu0 %v710
        %859 = vmatpush1.bf16.msra.mxu0 %v709
        %860 = vmatprep.subr.bf16.mxu0 %v712
        %861 = vmatpush1.bf16.msra.mxu0 %v711
        %862 = vmatprep.subr.bf16.mxu0 %v714
        %863 = vmatpush1.bf16.msra.mxu0 %v713
        %864 = vmatprep.subr.bf16.mxu0 %v716
        %865 = vmatpush1.bf16.msra.mxu0 %v715
        %866 = vmatprep.subr.bf16.mxu0 %v718
        %867 = vmatpush1.bf16.msra.mxu0 %v717
        %868 = vmatprep.subr.bf16.mxu0 %v720
        %869 = vmatpush1.bf16.msra.mxu0 %v719
        %870 = vmatprep.subr.bf16.mxu0 %v722
        %871 = vmatpush1.bf16.msra.mxu0 %v721
        %872 = vmatprep.subr.bf16.mxu0 %v724
        %873 = vmatpush1.bf16.msra.mxu0 %v723
        %874 = vmatprep.subr.bf16.mxu0 %v726
        %875 = vmatpush1.bf16.msra.mxu0 %v725
        %876 = vmatprep.subr.bf16.mxu0 %v728
        %877 = vmatpush1.bf16.msra.mxu0 %v727
        %878 = vmatprep.subr.bf16.mxu0 %v730
        %879 = vmatpush1.bf16.msra.mxu0 %v729
        %880 = vmatprep.subr.bf16.mxu0 %v732
        %881 = vmatpush1.bf16.msra.mxu0 %v731
        %882 = vmatprep.subr.bf16.mxu0 %v734
        %883 = vmatpush1.bf16.msra.mxu0 %v733
        %884 = vmatprep.subr.bf16.mxu0 %v736
        %885 = vmatpush1.bf16.msra.mxu0 %v735
        %886 = vmatprep.subr.bf16.mxu0 %v738
        %887 = vmatpush1.bf16.msra.mxu0 %v737
        %888 = vmatprep.mubr.bf16.mxu0 %v470
        %889 = vmatmul.mubr.bf16.gmra.mrb[0].mxu0 %v469
        %v890 = vpop.f32.mrb[0].mxu0
        %v891 = vadd.f32 %v838, %v890
        %v892 = vpop.f32.mrb[0].mxu0
        %v893 = vadd.f32 %v840, %v892
        %v894 = vpop.f32.mrb[0].mxu0
        %v895 = vadd.f32 %v842, %v894
        %v896 = vpop.f32.mrb[0].mxu0
        %v897 = vadd.f32 %v844, %v896
        %898 = vmatprep.mubr.bf16.mxu0 %v474
        %899 = vmatmul.mubr.bf16.gmra.mrb[0].mxu0 %v473
        %v900 = vpop.f32.mrb[0].mxu0
        %v901 = vadd.f32 %v848, %v900
        %v902 = vpop.f32.mrb[0].mxu0
        %v903 = vadd.f32 %v850, %v902
        %v904 = vpop.f32.mrb[0].mxu0
        %v905 = vadd.f32 %v852, %v904
        %v906 = vpop.f32.mrb[0].mxu0
        %v907 = vadd.f32 %v854, %v906
        %908 = vdwg.mxu0
        %v909 = vadd.f32 %v363, %v891
        %v910 = vadd.f32 %v364, %v893
        %v911 = vadd.f32 %v365, %v895
        %v912 = vadd.f32 %v366, %v897
        %v913 = vadd.f32 %v367, %v901
        %v914 = vadd.f32 %v368, %v903
        %v915 = vadd.f32 %v369, %v905
        %v916 = vadd.f32 %v370, %v907
        %917 = vst [vmem:[%s348] sm:$0xff] %v909
        %918 = vst [vmem:[%s348 + $0x8] sm:$0xff] %v910
        %919 = vst [vmem:[%s348 + $0x10] sm:$0xff] %v911
        %920 = vst [vmem:[%s348 + $0x18] sm:$0xff] %v912
        %921 = vst [vmem:[%s348 + $0x20] sm:$0xff] %v913
        %922 = vst [vmem:[%s348 + $0x28] sm:$0xff] %v914
        %923 = vst [vmem:[%s348 + $0x30] sm:$0xff] %v915
        %924 = vst [vmem:[%s348 + $0x38] sm:$0xff] %v916
        %p925 = scmp.eq.s32.totalorder %s22, 3
        // Predicated region
        $region64: #{discriminator_forward.6} parent=54 // pred_check
          %p926 = pneg %p925
        $region65: #{discriminator_forward.6} parent=54 // pred_check_branch
          %928 = sbr.rel (%p926) target = $region67
        $region66: #{discriminator_forward.6} parent=54 // pred_region
          %v929 = vld [vmem:[%s348] sm:$0xff]
          %v930 = vld [vmem:[%s348 + $0x8] sm:$0xff]
          %v931 = vld [vmem:[%s348 + $0x10] sm:$0xff]
          %v932 = vld [vmem:[%s348 + $0x18] sm:$0xff]
          %v933 = vld [vmem:[%s348 + $0x20] sm:$0xff]
          %v934 = vld [vmem:[%s348 + $0x28] sm:$0xff]
          %v935 = vld [vmem:[%s348 + $0x30] sm:$0xff]
          %v936 = vld [vmem:[%s348 + $0x38] sm:$0xff]
          %v937 = vld [vmem:[%s332] sm:$0x3]
          %v939 = vlaneseq
          %v940 = vshrl.u32 %v939, 7
          %v941 = vsub.s32 0, %v940
          %v942 = vrot.slane %v937, %v941
          %v943 = vlaneseq
          %v944 = vshrl.u32 %v943, 7
          %v945 = vsub.s32 1, %v944
          %v946 = vrot.slane %v937, %v945
          %v949 = vmul.f32 %v929, %v942
          %v950 = vmul.f32 %v930, %v946
          %v951 = vmul.f32 %v931, %v942
          %v952 = vmul.f32 %v932, %v946
          %v953 = vmul.f32 %v933, %v942
          %v954 = vmul.f32 %v934, %v946
          %v955 = vmul.f32 %v935, %v942
          %v956 = vmul.f32 %v936, %v946
          %v957 = vld [vmem:[%s337] sm:$0x3]
          %v959 = vlaneseq
          %v960 = vshrl.u32 %v959, 7
          %v961 = vsub.s32 0, %v960
          %v962 = vrot.slane %v957, %v961
          %v963 = vlaneseq
          %v964 = vshrl.u32 %v963, 7
          %v965 = vsub.s32 1, %v964
          %v966 = vrot.slane %v957, %v965
          %v969 = vadd.f32 %v949, %v962
          %v970 = vadd.f32 %v950, %v966
          %v971 = vadd.f32 %v951, %v962
          %v972 = vadd.f32 %v952, %v966
          %v973 = vadd.f32 %v953, %v962
          %v974 = vadd.f32 %v954, %v966
          %v975 = vadd.f32 %v955, %v962
          %v976 = vadd.f32 %v956, %v966
          %vm977 = vcmp.ge.f32.partialorder %v969, 0.0
          %vm978 = vcmp.ge.f32.partialorder %v970, 0.0
          %vm979 = vcmp.ge.f32.partialorder %v971, 0.0
          %vm980 = vcmp.ge.f32.partialorder %v972, 0.0
          %vm981 = vcmp.ge.f32.partialorder %v973, 0.0
          %vm982 = vcmp.ge.f32.partialorder %v974, 0.0
          %vm983 = vcmp.ge.f32.partialorder %v975, 0.0
          %vm984 = vcmp.ge.f32.partialorder %v976, 0.0
          %v985 = vmul.f32 %v969, 0.2
          %v986 = vmul.f32 %v970, 0.2
          %v987 = vmul.f32 %v971, 0.2
          %v988 = vmul.f32 %v972, 0.2
          %v989 = vmul.f32 %v973, 0.2
          %v990 = vmul.f32 %v974, 0.2
          %v991 = vmul.f32 %v975, 0.2
          %v992 = vmul.f32 %v976, 0.2
          %v993 = vsel %vm977, %v969, %v985
          %v994 = vsel %vm978, %v970, %v986
          %v995 = vsel %vm979, %v971, %v987
          %v996 = vsel %vm980, %v972, %v988
          %v997 = vsel %vm981, %v973, %v989
          %v998 = vsel %vm982, %v974, %v990
          %v999 = vsel %vm983, %v975, %v991
          %v1000 = vsel %vm984, %v976, %v992
          %1001 = vst [vmem:[%s348] sm:$0xff] %v993
          %1002 = vst [vmem:[%s348 + $0x8] sm:$0xff] %v994
          %1003 = vst [vmem:[%s348 + $0x10] sm:$0xff] %v995
          %1004 = vst [vmem:[%s348 + $0x18] sm:$0xff] %v996
          %1005 = vst [vmem:[%s348 + $0x20] sm:$0xff] %v997
          %1006 = vst [vmem:[%s348 + $0x28] sm:$0xff] %v998
          %1007 = vst [vmem:[%s348 + $0x30] sm:$0xff] %v999
          %1008 = vst [vmem:[%s348 + $0x38] sm:$0xff] %v1000
        $region67: #{discriminator_forward.6} parent=54 // pred_fallthru
          _
        %s1009 = smul.u32 4, %s20
        %s1010 = smul.u32 2, %s21
        %p1011 = scmp.lt.s32.totalorder %s1009, 3
        %s1012 = scalar_select %p1011, %s1009, 3
        %p1013 = scmp.lt.s32.totalorder %s1010, 1
        %s1014 = scalar_select %p1013, %s1010, 1
        %s1015 = smul.addr %s1012, 2
        %s1016 = sadd.s32 %s1014, %s1015
        %s1017 = smul.addr %s1016, 8
        %s1018 = scalar_lea.vmem %s4, %s1017
        // Predicated region
        $region68: #{discriminator_forward.6} parent=54 // pred_check
          %p1019 = pneg %p162
        $region69: #{discriminator_forward.6} parent=54 // pred_check_branch
          %1021 = sbr.rel (%p1019) target = $region71
        $region70: #{discriminator_forward.6} parent=54 // pred_region
          %s1022 = smul.u32 4, %s20
          %s1023 = smul.u32 2, %s21
        $region71: #{discriminator_forward.6} parent=54 // pred_fallthru
          _
        // Predicated region
        $region72: #{discriminator_forward.6} parent=54 // pred_check
          %p1024 = pneg %p162
        $region73: #{discriminator_forward.6} parent=54 // pred_check_branch
          %1026 = sbr.rel (%p1024) target = $region75
        $region74: #{discriminator_forward.6} parent=54 // pred_region
          %s1027 = smul.u32 4, %s20
          %s1028 = smul.u32 2, %s21
          %p1029 = scmp.lt.s32.totalorder %s1027, 3
          %s1030 = scalar_select %p1029, %s1027, 3
          %p1031 = scmp.lt.s32.totalorder %s1028, 1
          %s1032 = scalar_select %p1031, %s1028, 1
          %s1033 = smul.addr %s1030, 2
          %s1034 = sadd.s32 %s1032, %s1033
          %s1035 = smul.addr %s1034, 8
          %s1036 = scalar_lea.vmem %s4, %s1035
        $region75: #{discriminator_forward.6} parent=54 // pred_fallthru
          _
      $region55: #{discriminator_forward.6} parent=5 // pred_fallthru
        _
      %p1037 = scmp.le.s32.totalorder 2, %s10
      // Predicated region
      $region76: #{discriminator_forward.6} parent=5 // pred_check
        %p1038 = pneg %p1037
      $region77: #{discriminator_forward.6} parent=5 // pred_check_branch
        %1040 = sbr.rel (%p1038) target = $region79
      $region78: #{discriminator_forward.6} parent=5 // pred_region
        %s1041 = ssub.s32 %s10, 2
      $region79: #{discriminator_forward.6} parent=5 // pred_fallthru
        _
    $region6: #{discriminator_forward.6} parent=1 // loop_footer
      %s14 = sadd.s32 1, %s10
    $region7: #{discriminator_forward.6} parent=1 // loop_footer_branch
      %9 = sbr.rel target = $region3
    $region8: #{discriminator_forward.6} parent=1 // loop_exit
      _

// kernel: discriminator_forward.7
$region0: #{discriminator_forward.7}
  #allocation0 [shape = 'u32[]', space=smem, size = 0x4, offset = 0x4, fixed_abs, tag = 'smem constant byte address 0x4 - core index']
  #allocation1 [shape = 'u32[144,128]{1,0:T(1,128)}', space=vmem, size = 0x12000, scoped, tag = 'internal scratch']
  %s0 = inlined_call_operand.vmem [shape: bf16[24,4096], index: 0, kind: input, shape index: {}]
  %s1 = inlined_call_operand.vmem [shape: bf16[4096,512], index: 1, kind: input, shape index: {}]
  %s2 = inlined_call_operand.vmem [shape: f32[1,512], index: 2, kind: input, shape index: {}]
  %s3 = inlined_call_operand.vmem [shape: f32[1,512], index: 3, kind: input, shape index: {}]
  %s4 = inlined_call_operand.vmem [shape: f32[24,512], index: 4, kind: output, shape index: {}]
  %s5 = sld [smem:[#allocation0]]
  $region137: #{discriminator_forward.7} parent=0
    _
  %s7 = ssub.s32 1, %s5
  %s8 = scalar_select 0, %s7, %s5
  $region1: #{discriminator_forward.7} parent=0
    #allocation2 [shape = 'u8[49152]{0}', space=vmem, size = 0xc000, scoped, tag = 'input window, operand 0']
    #allocation3 [shape = 'u8[524288]{0}', space=vmem, size = 0x80000, scoped, tag = 'input window, operand 1']
    #allocation4 [shape = 'u8[49152]{0}', space=vmem, size = 0xc000, scoped, tag = 'output window, operand 0']
    loop: start=0, step=1, limit=18
    $region2: #{discriminator_forward.7} parent=1 // loop_pre_header
      _
    $region3: #{discriminator_forward.7} parent=1 // loop_header
      %s10 = sphi 0, %s14
      %p11 = scmp.ge.s32.totalorder %s10, 18
      %s17 = sphi 0, %s36
      %s18 = sphi 0, %s32
      %s19 = sphi 0, %s28
      %s20 = sphi 0, %s17
      %s21 = sphi 0, %s18
      %s22 = sphi 0, %s19
      %s23 = sphi 0, %s20
      %s24 = sphi 0, %s21
      %s25 = sphi 0, %s22
      %s41 = sphi 0, %s43
      %s44 = sphi 0, %s41
      %s45 = sphi 0, %s44
      %s61 = sphi 0, %s45
      %s69 = sphi 0, %s71
      %s72 = sphi 0, %s69
      %s73 = sphi 0, %s72
      %s89 = sphi 0, %s73
      %s95 = sphi 0, %s97
      %s98 = sphi 0, %s95
      %s99 = sphi 0, %s98
      %s115 = sphi 0, %s99
      %s121 = sphi 0, %s123
      %s124 = sphi 0, %s121
      %s125 = sphi 0, %s124
      %s141 = sphi 0, %s125
      %s149 = sphi 0, %s151
      %s152 = sphi 0, %s149
      %s153 = sphi 0, %s152
      %s169 = sphi 0, %s153
    $region4: #{discriminator_forward.7} parent=1 // loop_header_branch
      %13 = sbr.rel (%p11) target = $region8
    $region5: #{discriminator_forward.7} parent=1 // loop_body
      %s15 = ssub.s32 %s10, 1
      %s16 = ssub.s32 %s10, 2
      %s26 = sadd.s32 1, %s19
      %p27 = scmp.ge.s32.totalorder %s26, 8
      %s28 = scalar_select %p27, 0, %s26
      %s29 = sadd.s32 1, %s18
      %s30 = scalar_select %p27, %s29, %s18
      %p31 = scmp.ge.s32.totalorder %s30, 2
      %s32 = scalar_select %p31, 0, %s30
      %s33 = sadd.s32 1, %s17
      %s34 = scalar_select %p31, %s33, %s17
      %p35 = scmp.ge.s32.totalorder %s34, 1
      %s36 = scalar_select %p35, 0, %s34
      %s37 = ssub.s32 %s17, %s36
      %s38 = ssub.s32 %s19, %s28
      %s39 = sor.u32 %s37, %s38
      %p40 = scmp.eq.s32.totalorder %s39, 0
      %s42 = sadd.s32 %s41, 1
      %s43 = scalar_select %p40, %s41, %s42
      %p46 = pneg %p40
      %p47 = scmp.eq.s32.totalorder %s10, 15
      %p48 = por %p46, %p47
      %p49 = scmp.ne.s32.totalorder %s41, %s44
      %p50 = scmp.eq.s32.totalorder %s10, 0
      %p51 = por %p49, %p50
      %p52 = scmp.ne.s32.totalorder %s41, %s44
      %p53 = scmp.eq.s32.totalorder %s15, 15
      %p54 = por %p52, %p53
      %p55 = scmp.ne.s32.totalorder %s44, %s45
      %p56 = scmp.eq.s32.totalorder %s15, 0
      %p57 = por %p55, %p56
      %p58 = scmp.ne.s32.totalorder %s44, %s45
      %p59 = scmp.eq.s32.totalorder %s16, 15
      %p60 = por %p58, %p59
      %p62 = scmp.ne.s32.totalorder %s45, %s61
      %p63 = scmp.eq.s32.totalorder %s16, 0
      %p64 = por %p62, %p63
      %s65 = ssub.s32 %s19, %s28
      %s66 = ssub.s32 %s18, %s32
      %s67 = sor.u32 %s65, %s66
      %p68 = scmp.eq.s32.totalorder %s67, 0
      %s70 = sadd.s32 %s69, 1
      %s71 = scalar_select %p68, %s69, %s70
      %p74 = pneg %p68
      %p75 = scmp.eq.s32.totalorder %s10, 15
      %p76 = por %p74, %p75
      %p77 = scmp.ne.s32.totalorder %s69, %s72
      %p78 = scmp.eq.s32.totalorder %s10, 0
      %p79 = por %p77, %p78
      %p80 = scmp.ne.s32.totalorder %s69, %s72
      %p81 = scmp.eq.s32.totalorder %s15, 15
      %p82 = por %p80, %p81
      %p83 = scmp.ne.s32.totalorder %s72, %s73
      %p84 = scmp.eq.s32.totalorder %s15, 0
      %p85 = por %p83, %p84
      %p86 = scmp.ne.s32.totalorder %s72, %s73
      %p87 = scmp.eq.s32.totalorder %s16, 15
      %p88 = por %p86, %p87
      %p90 = scmp.ne.s32.totalorder %s73, %s89
      %p91 = scmp.eq.s32.totalorder %s16, 0
      %p92 = por %p90, %p91
      %s93 = ssub.s32 %s18, %s32
      %p94 = scmp.eq.s32.totalorder %s93, 0
      %s96 = sadd.s32 %s95, 1
      %s97 = scalar_select %p94, %s95, %s96
      %p100 = pneg %p94
      %p101 = scmp.eq.s32.totalorder %s10, 15
      %p102 = por %p100, %p101
      %p103 = scmp.ne.s32.totalorder %s95, %s98
      %p104 = scmp.eq.s32.totalorder %s10, 0
      %p105 = por %p103, %p104
      %p106 = scmp.ne.s32.totalorder %s95, %s98
      %p107 = scmp.eq.s32.totalorder %s15, 15
      %p108 = por %p106, %p107
      %p109 = scmp.ne.s32.totalorder %s98, %s99
      %p110 = scmp.eq.s32.totalorder %s15, 0
      %p111 = por %p109, %p110
      %p112 = scmp.ne.s32.totalorder %s98, %s99
      %p113 = scmp.eq.s32.totalorder %s16, 15
      %p114 = por %p112, %p113
      %p116 = scmp.ne.s32.totalorder %s99, %s115
      %p117 = scmp.eq.s32.totalorder %s16, 0
      %p118 = por %p116, %p117
      %s119 = ssub.s32 %s18, %s32
      %p120 = scmp.eq.s32.totalorder %s119, 0
      %s122 = sadd.s32 %s121, 1
      %s123 = scalar_select %p120, %s121, %s122
      %p126 = pneg %p120
      %p127 = scmp.eq.s32.totalorder %s10, 15
      %p128 = por %p126, %p127
      %p129 = scmp.ne.s32.totalorder %s121, %s124
      %p130 = scmp.eq.s32.totalorder %s10, 0
      %p131 = por %p129, %p130
      %p132 = scmp.ne.s32.totalorder %s121, %s124
      %p133 = scmp.eq.s32.totalorder %s15, 15
      %p134 = por %p132, %p133
      %p135 = scmp.ne.s32.totalorder %s124, %s125
      %p136 = scmp.eq.s32.totalorder %s15, 0
      %p137 = por %p135, %p136
      %p138 = scmp.ne.s32.totalorder %s124, %s125
      %p139 = scmp.eq.s32.totalorder %s16, 15
      %p140 = por %p138, %p139
      %p142 = scmp.ne.s32.totalorder %s125, %s141
      %p143 = scmp.eq.s32.totalorder %s16, 0
      %p144 = por %p142, %p143
      %s145 = ssub.s32 %s17, %s36
      %s146 = ssub.s32 %s18, %s32
      %s147 = sor.u32 %s145, %s146
      %p148 = scmp.eq.s32.totalorder %s147, 0
      %s150 = sadd.s32 %s149, 1
      %s151 = scalar_select %p148, %s149, %s150
      %p154 = pneg %p148
      %p155 = scmp.eq.s32.totalorder %s10, 15
      %p156 = por %p154, %p155
      %p157 = scmp.ne.s32.totalorder %s149, %s152
      %p158 = scmp.eq.s32.totalorder %s10, 0
      %p159 = por %p157, %p158
      %p160 = scmp.ne.s32.totalorder %s149, %s152
      %p161 = scmp.eq.s32.totalorder %s15, 15
      %p162 = por %p160, %p161
      %p163 = scmp.ne.s32.totalorder %s152, %s153
      %p164 = scmp.eq.s32.totalorder %s15, 0
      %p165 = por %p163, %p164
      %p166 = scmp.ne.s32.totalorder %s152, %s153
      %p167 = scmp.eq.s32.totalorder %s16, 15
      %p168 = por %p166, %p167
      %p170 = scmp.ne.s32.totalorder %s153, %s169
      %p171 = scmp.eq.s32.totalorder %s16, 0
      %p172 = por %p170, %p171
      %p173 = scmp.le.s32.totalorder 1, %s10
      %p174 = scmp.lt.s32.totalorder %s10, 17
      %p175 = pnand %p173, %p174
      %p176 = pneg %p175
      // Predicated region
      $region9: #{discriminator_forward.7} parent=5 // pred_check
        _
      $region10: #{discriminator_forward.7} parent=5 // pred_check_branch
        %178 = sbr.rel (%p175) target = $region12
      $region11: #{discriminator_forward.7} parent=5 // pred_region
        %s179 = ssub.s32 %s10, 1
      $region12: #{discriminator_forward.7} parent=5 // pred_fallthru
        _
      %p180 = scmp.lt.s32.totalorder %s10, 16
      // Predicated region
      $region13: #{discriminator_forward.7} parent=5 // pred_check
        %p181 = pneg %p180
      $region14: #{discriminator_forward.7} parent=5 // pred_check_branch
        %183 = sbr.rel (%p181) target = $region16
      $region15: #{discriminator_forward.7} parent=5 // pred_region
        // Predicated region
        $region17: #{discriminator_forward.7} parent=15 // pred_check
          %p184 = pneg %p51
        $region18: #{discriminator_forward.7} parent=15 // pred_check_branch
          %186 = sbr.rel (%p184) target = $region20
        $region19: #{discriminator_forward.7} parent=15 // pred_region
          %s187 = sand.u32 %s41, 1
          %s188 = sand.u32 %s41, 1
          %s189 = smul.addr %s188, 48
          %s190 = scalar_lea.vmem [#allocation2], %s189
          %s191 = smul.u32 3, %s17
          %s192 = smul.u32 4, %s19
          %s193 = smul.addr %s191, 32
          %s194 = sadd.s32 %s192, %s193
          %s195 = smul.addr %s194, 4
          %s196 = scalar_lea.vmem %s0, %s195
          // Predicated region
          $region21: #{discriminator_forward.7} parent=19 // pred_check
            _
          $region22: #{discriminator_forward.7} parent=19 // pred_check_branch
            %198 = sbr.rel (0) target = $region24
          $region23: #{discriminator_forward.7} parent=19 // pred_region
            // Predicated region
            $region25: #{discriminator_forward.7} parent=23 // pred_check
              _
            $region26: #{discriminator_forward.7} parent=23 // pred_check_branch
              %200 = sbr.rel (0) target = $region28
            $region27: #{discriminator_forward.7} parent=23 // pred_region
              loop: start=0, step=1, limit=1
              $region29: #{discriminator_forward.7} parent=27 // loop_pre_header
                _
              $region30: #{discriminator_forward.7} parent=27 // loop_header
                %s202 = sphi 0, %s206
                %p203 = scmp.ge.s32.totalorder %s202, 1
                %s207 = sphi %s196, %s196
                %s208 = sphi %s190, %s190
              $region31: #{discriminator_forward.7} parent=27 // loop_header_branch
                %205 = sbr.rel (%p203) target = $region35
              $region32: #{discriminator_forward.7} parent=27 // loop_body
                %v209 = vld [vmem:[%s207] sm:$0xff]
                %210 = vst [vmem:[%s208] sm:$0xff] %v209
                %v211 = vld [vmem:[%s207 + $0x8] sm:$0xff]
                %212 = vst [vmem:[%s208 + $0x8] sm:$0xff] %v211
                %v213 = vld [vmem:[%s207 + $0x80] sm:$0xff]
                %214 = vst [vmem:[%s208 + $0x10] sm:$0xff] %v213
                %v215 = vld [vmem:[%s207 + $0x88] sm:$0xff]
                %216 = vst [vmem:[%s208 + $0x18] sm:$0xff] %v215
                %v217 = vld [vmem:[%s207 + $0x100] sm:$0xff]
                %218 = vst [vmem:[%s208 + $0x20] sm:$0xff] %v217
                %v219 = vld [vmem:[%s207 + $0x108] sm:$0xff]
                %220 = vst [vmem:[%s208 + $0x28] sm:$0xff] %v219
              $region33: #{discriminator_forward.7} parent=27 // loop_footer
                %s206 = sadd.s32 1, %s202
              $region34: #{discriminator_forward.7} parent=27 // loop_footer_branch
                %201 = sbr.rel target = $region30
              $region35: #{discriminator_forward.7} parent=27 // loop_exit
                _
            $region28: #{discriminator_forward.7} parent=23 // pred_fallthru
              _
            // Predicated region
            $region36: #{discriminator_forward.7} parent=23 // pred_check
              _
            $region37: #{discriminator_forward.7} parent=23 // pred_check_branch
              %222 = sbr.rel target = $region39
            $region38: #{discriminator_forward.7} parent=23 // pred_region
              _
            $region39: #{discriminator_forward.7} parent=23 // pred_fallthru
              _
          $region24: #{discriminator_forward.7} parent=19 // pred_fallthru
            _
          %223 = vnop
        $region20: #{discriminator_forward.7} parent=15 // pred_fallthru
          _
        // Predicated region
        $region40: #{discriminator_forward.7} parent=15 // pred_check
          %p224 = pneg %p79
        $region41: #{discriminator_forward.7} parent=15 // pred_check_branch
          %226 = sbr.rel (%p224) target = $region43
        $region42: #{discriminator_forward.7} parent=15 // pred_region
          %s227 = sand.u32 %s69, 1
          %s228 = sand.u32 %s69, 1
          %s229 = smul.addr %s228, 512
          %s230 = scalar_lea.vmem [#allocation3], %s229
          %s231 = smul.u32 64, %s19
          %s232 = smul.u32 2, %s18
          %s233 = smul.addr %s231, 4
          %s234 = sadd.s32 %s232, %s233
          %s235 = smul.addr %s234, 4
          %s236 = scalar_lea.vmem %s1, %s235
          // Predicated region
          $region44: #{discriminator_forward.7} parent=42 // pred_check
            _
          $region45: #{discriminator_forward.7} parent=42 // pred_check_branch
            %238 = sbr.rel (0) target = $region47
          $region46: #{discriminator_forward.7} parent=42 // pred_region
            // Predicated region
            $region48: #{discriminator_forward.7} parent=46 // pred_check
              _
            $region49: #{discriminator_forward.7} parent=46 // pred_check_branch
              %240 = sbr.rel (0) target = $region51
            $region50: #{discriminator_forward.7} parent=46 // pred_region
              // Predicated region
              $region63: #{discriminator_forward.7} parent=50 // pred_check
                _
              $region64: #{discriminator_forward.7} parent=50 // pred_check_branch
                %381 = sbr.rel (0) target = $region66
              $region65: #{discriminator_forward.7} parent=50 // pred_region
                loop: start=0, step=1, limit=1
                $region67: #{discriminator_forward.7} parent=65 // loop_pre_header
                  _
                $region68: #{discriminator_forward.7} parent=65 // loop_header
                  %s383 = sphi 0, %s387
                  %p384 = scmp.ge.s32.totalorder %s383, 1
                  %s388 = sphi %s236, %s236
                  %s389 = sphi %s230, %s230
                $region69: #{discriminator_forward.7} parent=65 // loop_header_branch
                  %386 = sbr.rel (%p384) target = $region73
                $region70: #{discriminator_forward.7} parent=65 // loop_body
                  %v390 = vld [vmem:[%s388] sm:$0xff]
                  %391 = vst [vmem:[%s389] sm:$0xff] %v390
                  %v392 = vld [vmem:[%s388 + $0x10] sm:$0xff]
                  %393 = vst [vmem:[%s389 + $0x8] sm:$0xff] %v392
                  %v394 = vld [vmem:[%s388 + $0x20] sm:$0xff]
                  %395 = vst [vmem:[%s389 + $0x10] sm:$0xff] %v394
                  %v396 = vld [vmem:[%s388 + $0x30] sm:$0xff]
                  %397 = vst [vmem:[%s389 + $0x18] sm:$0xff] %v396
                  %v398 = vld [vmem:[%s388 + $0x40] sm:$0xff]
                  %399 = vst [vmem:[%s389 + $0x20] sm:$0xff] %v398
                  %v400 = vld [vmem:[%s388 + $0x50] sm:$0xff]
                  %401 = vst [vmem:[%s389 + $0x28] sm:$0xff] %v400
                  %v402 = vld [vmem:[%s388 + $0x60] sm:$0xff]
                  %403 = vst [vmem:[%s389 + $0x30] sm:$0xff] %v402
                  %v404 = vld [vmem:[%s388 + $0x70] sm:$0xff]
                  %405 = vst [vmem:[%s389 + $0x38] sm:$0xff] %v404
                  %v406 = vld [vmem:[%s388 + $0x80] sm:$0xff]
                  %407 = vst [vmem:[%s389 + $0x40] sm:$0xff] %v406
                  %v408 = vld [vmem:[%s388 + $0x90] sm:$0xff]
                  %409 = vst [vmem:[%s389 + $0x48] sm:$0xff] %v408
                  %v410 = vld [vmem:[%s388 + $0xa0] sm:$0xff]
                  %411 = vst [vmem:[%s389 + $0x50] sm:$0xff] %v410
                  %v412 = vld [vmem:[%s388 + $0xb0] sm:$0xff]
                  %413 = vst [vmem:[%s389 + $0x58] sm:$0xff] %v412
                  %v414 = vld [vmem:[%s388 + $0xc0] sm:$0xff]
                  %415 = vst [vmem:[%s389 + $0x60] sm:$0xff] %v414
                  %v416 = vld [vmem:[%s388 + $0xd0] sm:$0xff]
                  %417 = vst [vmem:[%s389 + $0x68] sm:$0xff] %v416
                  %v418 = vld [vmem:[%s388 + $0xe0] sm:$0xff]
                  %419 = vst [vmem:[%s389 + $0x70] sm:$0xff] %v418
                  %v420 = vld [vmem:[%s388 + $0xf0] sm:$0xff]
                  %421 = vst [vmem:[%s389 + $0x78] sm:$0xff] %v420
                  %v422 = vld [vmem:[%s388 + $0x100] sm:$0xff]
                  %423 = vst [vmem:[%s389 + $0x80] sm:$0xff] %v422
                  %v424 = vld [vmem:[%s388 + $0x110] sm:$0xff]
                  %425 = vst [vmem:[%s389 + $0x88] sm:$0xff] %v424
                  %v426 = vld [vmem:[%s388 + $0x120] sm:$0xff]
                  %427 = vst [vmem:[%s389 + $0x90] sm:$0xff] %v426
                  %v428 = vld [vmem:[%s388 + $0x130] sm:$0xff]
                  %429 = vst [vmem:[%s389 + $0x98] sm:$0xff] %v428
                  %v430 = vld [vmem:[%s388 + $0x140] sm:$0xff]
                  %431 = vst [vmem:[%s389 + $0xa0] sm:$0xff] %v430
                  %v432 = vld [vmem:[%s388 + $0x150] sm:$0xff]
                  %433 = vst [vmem:[%s389 + $0xa8] sm:$0xff] %v432
                  %v434 = vld [vmem:[%s388 + $0x160] sm:$0xff]
                  %435 = vst [vmem:[%s389 + $0xb0] sm:$0xff] %v434
                  %v436 = vld [vmem:[%s388 + $0x170] sm:$0xff]
                  %437 = vst [vmem:[%s389 + $0xb8] sm:$0xff] %v436
                  %v438 = vld [vmem:[%s388 + $0x180] sm:$0xff]
                  %439 = vst [vmem:[%s389 + $0xc0] sm:$0xff] %v438
                  %v440 = vld [vmem:[%s388 + $0x190] sm:$0xff]
                  %441 = vst [vmem:[%s389 + $0xc8] sm:$0xff] %v440
                  %v442 = vld [vmem:[%s388 + $0x1a0] sm:$0xff]
                  %443 = vst [vmem:[%s389 + $0xd0] sm:$0xff] %v442
                  %v444 = vld [vmem:[%s388 + $0x1b0] sm:$0xff]
                  %445 = vst [vmem:[%s389 + $0xd8] sm:$0xff] %v444
                  %v446 = vld [vmem:[%s388 + $0x1c0] sm:$0xff]
                  %447 = vst [vmem:[%s389 + $0xe0] sm:$0xff] %v446
                  %v448 = vld [vmem:[%s388 + $0x1d0] sm:$0xff]
                  %449 = vst [vmem:[%s389 + $0xe8] sm:$0xff] %v448
                  %v450 = vld [vmem:[%s388 + $0x1e0] sm:$0xff]
                  %451 = vst [vmem:[%s389 + $0xf0] sm:$0xff] %v450
                  %v452 = vld [vmem:[%s388 + $0x1f0] sm:$0xff]
                  %453 = vst [vmem:[%s389 + $0xf8] sm:$0xff] %v452
                  %v454 = vld [vmem:[%s388 + $0x200] sm:$0xff]
                  %455 = vst [vmem:[%s389 + $0x100] sm:$0xff] %v454
                  %v456 = vld [vmem:[%s388 + $0x210] sm:$0xff]
                  %457 = vst [vmem:[%s389 + $0x108] sm:$0xff] %v456
                  %v458 = vld [vmem:[%s388 + $0x220] sm:$0xff]
                  %459 = vst [vmem:[%s389 + $0x110] sm:$0xff] %v458
                  %v460 = vld [vmem:[%s388 + $0x230] sm:$0xff]
                  %461 = vst [vmem:[%s389 + $0x118] sm:$0xff] %v460
                  %v462 = vld [vmem:[%s388 + $0x240] sm:$0xff]
                  %463 = vst [vmem:[%s389 + $0x120] sm:$0xff] %v462
                  %v464 = vld [vmem:[%s388 + $0x250] sm:$0xff]
                  %465 = vst [vmem:[%s389 + $0x128] sm:$0xff] %v464
                  %v466 = vld [vmem:[%s388 + $0x260] sm:$0xff]
                  %467 = vst [vmem:[%s389 + $0x130] sm:$0xff] %v466
                  %v468 = vld [vmem:[%s388 + $0x270] sm:$0xff]
                  %469 = vst [vmem:[%s389 + $0x138] sm:$0xff] %v468
                  %v470 = vld [vmem:[%s388 + $0x280] sm:$0xff]
                  %471 = vst [vmem:[%s389 + $0x140] sm:$0xff] %v470
                  %v472 = vld [vmem:[%s388 + $0x290] sm:$0xff]
                  %473 = vst [vmem:[%s389 + $0x148] sm:$0xff] %v472
                  %v474 = vld [vmem:[%s388 + $0x2a0] sm:$0xff]
                  %475 = vst [vmem:[%s389 + $0x150] sm:$0xff] %v474
                  %v476 = vld [vmem:[%s388 + $0x2b0] sm:$0xff]
                  %477 = vst [vmem:[%s389 + $0x158] sm:$0xff] %v476
                  %v478 = vld [vmem:[%s388 + $0x2c0] sm:$0xff]
                  %479 = vst [vmem:[%s389 + $0x160] sm:$0xff] %v478
                  %v480 = vld [vmem:[%s388 + $0x2d0] sm:$0xff]
                  %481 = vst [vmem:[%s389 + $0x168] sm:$0xff] %v480
                  %v482 = vld [vmem:[%s388 + $0x2e0] sm:$0xff]
                  %483 = vst [vmem:[%s389 + $0x170] sm:$0xff] %v482
                  %v484 = vld [vmem:[%s388 + $0x2f0] sm:$0xff]
                  %485 = vst [vmem:[%s389 + $0x178] sm:$0xff] %v484
                  %v486 = vld [vmem:[%s388 + $0x300] sm:$0xff]
                  %487 = vst [vmem:[%s389 + $0x180] sm:$0xff] %v486
                  %v488 = vld [vmem:[%s388 + $0x310] sm:$0xff]
                  %489 = vst [vmem:[%s389 + $0x188] sm:$0xff] %v488
                  %v490 = vld [vmem:[%s388 + $0x320] sm:$0xff]
                  %491 = vst [vmem:[%s389 + $0x190] sm:$0xff] %v490
                  %v492 = vld [vmem:[%s388 + $0x330] sm:$0xff]
                  %493 = vst [vmem:[%s389 + $0x198] sm:$0xff] %v492
                  %v494 = vld [vmem:[%s388 + $0x340] sm:$0xff]
                  %495 = vst [vmem:[%s389 + $0x1a0] sm:$0xff] %v494
                  %v496 = vld [vmem:[%s388 + $0x350] sm:$0xff]
                  %497 = vst [vmem:[%s389 + $0x1a8] sm:$0xff] %v496
                  %v498 = vld [vmem:[%s388 + $0x360] sm:$0xff]
                  %499 = vst [vmem:[%s389 + $0x1b0] sm:$0xff] %v498
                  %v500 = vld [vmem:[%s388 + $0x370] sm:$0xff]
                  %501 = vst [vmem:[%s389 + $0x1b8] sm:$0xff] %v500
                  %v502 = vld [vmem:[%s388 + $0x380] sm:$0xff]
                  %503 = vst [vmem:[%s389 + $0x1c0] sm:$0xff] %v502
                  %v504 = vld [vmem:[%s388 + $0x390] sm:$0xff]
                  %505 = vst [vmem:[%s389 + $0x1c8] sm:$0xff] %v504
                  %v506 = vld [vmem:[%s388 + $0x3a0] sm:$0xff]
                  %507 = vst [vmem:[%s389 + $0x1d0] sm:$0xff] %v506
                  %v508 = vld [vmem:[%s388 + $0x3b0] sm:$0xff]
                  %509 = vst [vmem:[%s389 + $0x1d8] sm:$0xff] %v508
                  %v510 = vld [vmem:[%s388 + $0x3c0] sm:$0xff]
                  %511 = vst [vmem:[%s389 + $0x1e0] sm:$0xff] %v510
                  %v512 = vld [vmem:[%s388 + $0x3d0] sm:$0xff]
                  %513 = vst [vmem:[%s389 + $0x1e8] sm:$0xff] %v512
                  %v514 = vld [vmem:[%s388 + $0x3e0] sm:$0xff]
                  %515 = vst [vmem:[%s389 + $0x1f0] sm:$0xff] %v514
                  %v516 = vld [vmem:[%s388 + $0x3f0] sm:$0xff]
                  %517 = vst [vmem:[%s389 + $0x1f8] sm:$0xff] %v516
                $region71: #{discriminator_forward.7} parent=65 // loop_footer
                  %s387 = sadd.s32 1, %s383
                $region72: #{discriminator_forward.7} parent=65 // loop_footer_branch
                  %382 = sbr.rel target = $region68
                $region73: #{discriminator_forward.7} parent=65 // loop_exit
                  _
              $region66: #{discriminator_forward.7} parent=50 // pred_fallthru
                _
              // Predicated region
              $region74: #{discriminator_forward.7} parent=50 // pred_check
                _
              $region75: #{discriminator_forward.7} parent=50 // pred_check_branch
                %519 = sbr.rel target = $region77
              $region76: #{discriminator_forward.7} parent=50 // pred_region
                _
              $region77: #{discriminator_forward.7} parent=50 // pred_fallthru
                _
            $region51: #{discriminator_forward.7} parent=46 // pred_fallthru
              _
            // Predicated region
            $region52: #{discriminator_forward.7} parent=46 // pred_check
              _
            $region53: #{discriminator_forward.7} parent=46 // pred_check_branch
              %242 = sbr.rel target = $region55
            $region54: #{discriminator_forward.7} parent=46 // pred_region
              loop: start=0, step=1, limit=1
              $region56: #{discriminator_forward.7} parent=54 // loop_pre_header
                _
              $region57: #{discriminator_forward.7} parent=54 // loop_header
                %s245 = sphi 0, %s249
                %p246 = scmp.ge.s32.totalorder %s245, 1
                %s250 = sphi %s236, %s236
                %s251 = sphi %s230, %s230
              $region58: #{discriminator_forward.7} parent=54 // loop_header_branch
                %248 = sbr.rel (%p246) target = $region62
              $region59: #{discriminator_forward.7} parent=54 // loop_body
                %v252 = vld [vmem:[%s250] sm:$0xff]
                %253 = vst [vmem:[%s251] sm:$0xff] %v252
                %v254 = vld [vmem:[%s250 + $0x10] sm:$0xff]
                %255 = vst [vmem:[%s251 + $0x8] sm:$0xff] %v254
                %v256 = vld [vmem:[%s250 + $0x20] sm:$0xff]
                %257 = vst [vmem:[%s251 + $0x10] sm:$0xff] %v256
                %v258 = vld [vmem:[%s250 + $0x30] sm:$0xff]
                %259 = vst [vmem:[%s251 + $0x18] sm:$0xff] %v258
                %v260 = vld [vmem:[%s250 + $0x40] sm:$0xff]
                %261 = vst [vmem:[%s251 + $0x20] sm:$0xff] %v260
                %v262 = vld [vmem:[%s250 + $0x50] sm:$0xff]
                %263 = vst [vmem:[%s251 + $0x28] sm:$0xff] %v262
                %v264 = vld [vmem:[%s250 + $0x60] sm:$0xff]
                %265 = vst [vmem:[%s251 + $0x30] sm:$0xff] %v264
                %v266 = vld [vmem:[%s250 + $0x70] sm:$0xff]
                %267 = vst [vmem:[%s251 + $0x38] sm:$0xff] %v266
                %v268 = vld [vmem:[%s250 + $0x80] sm:$0xff]
                %269 = vst [vmem:[%s251 + $0x40] sm:$0xff] %v268
                %v270 = vld [vmem:[%s250 + $0x90] sm:$0xff]
                %271 = vst [vmem:[%s251 + $0x48] sm:$0xff] %v270
                %v272 = vld [vmem:[%s250 + $0xa0] sm:$0xff]
                %273 = vst [vmem:[%s251 + $0x50] sm:$0xff] %v272
                %v274 = vld [vmem:[%s250 + $0xb0] sm:$0xff]
                %275 = vst [vmem:[%s251 + $0x58] sm:$0xff] %v274
                %v276 = vld [vmem:[%s250 + $0xc0] sm:$0xff]
                %277 = vst [vmem:[%s251 + $0x60] sm:$0xff] %v276
                %v278 = vld [vmem:[%s250 + $0xd0] sm:$0xff]
                %279 = vst [vmem:[%s251 + $0x68] sm:$0xff] %v278
                %v280 = vld [vmem:[%s250 + $0xe0] sm:$0xff]
                %281 = vst [vmem:[%s251 + $0x70] sm:$0xff] %v280
                %v282 = vld [vmem:[%s250 + $0xf0] sm:$0xff]
                %283 = vst [vmem:[%s251 + $0x78] sm:$0xff] %v282
                %v284 = vld [vmem:[%s250 + $0x100] sm:$0xff]
                %285 = vst [vmem:[%s251 + $0x80] sm:$0xff] %v284
                %v286 = vld [vmem:[%s250 + $0x110] sm:$0xff]
                %287 = vst [vmem:[%s251 + $0x88] sm:$0xff] %v286
                %v288 = vld [vmem:[%s250 + $0x120] sm:$0xff]
                %289 = vst [vmem:[%s251 + $0x90] sm:$0xff] %v288
                %v290 = vld [vmem:[%s250 + $0x130] sm:$0xff]
                %291 = vst [vmem:[%s251 + $0x98] sm:$0xff] %v290
                %v292 = vld [vmem:[%s250 + $0x140] sm:$0xff]
                %293 = vst [vmem:[%s251 + $0xa0] sm:$0xff] %v292
                %v294 = vld [vmem:[%s250 + $0x150] sm:$0xff]
                %295 = vst [vmem:[%s251 + $0xa8] sm:$0xff] %v294
                %v296 = vld [vmem:[%s250 + $0x160] sm:$0xff]
                %297 = vst [vmem:[%s251 + $0xb0] sm:$0xff] %v296
                %v298 = vld [vmem:[%s250 + $0x170] sm:$0xff]
                %299 = vst [vmem:[%s251 + $0xb8] sm:$0xff] %v298
                %v300 = vld [vmem:[%s250 + $0x180] sm:$0xff]
                %301 = vst [vmem:[%s251 + $0xc0] sm:$0xff] %v300
                %v302 = vld [vmem:[%s250 + $0x190] sm:$0xff]
                %303 = vst [vmem:[%s251 + $0xc8] sm:$0xff] %v302
                %v304 = vld [vmem:[%s250 + $0x1a0] sm:$0xff]
                %305 = vst [vmem:[%s251 + $0xd0] sm:$0xff] %v304
                %v306 = vld [vmem:[%s250 + $0x1b0] sm:$0xff]
                %307 = vst [vmem:[%s251 + $0xd8] sm:$0xff] %v306
                %v308 = vld [vmem:[%s250 + $0x1c0] sm:$0xff]
                %309 = vst [vmem:[%s251 + $0xe0] sm:$0xff] %v308
                %v310 = vld [vmem:[%s250 + $0x1d0] sm:$0xff]
                %311 = vst [vmem:[%s251 + $0xe8] sm:$0xff] %v310
                %v312 = vld [vmem:[%s250 + $0x1e0] sm:$0xff]
                %313 = vst [vmem:[%s251 + $0xf0] sm:$0xff] %v312
                %v314 = vld [vmem:[%s250 + $0x1f0] sm:$0xff]
                %315 = vst [vmem:[%s251 + $0xf8] sm:$0xff] %v314
                %v316 = vld [vmem:[%s250 + $0x200] sm:$0xff]
                %317 = vst [vmem:[%s251 + $0x100] sm:$0xff] %v316
                %v318 = vld [vmem:[%s250 + $0x210] sm:$0xff]
                %319 = vst [vmem:[%s251 + $0x108] sm:$0xff] %v318
                %v320 = vld [vmem:[%s250 + $0x220] sm:$0xff]
                %321 = vst [vmem:[%s251 + $0x110] sm:$0xff] %v320
                %v322 = vld [vmem:[%s250 + $0x230] sm:$0xff]
                %323 = vst [vmem:[%s251 + $0x118] sm:$0xff] %v322
                %v324 = vld [vmem:[%s250 + $0x240] sm:$0xff]
                %325 = vst [vmem:[%s251 + $0x120] sm:$0xff] %v324
                %v326 = vld [vmem:[%s250 + $0x250] sm:$0xff]
                %327 = vst [vmem:[%s251 + $0x128] sm:$0xff] %v326
                %v328 = vld [vmem:[%s250 + $0x260] sm:$0xff]
                %329 = vst [vmem:[%s251 + $0x130] sm:$0xff] %v328
                %v330 = vld [vmem:[%s250 + $0x270] sm:$0xff]
                %331 = vst [vmem:[%s251 + $0x138] sm:$0xff] %v330
                %v332 = vld [vmem:[%s250 + $0x280] sm:$0xff]
                %333 = vst [vmem:[%s251 + $0x140] sm:$0xff] %v332
                %v334 = vld [vmem:[%s250 + $0x290] sm:$0xff]
                %335 = vst [vmem:[%s251 + $0x148] sm:$0xff] %v334
                %v336 = vld [vmem:[%s250 + $0x2a0] sm:$0xff]
                %337 = vst [vmem:[%s251 + $0x150] sm:$0xff] %v336
                %v338 = vld [vmem:[%s250 + $0x2b0] sm:$0xff]
                %339 = vst [vmem:[%s251 + $0x158] sm:$0xff] %v338
                %v340 = vld [vmem:[%s250 + $0x2c0] sm:$0xff]
                %341 = vst [vmem:[%s251 + $0x160] sm:$0xff] %v340
                %v342 = vld [vmem:[%s250 + $0x2d0] sm:$0xff]
                %343 = vst [vmem:[%s251 + $0x168] sm:$0xff] %v342
                %v344 = vld [vmem:[%s250 + $0x2e0] sm:$0xff]
                %345 = vst [vmem:[%s251 + $0x170] sm:$0xff] %v344
                %v346 = vld [vmem:[%s250 + $0x2f0] sm:$0xff]
                %347 = vst [vmem:[%s251 + $0x178] sm:$0xff] %v346
                %v348 = vld [vmem:[%s250 + $0x300] sm:$0xff]
                %349 = vst [vmem:[%s251 + $0x180] sm:$0xff] %v348
                %v350 = vld [vmem:[%s250 + $0x310] sm:$0xff]
                %351 = vst [vmem:[%s251 + $0x188] sm:$0xff] %v350
                %v352 = vld [vmem:[%s250 + $0x320] sm:$0xff]
                %353 = vst [vmem:[%s251 + $0x190] sm:$0xff] %v352
                %v354 = vld [vmem:[%s250 + $0x330] sm:$0xff]
                %355 = vst [vmem:[%s251 + $0x198] sm:$0xff] %v354
                %v356 = vld [vmem:[%s250 + $0x340] sm:$0xff]
                %357 = vst [vmem:[%s251 + $0x1a0] sm:$0xff] %v356
                %v358 = vld [vmem:[%s250 + $0x350] sm:$0xff]
                %359 = vst [vmem:[%s251 + $0x1a8] sm:$0xff] %v358
                %v360 = vld [vmem:[%s250 + $0x360] sm:$0xff]
                %361 = vst [vmem:[%s251 + $0x1b0] sm:$0xff] %v360
                %v362 = vld [vmem:[%s250 + $0x370] sm:$0xff]
                %363 = vst [vmem:[%s251 + $0x1b8] sm:$0xff] %v362
                %v364 = vld [vmem:[%s250 + $0x380] sm:$0xff]
                %365 = vst [vmem:[%s251 + $0x1c0] sm:$0xff] %v364
                %v366 = vld [vmem:[%s250 + $0x390] sm:$0xff]
                %367 = vst [vmem:[%s251 + $0x1c8] sm:$0xff] %v366
                %v368 = vld [vmem:[%s250 + $0x3a0] sm:$0xff]
                %369 = vst [vmem:[%s251 + $0x1d0] sm:$0xff] %v368
                %v370 = vld [vmem:[%s250 + $0x3b0] sm:$0xff]
                %371 = vst [vmem:[%s251 + $0x1d8] sm:$0xff] %v370
                %v372 = vld [vmem:[%s250 + $0x3c0] sm:$0xff]
                %373 = vst [vmem:[%s251 + $0x1e0] sm:$0xff] %v372
                %v374 = vld [vmem:[%s250 + $0x3d0] sm:$0xff]
                %375 = vst [vmem:[%s251 + $0x1e8] sm:$0xff] %v374
                %v376 = vld [vmem:[%s250 + $0x3e0] sm:$0xff]
                %377 = vst [vmem:[%s251 + $0x1f0] sm:$0xff] %v376
                %v378 = vld [vmem:[%s250 + $0x3f0] sm:$0xff]
                %379 = vst [vmem:[%s251 + $0x1f8] sm:$0xff] %v378
              $region60: #{discriminator_forward.7} parent=54 // loop_footer
                %s249 = sadd.s32 1, %s245
              $region61: #{discriminator_forward.7} parent=54 // loop_footer_branch
                %244 = sbr.rel target = $region57
              $region62: #{discriminator_forward.7} parent=54 // loop_exit
                _
            $region55: #{discriminator_forward.7} parent=46 // pred_fallthru
              _
          $region47: #{discriminator_forward.7} parent=42 // pred_fallthru
            _
          %520 = vnop
        $region43: #{discriminator_forward.7} parent=15 // pred_fallthru
          _
        // Predicated region
        $region78: #{discriminator_forward.7} parent=15 // pred_check
          %p521 = pneg %p105
        $region79: #{discriminator_forward.7} parent=15 // pred_check_branch
          %523 = sbr.rel (%p521) target = $region81
        $region80: #{discriminator_forward.7} parent=15 // pred_region
          %s524 = smul.u32 2, %s18
          %p525 = scmp.lt.s32.totalorder %s524, 3
          %s526 = scalar_select %p525, %s524, 3
          %s527 = scalar_lea.vmem %s2, %s526
          %s528 = smul.u32 2, %s18
        $region81: #{discriminator_forward.7} parent=15 // pred_fallthru
          _
        // Predicated region
        $region82: #{discriminator_forward.7} parent=15 // pred_check
          %p529 = pneg %p131
        $region83: #{discriminator_forward.7} parent=15 // pred_check_branch
          %531 = sbr.rel (%p529) target = $region85
        $region84: #{discriminator_forward.7} parent=15 // pred_region
          %s532 = smul.u32 2, %s18
          %p533 = scmp.lt.s32.totalorder %s532, 3
          %s534 = scalar_select %p533, %s532, 3
          %s535 = scalar_lea.vmem %s3, %s534
          %s536 = smul.u32 2, %s18
        $region85: #{discriminator_forward.7} parent=15 // pred_fallthru
          _
      $region16: #{discriminator_forward.7} parent=5 // pred_fallthru
        _
      %p537 = scmp.le.s32.totalorder 1, %s10
      %p538 = scmp.lt.s32.totalorder %s10, 17
      %p539 = pnand %p537, %p538
      %p540 = pneg %p539
      // Predicated region
      $region86: #{discriminator_forward.7} parent=5 // pred_check
        _
      $region87: #{discriminator_forward.7} parent=5 // pred_check_branch
        %542 = sbr.rel (%p539) target = $region89
      $region88: #{discriminator_forward.7} parent=5 // pred_region
        %s543 = ssub.s32 %s10, 1
        %s544 = sand.u32 %s44, 1
        %s545 = sand.u32 %s44, 1
        %s546 = smul.addr %s545, 48
        %s547 = scalar_lea.vmem [#allocation2], %s546
        // Predicated region
        $region90: #{discriminator_forward.7} parent=88 // pred_check
          %p548 = pneg %p57
        $region91: #{discriminator_forward.7} parent=88 // pred_check_branch
          %550 = sbr.rel (%p548) target = $region93
        $region92: #{discriminator_forward.7} parent=88 // pred_region
          _
        $region93: #{discriminator_forward.7} parent=88 // pred_fallthru
          _
        %s551 = sand.u32 %s72, 1
        %s552 = sand.u32 %s72, 1
        %s553 = smul.addr %s552, 512
        %s554 = scalar_lea.vmem [#allocation3], %s553
        // Predicated region
        $region94: #{discriminator_forward.7} parent=88 // pred_check
          %p555 = pneg %p85
        $region95: #{discriminator_forward.7} parent=88 // pred_check_branch
          %557 = sbr.rel (%p555) target = $region97
        $region96: #{discriminator_forward.7} parent=88 // pred_region
          _
        $region97: #{discriminator_forward.7} parent=88 // pred_fallthru
          _
        %s558 = sand.u32 %s44, 1
        %s559 = sand.u32 %s44, 1
        %s560 = smul.addr %s559, 48
        %s561 = scalar_lea.vmem [#allocation2], %s560
        %p562 = pneg %p57
        %p563 = pneg %p54
        %s564 = sand.u32 %s72, 1
        %s565 = sand.u32 %s72, 1
        %s566 = smul.addr %s565, 512
        %s567 = scalar_lea.vmem [#allocation3], %s566
        %p568 = pneg %p85
        %p569 = pneg %p82
        %s570 = smul.u32 2, %s21
        %p571 = scmp.lt.s32.totalorder %s570, 3
        %s572 = scalar_select %p571, %s570, 3
        %s573 = scalar_lea.vmem %s2, %s572
        %p574 = pneg %p111
        %p575 = pneg %p108
        %s576 = smul.u32 2, %s21
        %p577 = scmp.lt.s32.totalorder %s576, 3
        %s578 = scalar_select %p577, %s576, 3
        %s579 = scalar_lea.vmem %s3, %s578
        %p580 = pneg %p137
        %p581 = pneg %p134
        %p582 = pneg %p165
        %p583 = pneg %p162
        %s584 = sand.u32 %s152, 1
        %s585 = sand.u32 %s152, 1
        %s586 = smul.addr %s585, 48
        %s587 = scalar_lea.vmem [#allocation4], %s586
        %s588 = smul.u32 3, %s20
        %s589 = smul.u32 4, %s22
        %s590 = smul.u32 64, %s22
        %s591 = smul.u32 2, %s21
        %s592 = smul.u32 2, %s21
        %p593 = scmp.lt.s32.totalorder %s592, 3
        %s594 = scalar_select %p593, %s592, 3
        %s595 = scalar_lea.vmem %s2, %s594
        %s596 = smul.u32 2, %s21
        %s597 = smul.u32 2, %s21
        %p598 = scmp.lt.s32.totalorder %s597, 3
        %s599 = scalar_select %p598, %s597, 3
        %s600 = scalar_lea.vmem %s3, %s599
        %s601 = smul.u32 2, %s21
        %s602 = smul.u32 3, %s20
        %s603 = smul.u32 2, %s21
        %p604 = scmp.eq.s32.totalorder %s22, 0
        // Predicated region
        $region98: #{discriminator_forward.7} parent=88 // pred_check
          %p605 = pneg %p604
        $region99: #{discriminator_forward.7} parent=88 // pred_check_branch
          %607 = sbr.rel (%p605) target = $region101
        $region100: #{discriminator_forward.7} parent=88 // pred_region
          %608 = vst [vmem:[%s587] sm:$0xff] 0.0
          %609 = vst [vmem:[%s587 + $0x8] sm:$0xff] 0.0
          %610 = vst [vmem:[%s587 + $0x10] sm:$0xff] 0.0
          %611 = vst [vmem:[%s587 + $0x18] sm:$0xff] 0.0
          %612 = vst [vmem:[%s587 + $0x20] sm:$0xff] 0.0
          %613 = vst [vmem:[%s587 + $0x28] sm:$0xff] 0.0
        $region101: #{discriminator_forward.7} parent=88 // pred_fallthru
          _
        %v614 = vld [vmem:[%s587] sm:$0xff]
        %v615 = vld [vmem:[%s587 + $0x8] sm:$0xff]
        %v616 = vld [vmem:[%s587 + $0x10] sm:$0xff]
        %v617 = vld [vmem:[%s587 + $0x18] sm:$0xff]
        %v618 = vld [vmem:[%s587 + $0x20] sm:$0xff]
        %v619 = vld [vmem:[%s587 + $0x28] sm:$0xff]
        %v620 = vld [vmem:[%s547] sm:$0xff]
        %v621 = vld [vmem:[%s547 + $0x8] sm:$0xff]
        %v622 = vld [vmem:[%s547 + $0x10] sm:$0xff]
        %v623 = vld [vmem:[%s547 + $0x18] sm:$0xff]
        %v624 = vld [vmem:[%s547 + $0x20] sm:$0xff]
        %v625 = vld [vmem:[%s547 + $0x28] sm:$0xff]
        %v626 = vld [vmem:[%s554] sm:$0xff]
        %v627 = vld [vmem:[%s554 + $0x8] sm:$0xff]
        %v628 = vld [vmem:[%s554 + $0x10] sm:$0xff]
        %v629 = vld [vmem:[%s554 + $0x18] sm:$0xff]
        %v630 = vld [vmem:[%s554 + $0x20] sm:$0xff]
        %v631 = vld [vmem:[%s554 + $0x28] sm:$0xff]
        %v632 = vld [vmem:[%s554 + $0x30] sm:$0xff]
        %v633 = vld [vmem:[%s554 + $0x38] sm:$0xff]
        %v634 = vld [vmem:[%s554 + $0x40] sm:$0xff]
        %v635 = vld [vmem:[%s554 + $0x48] sm:$0xff]
        %v636 = vld [vmem:[%s554 + $0x50] sm:$0xff]
        %v637 = vld [vmem:[%s554 + $0x58] sm:$0xff]
        %v638 = vld [vmem:[%s554 + $0x60] sm:$0xff]
        %v639 = vld [vmem:[%s554 + $0x68] sm:$0xff]
        %v640 = vld [vmem:[%s554 + $0x70] sm:$0xff]
        %v641 = vld [vmem:[%s554 + $0x78] sm:$0xff]
        %v642 = vld [vmem:[%s554 + $0x80] sm:$0xff]
        %v643 = vld [vmem:[%s554 + $0x88] sm:$0xff]
        %v644 = vld [vmem:[%s554 + $0x90] sm:$0xff]
        %v645 = vld [vmem:[%s554 + $0x98] sm:$0xff]
        %v646 = vld [vmem:[%s554 + $0xa0] sm:$0xff]
        %v647 = vld [vmem:[%s554 + $0xa8] sm:$0xff]
        %v648 = vld [vmem:[%s554 + $0xb0] sm:$0xff]
        %v649 = vld [vmem:[%s554 + $0xb8] sm:$0xff]
        %v650 = vld [vmem:[%s554 + $0xc0] sm:$0xff]
        %v651 = vld [vmem:[%s554 + $0xc8] sm:$0xff]
        %v652 = vld [vmem:[%s554 + $0xd0] sm:$0xff]
        %v653 = vld [vmem:[%s554 + $0xd8] sm:$0xff]
        %v654 = vld [vmem:[%s554 + $0xe0] sm:$0xff]
        %v655 = vld [vmem:[%s554 + $0xe8] sm:$0xff]
        %v656 = vld [vmem:[%s554 + $0xf0] sm:$0xff]
        %v657 = vld [vmem:[%s554 + $0xf8] sm:$0xff]
        %v658 = vld [vmem:[%s554 + $0x100] sm:$0xff]
        %v659 = vld [vmem:[%s554 + $0x108] sm:$0xff]
        %v660 = vld [vmem:[%s554 + $0x110] sm:$0xff]
        %v661 = vld [vmem:[%s554 + $0x118] sm:$0xff]
        %v662 = vld [vmem:[%s554 + $0x120] sm:$0xff]
        %v663 = vld [vmem:[%s554 + $0x128] sm:$0xff]
        %v664 = vld [vmem:[%s554 + $0x130] sm:$0xff]
        %v665 = vld [vmem:[%s554 + $0x138] sm:$0xff]
        %v666 = vld [vmem:[%s554 + $0x140] sm:$0xff]
        %v667 = vld [vmem:[%s554 + $0x148] sm:$0xff]
        %v668 = vld [vmem:[%s554 + $0x150] sm:$0xff]
        %v669 = vld [vmem:[%s554 + $0x158] sm:$0xff]
        %v670 = vld [vmem:[%s554 + $0x160] sm:$0xff]
        %v671 = vld [vmem:[%s554 + $0x168] sm:$0xff]
        %v672 = vld [vmem:[%s554 + $0x170] sm:$0xff]
        %v673 = vld [vmem:[%s554 + $0x178] sm:$0xff]
        %v674 = vld [vmem:[%s554 + $0x180] sm:$0xff]
        %v675 = vld [vmem:[%s554 + $0x188] sm:$0xff]
        %v676 = vld [vmem:[%s554 + $0x190] sm:$0xff]
        %v677 = vld [vmem:[%s554 + $0x198] sm:$0xff]
        %v678 = vld [vmem:[%s554 + $0x1a0] sm:$0xff]
        %v679 = vld [vmem:[%s554 + $0x1a8] sm:$0xff]
        %v680 = vld [vmem:[%s554 + $0x1b0] sm:$0xff]
        %v681 = vld [vmem:[%s554 + $0x1b8] sm:$0xff]
        %v682 = vld [vmem:[%s554 + $0x1c0] sm:$0xff]
        %v683 = vld [vmem:[%s554 + $0x1c8] sm:$0xff]
        %v684 = vld [vmem:[%s554 + $0x1d0] sm:$0xff]
        %v685 = vld [vmem:[%s554 + $0x1d8] sm:$0xff]
        %v686 = vld [vmem:[%s554 + $0x1e0] sm:$0xff]
        %v687 = vld [vmem:[%s554 + $0x1e8] sm:$0xff]
        %v688 = vld [vmem:[%s554 + $0x1f0] sm:$0xff]
        %v689 = vld [vmem:[%s554 + $0x1f8] sm:$0xff]
        %v696 = vunpack.c.l.b16 %v620
        %v697 = vunpack.c.h.b16 %v620
        %v698 = vunpack.c.l.b16 %v621
        %v699 = vunpack.c.h.b16 %v621
        %v700 = vunpack.c.l.b16 %v622
        %v701 = vunpack.c.h.b16 %v622
        %v702 = vunpack.c.l.b16 %v623
        %v703 = vunpack.c.h.b16 %v623
        %v704 = vunpack.c.l.b16 %v624
        %v705 = vunpack.c.h.b16 %v624
        %v706 = vunpack.c.l.b16 %v625
        %v707 = vunpack.c.h.b16 %v625
        %v708 = vpack.c.b16 %v700, %v696
        %v709 = vpack.c.b16 %v701, %v697
        %v710 = vpack.c.b16 %v702, %v698
        %v711 = vpack.c.b16 %v703, %v699
        %v712 = vpack.c.b16 %v704, %v704
        %v713 = vpack.c.b16 %v705, %v705
        %v714 = vpack.c.b16 %v706, %v706
        %v715 = vpack.c.b16 %v707, %v707
        %v788 = vunpack.c.l.b16 %v626
        %v789 = vunpack.c.h.b16 %v626
        %v790 = vunpack.c.l.b16 %v627
        %v791 = vunpack.c.h.b16 %v627
        %v792 = vunpack.c.l.b16 %v628
        %v793 = vunpack.c.h.b16 %v628
        %v794 = vunpack.c.l.b16 %v629
        %v795 = vunpack.c.h.b16 %v629
        %v796 = vunpack.c.l.b16 %v630
        %v797 = vunpack.c.h.b16 %v630
        %v798 = vunpack.c.l.b16 %v631
        %v799 = vunpack.c.h.b16 %v631
        %v800 = vunpack.c.l.b16 %v632
        %v801 = vunpack.c.h.b16 %v632
        %v802 = vunpack.c.l.b16 %v633
        %v803 = vunpack.c.h.b16 %v633
        %v804 = vunpack.c.l.b16 %v634
        %v805 = vunpack.c.h.b16 %v634
        %v806 = vunpack.c.l.b16 %v635
        %v807 = vunpack.c.h.b16 %v635
        %v808 = vunpack.c.l.b16 %v636
        %v809 = vunpack.c.h.b16 %v636
        %v810 = vunpack.c.l.b16 %v637
        %v811 = vunpack.c.h.b16 %v637
        %v812 = vunpack.c.l.b16 %v638
        %v813 = vunpack.c.h.b16 %v638
        %v814 = vunpack.c.l.b16 %v639
        %v815 = vunpack.c.h.b16 %v639
        %v816 = vunpack.c.l.b16 %v640
        %v817 = vunpack.c.h.b16 %v640
        %v818 = vunpack.c.l.b16 %v641
        %v819 = vunpack.c.h.b16 %v641
        %v820 = vunpack.c.l.b16 %v642
        %v821 = vunpack.c.h.b16 %v642
        %v822 = vunpack.c.l.b16 %v643
        %v823 = vunpack.c.h.b16 %v643
        %v824 = vunpack.c.l.b16 %v644
        %v825 = vunpack.c.h.b16 %v644
        %v826 = vunpack.c.l.b16 %v645
        %v827 = vunpack.c.h.b16 %v645
        %v828 = vunpack.c.l.b16 %v646
        %v829 = vunpack.c.h.b16 %v646
        %v830 = vunpack.c.l.b16 %v647
        %v831 = vunpack.c.h.b16 %v647
        %v832 = vunpack.c.l.b16 %v648
        %v833 = vunpack.c.h.b16 %v648
        %v834 = vunpack.c.l.b16 %v649
        %v835 = vunpack.c.h.b16 %v649
        %v836 = vunpack.c.l.b16 %v650
        %v837 = vunpack.c.h.b16 %v650
        %v838 = vunpack.c.l.b16 %v651
        %v839 = vunpack.c.h.b16 %v651
        %v840 = vunpack.c.l.b16 %v652
        %v841 = vunpack.c.h.b16 %v652
        %v842 = vunpack.c.l.b16 %v653
        %v843 = vunpack.c.h.b16 %v653
        %v844 = vunpack.c.l.b16 %v654
        %v845 = vunpack.c.h.b16 %v654
        %v846 = vunpack.c.l.b16 %v655
        %v847 = vunpack.c.h.b16 %v655
        %v848 = vunpack.c.l.b16 %v656
        %v849 = vunpack.c.h.b16 %v656
        %v850 = vunpack.c.l.b16 %v657
        %v851 = vunpack.c.h.b16 %v657
        %v852 = vunpack.c.l.b16 %v658
        %v853 = vunpack.c.h.b16 %v658
        %v854 = vunpack.c.l.b16 %v659
        %v855 = vunpack.c.h.b16 %v659
        %v856 = vunpack.c.l.b16 %v660
        %v857 = vunpack.c.h.b16 %v660
        %v858 = vunpack.c.l.b16 %v661
        %v859 = vunpack.c.h.b16 %v661
        %v860 = vunpack.c.l.b16 %v662
        %v861 = vunpack.c.h.b16 %v662
        %v862 = vunpack.c.l.b16 %v663
        %v863 = vunpack.c.h.b16 %v663
        %v864 = vunpack.c.l.b16 %v664
        %v865 = vunpack.c.h.b16 %v664
        %v866 = vunpack.c.l.b16 %v665
        %v867 = vunpack.c.h.b16 %v665
        %v868 = vunpack.c.l.b16 %v666
        %v869 = vunpack.c.h.b16 %v666
        %v870 = vunpack.c.l.b16 %v667
        %v871 = vunpack.c.h.b16 %v667
        %v872 = vunpack.c.l.b16 %v668
        %v873 = vunpack.c.h.b16 %v668
        %v874 = vunpack.c.l.b16 %v669
        %v875 = vunpack.c.h.b16 %v669
        %v876 = vunpack.c.l.b16 %v670
        %v877 = vunpack.c.h.b16 %v670
        %v878 = vunpack.c.l.b16 %v671
        %v879 = vunpack.c.h.b16 %v671
        %v880 = vunpack.c.l.b16 %v672
        %v881 = vunpack.c.h.b16 %v672
        %v882 = vunpack.c.l.b16 %v673
        %v883 = vunpack.c.h.b16 %v673
        %v884 = vunpack.c.l.b16 %v674
        %v885 = vunpack.c.h.b16 %v674
        %v886 = vunpack.c.l.b16 %v675
        %v887 = vunpack.c.h.b16 %v675
        %v888 = vunpack.c.l.b16 %v676
        %v889 = vunpack.c.h.b16 %v676
        %v890 = vunpack.c.l.b16 %v677
        %v891 = vunpack.c.h.b16 %v677
        %v892 = vunpack.c.l.b16 %v678
        %v893 = vunpack.c.h.b16 %v678
        %v894 = vunpack.c.l.b16 %v679
        %v895 = vunpack.c.h.b16 %v679
        %v896 = vunpack.c.l.b16 %v680
        %v897 = vunpack.c.h.b16 %v680
        %v898 = vunpack.c.l.b16 %v681
        %v899 = vunpack.c.h.b16 %v681
        %v900 = vunpack.c.l.b16 %v682
        %v901 = vunpack.c.h.b16 %v682
        %v902 = vunpack.c.l.b16 %v683
        %v903 = vunpack.c.h.b16 %v683
        %v904 = vunpack.c.l.b16 %v684
        %v905 = vunpack.c.h.b16 %v684
        %v906 = vunpack.c.l.b16 %v685
        %v907 = vunpack.c.h.b16 %v685
        %v908 = vunpack.c.l.b16 %v686
        %v909 = vunpack.c.h.b16 %v686
        %v910 = vunpack.c.l.b16 %v687
        %v911 = vunpack.c.h.b16 %v687
        %v912 = vunpack.c.l.b16 %v688
        %v913 = vunpack.c.h.b16 %v688
        %v914 = vunpack.c.l.b16 %v689
        %v915 = vunpack.c.h.b16 %v689
        %v916 = vpack.c.b16 %v790, %v788
        %v917 = vpack.c.b16 %v791, %v789
        %v918 = vpack.c.b16 %v794, %v792
        %v919 = vpack.c.b16 %v795, %v793
        %v920 = vpack.c.b16 %v798, %v796
        %v921 = vpack.c.b16 %v799, %v797
        %v922 = vpack.c.b16 %v802, %v800
        %v923 = vpack.c.b16 %v803, %v801
        %v924 = vpack.c.b16 %v806, %v804
        %v925 = vpack.c.b16 %v807, %v805
        %v926 = vpack.c.b16 %v810, %v808
        %v927 = vpack.c.b16 %v811, %v809
        %v928 = vpack.c.b16 %v814, %v812
        %v929 = vpack.c.b16 %v815, %v813
        %v930 = vpack.c.b16 %v818, %v816
        %v931 = vpack.c.b16 %v819, %v817
        %v932 = vpack.c.b16 %v822, %v820
        %v933 = vpack.c.b16 %v823, %v821
        %v934 = vpack.c.b16 %v826, %v824
        %v935 = vpack.c.b16 %v827, %v825
        %v936 = vpack.c.b16 %v830, %v828
        %v937 = vpack.c.b16 %v831, %v829
        %v938 = vpack.c.b16 %v834, %v832
        %v939 = vpack.c.b16 %v835, %v833
        %v940 = vpack.c.b16 %v838, %v836
        %v941 = vpack.c.b16 %v839, %v837
        %v942 = vpack.c.b16 %v842, %v840
        %v943 = vpack.c.b16 %v843, %v841
        %v944 = vpack.c.b16 %v846, %v844
        %v945 = vpack.c.b16 %v847, %v845
        %v946 = vpack.c.b16 %v850, %v848
        %v947 = vpack.c.b16 %v851, %v849
        %v948 = vpack.c.b16 %v854, %v852
        %v949 = vpack.c.b16 %v855, %v853
        %v950 = vpack.c.b16 %v858, %v856
        %v951 = vpack.c.b16 %v859, %v857
        %v952 = vpack.c.b16 %v862, %v860
        %v953 = vpack.c.b16 %v863, %v861
        %v954 = vpack.c.b16 %v866, %v864
        %v955 = vpack.c.b16 %v867, %v865
        %v956 = vpack.c.b16 %v870, %v868
        %v957 = vpack.c.b16 %v871, %v869
        %v958 = vpack.c.b16 %v874, %v872
        %v959 = vpack.c.b16 %v875, %v873
        %v960 = vpack.c.b16 %v878, %v876
        %v961 = vpack.c.b16 %v879, %v877
        %v962 = vpack.c.b16 %v882, %v880
        %v963 = vpack.c.b16 %v883, %v881
        %v964 = vpack.c.b16 %v886, %v884
        %v965 = vpack.c.b16 %v887, %v885
        %v966 = vpack.c.b16 %v890, %v888
        %v967 = vpack.c.b16 %v891, %v889
        %v968 = vpack.c.b16 %v894, %v892
        %v969 = vpack.c.b16 %v895, %v893
        %v970 = vpack.c.b16 %v898, %v896
        %v971 = vpack.c.b16 %v899, %v897
        %v972 = vpack.c.b16 %v902, %v900
        %v973 = vpack.c.b16 %v903, %v901
        %v974 = vpack.c.b16 %v906, %v904
        %v975 = vpack.c.b16 %v907, %v905
        %v976 = vpack.c.b16 %v910, %v908
        %v977 = vpack.c.b16 %v911, %v909
        %v978 = vpack.c.b16 %v914, %v912
        %v979 = vpack.c.b16 %v915, %v913
        %1044 = vmatprep.subr.bf16.mxu0 %v917
        %1045 = vmatpush1.bf16.msra.mxu0 %v916
        %1046 = vmatprep.subr.bf16.mxu0 %v919
        %1047 = vmatpush1.bf16.msra.mxu0 %v918
        %1048 = vmatprep.subr.bf16.mxu0 %v921
        %1049 = vmatpush1.bf16.msra.mxu0 %v920
        %1050 = vmatprep.subr.bf16.mxu0 %v923
        %1051 = vmatpush1.bf16.msra.mxu0 %v922
        %1052 = vmatprep.subr.bf16.mxu0 %v925
        %1053 = vmatpush1.bf16.msra.mxu0 %v924
        %1054 = vmatprep.subr.bf16.mxu0 %v927
        %1055 = vmatpush1.bf16.msra.mxu0 %v926
        %1056 = vmatprep.subr.bf16.mxu0 %v929
        %1057 = vmatpush1.bf16.msra.mxu0 %v928
        %1058 = vmatprep.subr.bf16.mxu0 %v931
        %1059 = vmatpush1.bf16.msra.mxu0 %v930
        %1060 = vmatprep.subr.bf16.mxu0 %v933
        %1061 = vmatpush1.bf16.msra.mxu0 %v932
        %1062 = vmatprep.subr.bf16.mxu0 %v935
        %1063 = vmatpush1.bf16.msra.mxu0 %v934
        %1064 = vmatprep.subr.bf16.mxu0 %v937
        %1065 = vmatpush1.bf16.msra.mxu0 %v936
        %1066 = vmatprep.subr.bf16.mxu0 %v939
        %1067 = vmatpush1.bf16.msra.mxu0 %v938
        %1068 = vmatprep.subr.bf16.mxu0 %v941
        %1069 = vmatpush1.bf16.msra.mxu0 %v940
        %1070 = vmatprep.subr.bf16.mxu0 %v943
        %1071 = vmatpush1.bf16.msra.mxu0 %v942
        %1072 = vmatprep.subr.bf16.mxu0 %v945
        %1073 = vmatpush1.bf16.msra.mxu0 %v944
        %1074 = vmatprep.subr.bf16.mxu0 %v947
        %1075 = vmatpush1.bf16.msra.mxu0 %v946
        %1076 = vmatprep.mubr.bf16.mxu0 %v709
        %1077 = vmatmul.mubr.bf16.gmra.mrb[0].mxu0 %v708
        %v1078 = vpop.f32.mrb[0].mxu0
        %v1079 = vadd.f32 0.0, %v1078
        %v1080 = vpop.f32.mrb[0].mxu0
        %v1081 = vadd.f32 0.0, %v1080
        %v1082 = vpop.f32.mrb[0].mxu0
        %v1083 = vadd.f32 0.0, %v1082
        %v1084 = vpop.f32.mrb[0].mxu0
        %v1085 = vadd.f32 0.0, %v1084
        %1086 = vmatprep.mubr.bf16.mxu0 %v713
        %1087 = vmatmul.mubr.bf16.gmra.mrb[0].mxu0 %v712
        %v1088 = vpop.f32.mrb[0].mxu0
        %v1089 = vadd.f32 0.0, %v1088
        %v1090 = vpop.f32.mrb[0].mxu0
        %v1091 = vadd.f32 0.0, %v1090
        %v1092 = vpop.f32.mrb[0].mxu0
        %v1093 = vpop.f32.mrb[0].mxu0
        %1094 = vdwg.mxu0
        %1095 = vmatprep.subr.bf16.mxu0 %v949
        %1096 = vmatpush1.bf16.msra.mxu0 %v948
        %1097 = vmatprep.subr.bf16.mxu0 %v951
        %1098 = vmatpush1.bf16.msra.mxu0 %v950
        %1099 = vmatprep.subr.bf16.mxu0 %v953
        %1100 = vmatpush1.bf16.msra.mxu0 %v952
        %1101 = vmatprep.subr.bf16.mxu0 %v955
        %1102 = vmatpush1.bf16.msra.mxu0 %v954
        %1103 = vmatprep.subr.bf16.mxu0 %v957
        %1104 = vmatpush1.bf16.msra.mxu0 %v956
        %1105 = vmatprep.subr.bf16.mxu0 %v959
        %1106 = vmatpush1.bf16.msra.mxu0 %v958
        %1107 = vmatprep.subr.bf16.mxu0 %v961
        %1108 = vmatpush1.bf16.msra.mxu0 %v960
        %1109 = vmatprep.subr.bf16.mxu0 %v963
        %1110 = vmatpush1.bf16.msra.mxu0 %v962
        %1111 = vmatprep.subr.bf16.mxu0 %v965
        %1112 = vmatpush1.bf16.msra.mxu0 %v964
        %1113 = vmatprep.subr.bf16.mxu0 %v967
        %1114 = vmatpush1.bf16.msra.mxu0 %v966
        %1115 = vmatprep.subr.bf16.mxu0 %v969
        %1116 = vmatpush1.bf16.msra.mxu0 %v968
        %1117 = vmatprep.subr.bf16.mxu0 %v971
        %1118 = vmatpush1.bf16.msra.mxu0 %v970
        %1119 = vmatprep.subr.bf16.mxu0 %v973
        %1120 = vmatpush1.bf16.msra.mxu0 %v972
        %1121 = vmatprep.subr.bf16.mxu0 %v975
        %1122 = vmatpush1.bf16.msra.mxu0 %v974
        %1123 = vmatprep.subr.bf16.mxu0 %v977
        %1124 = vmatpush1.bf16.msra.mxu0 %v976
        %1125 = vmatprep.subr.bf16.mxu0 %v979
        %1126 = vmatpush1.bf16.msra.mxu0 %v978
        %1127 = vmatprep.mubr.bf16.mxu0 %v711
        %1128 = vmatmul.mubr.bf16.gmra.mrb[0].mxu0 %v710
        %v1129 = vpop.f32.mrb[0].mxu0
        %v1130 = vadd.f32 %v1079, %v1129
        %v1131 = vpop.f32.mrb[0].mxu0
        %v1132 = vadd.f32 %v1081, %v1131
        %v1133 = vpop.f32.mrb[0].mxu0
        %v1134 = vadd.f32 %v1083, %v1133
        %v1135 = vpop.f32.mrb[0].mxu0
        %v1136 = vadd.f32 %v1085, %v1135
        %1137 = vmatprep.mubr.bf16.mxu0 %v715
        %1138 = vmatmul.mubr.bf16.gmra.mrb[0].mxu0 %v714
        %v1139 = vpop.f32.mrb[0].mxu0
        %v1140 = vadd.f32 %v1089, %v1139
        %v1141 = vpop.f32.mrb[0].mxu0
        %v1142 = vadd.f32 %v1091, %v1141
        %v1143 = vpop.f32.mrb[0].mxu0
        %v1144 = vpop.f32.mrb[0].mxu0
        %1145 = vdwg.mxu0
        %v1146 = vadd.f32 %v614, %v1130
        %v1147 = vadd.f32 %v615, %v1132
        %v1148 = vadd.f32 %v616, %v1134
        %v1149 = vadd.f32 %v617, %v1136
        %v1150 = vadd.f32 %v618, %v1140
        %v1151 = vadd.f32 %v619, %v1142
        %1152 = vst [vmem:[%s587] sm:$0xff] %v1146
        %1153 = vst [vmem:[%s587 + $0x8] sm:$0xff] %v1147
        %1154 = vst [vmem:[%s587 + $0x10] sm:$0xff] %v1148
        %1155 = vst [vmem:[%s587 + $0x18] sm:$0xff] %v1149
        %1156 = vst [vmem:[%s587 + $0x20] sm:$0xff] %v1150
        %1157 = vst [vmem:[%s587 + $0x28] sm:$0xff] %v1151
        %p1158 = scmp.eq.s32.totalorder %s22, 7
        // Predicated region
        $region102: #{discriminator_forward.7} parent=88 // pred_check
          %p1159 = pneg %p1158
        $region103: #{discriminator_forward.7} parent=88 // pred_check_branch
          %1161 = sbr.rel (%p1159) target = $region105
        $region104: #{discriminator_forward.7} parent=88 // pred_region
          %v1162 = vld [vmem:[%s587] sm:$0xff]
          %v1163 = vld [vmem:[%s587 + $0x8] sm:$0xff]
          %v1164 = vld [vmem:[%s587 + $0x10] sm:$0xff]
          %v1165 = vld [vmem:[%s587 + $0x18] sm:$0xff]
          %v1166 = vld [vmem:[%s587 + $0x20] sm:$0xff]
          %v1167 = vld [vmem:[%s587 + $0x28] sm:$0xff]
          %v1168 = vld [vmem:[%s595] sm:$0x3]
          %v1170 = vlaneseq
          %v1171 = vshrl.u32 %v1170, 7
          %v1172 = vsub.s32 0, %v1171
          %v1173 = vrot.slane %v1168, %v1172
          %v1174 = vlaneseq
          %v1175 = vshrl.u32 %v1174, 7
          %v1176 = vsub.s32 1, %v1175
          %v1177 = vrot.slane %v1168, %v1176
          %v1180 = vmul.f32 %v1162, %v1173
          %v1181 = vmul.f32 %v1163, %v1177
          %v1182 = vmul.f32 %v1164, %v1173
          %v1183 = vmul.f32 %v1165, %v1177
          %v1184 = vmul.f32 %v1166, %v1173
          %v1185 = vmul.f32 %v1167, %v1177
          %v1186 = vld [vmem:[%s600] sm:$0x3]
          %v1188 = vlaneseq
          %v1189 = vshrl.u32 %v1188, 7
          %v1190 = vsub.s32 0, %v1189
          %v1191 = vrot.slane %v1186, %v1190
          %v1192 = vlaneseq
          %v1193 = vshrl.u32 %v1192, 7
          %v1194 = vsub.s32 1, %v1193
          %v1195 = vrot.slane %v1186, %v1194
          %v1198 = vadd.f32 %v1180, %v1191
          %v1199 = vadd.f32 %v1181, %v1195
          %v1200 = vadd.f32 %v1182, %v1191
          %v1201 = vadd.f32 %v1183, %v1195
          %v1202 = vadd.f32 %v1184, %v1191
          %v1203 = vadd.f32 %v1185, %v1195
          %vm1204 = vcmp.ge.f32.partialorder %v1198, 0.0
          %vm1205 = vcmp.ge.f32.partialorder %v1199, 0.0
          %vm1206 = vcmp.ge.f32.partialorder %v1200, 0.0
          %vm1207 = vcmp.ge.f32.partialorder %v1201, 0.0
          %vm1208 = vcmp.ge.f32.partialorder %v1202, 0.0
          %vm1209 = vcmp.ge.f32.partialorder %v1203, 0.0
          %v1210 = vmul.f32 %v1198, 0.2
          %v1211 = vmul.f32 %v1199, 0.2
          %v1212 = vmul.f32 %v1200, 0.2
          %v1213 = vmul.f32 %v1201, 0.2
          %v1214 = vmul.f32 %v1202, 0.2
          %v1215 = vmul.f32 %v1203, 0.2
          %v1216 = vsel %vm1204, %v1198, %v1210
          %v1217 = vsel %vm1205, %v1199, %v1211
          %v1218 = vsel %vm1206, %v1200, %v1212
          %v1219 = vsel %vm1207, %v1201, %v1213
          %v1220 = vsel %vm1208, %v1202, %v1214
          %v1221 = vsel %vm1209, %v1203, %v1215
          %1222 = vst [vmem:[%s587] sm:$0xff] %v1216
          %1223 = vst [vmem:[%s587 + $0x8] sm:$0xff] %v1217
          %1224 = vst [vmem:[%s587 + $0x10] sm:$0xff] %v1218
          %1225 = vst [vmem:[%s587 + $0x18] sm:$0xff] %v1219
          %1226 = vst [vmem:[%s587 + $0x20] sm:$0xff] %v1220
          %1227 = vst [vmem:[%s587 + $0x28] sm:$0xff] %v1221
        $region105: #{discriminator_forward.7} parent=88 // pred_fallthru
          _
        %s1228 = sand.u32 %s152, 1
        %s1229 = sand.u32 %s152, 1
        %s1230 = smul.addr %s1229, 48
        %s1231 = scalar_lea.vmem [#allocation4], %s1230
        // Predicated region
        $region106: #{discriminator_forward.7} parent=88 // pred_check
          %p1232 = pneg %p162
        $region107: #{discriminator_forward.7} parent=88 // pred_check_branch
          %1234 = sbr.rel (%p1232) target = $region109
        $region108: #{discriminator_forward.7} parent=88 // pred_region
          %s1235 = smul.u32 3, %s20
          %s1236 = smul.u32 2, %s21
          %s1237 = smul.addr %s1235, 4
          %s1238 = sadd.s32 %s1236, %s1237
          %s1239 = smul.addr %s1238, 8
          %s1240 = scalar_lea.vmem %s4, %s1239
          // Predicated region
          $region110: #{discriminator_forward.7} parent=108 // pred_check
            _
          $region111: #{discriminator_forward.7} parent=108 // pred_check_branch
            %1242 = sbr.rel (0) target = $region113
          $region112: #{discriminator_forward.7} parent=108 // pred_region
            // Predicated region
            $region114: #{discriminator_forward.7} parent=112 // pred_check
              _
            $region115: #{discriminator_forward.7} parent=112 // pred_check_branch
              %1244 = sbr.rel (0) target = $region117
            $region116: #{discriminator_forward.7} parent=112 // pred_region
              loop: start=0, step=1, limit=1
              $region118: #{discriminator_forward.7} parent=116 // loop_pre_header
                _
              $region119: #{discriminator_forward.7} parent=116 // loop_header
                %s1246 = sphi 0, %s1250
                %p1247 = scmp.ge.s32.totalorder %s1246, 1
                %s1251 = sphi %s1231, %s1231
                %s1252 = sphi %s1240, %s1240
              $region120: #{discriminator_forward.7} parent=116 // loop_header_branch
                %1249 = sbr.rel (%p1247) target = $region124
              $region121: #{discriminator_forward.7} parent=116 // loop_body
                %v1253 = vld [vmem:[%s1251] sm:$0xff]
                %1254 = vst [vmem:[%s1252] sm:$0xff] %v1253
                %v1255 = vld [vmem:[%s1251 + $0x8] sm:$0xff]
                %1256 = vst [vmem:[%s1252 + $0x8] sm:$0xff] %v1255
                %v1257 = vld [vmem:[%s1251 + $0x10] sm:$0xff]
                %1258 = vst [vmem:[%s1252 + $0x20] sm:$0xff] %v1257
                %v1259 = vld [vmem:[%s1251 + $0x18] sm:$0xff]
                %1260 = vst [vmem:[%s1252 + $0x28] sm:$0xff] %v1259
                %v1261 = vld [vmem:[%s1251 + $0x20] sm:$0xff]
                %1262 = vst [vmem:[%s1252 + $0x40] sm:$0xff] %v1261
                %v1263 = vld [vmem:[%s1251 + $0x28] sm:$0xff]
                %1264 = vst [vmem:[%s1252 + $0x48] sm:$0xff] %v1263
              $region122: #{discriminator_forward.7} parent=116 // loop_footer
                %s1250 = sadd.s32 1, %s1246
              $region123: #{discriminator_forward.7} parent=116 // loop_footer_branch
                %1245 = sbr.rel target = $region119
              $region124: #{discriminator_forward.7} parent=116 // loop_exit
                _
            $region117: #{discriminator_forward.7} parent=112 // pred_fallthru
              _
            // Predicated region
            $region125: #{discriminator_forward.7} parent=112 // pred_check
              _
            $region126: #{discriminator_forward.7} parent=112 // pred_check_branch
              %1266 = sbr.rel target = $region128
            $region127: #{discriminator_forward.7} parent=112 // pred_region
              _
            $region128: #{discriminator_forward.7} parent=112 // pred_fallthru
              _
          $region113: #{discriminator_forward.7} parent=108 // pred_fallthru
            _
          %1267 = vnop
        $region109: #{discriminator_forward.7} parent=88 // pred_fallthru
          _
      $region89: #{discriminator_forward.7} parent=5 // pred_fallthru
        _
      %p1268 = scmp.le.s32.totalorder 2, %s10
      // Predicated region
      $region129: #{discriminator_forward.7} parent=5 // pred_check
        %p1269 = pneg %p1268
      $region130: #{discriminator_forward.7} parent=5 // pred_check_branch
        %1271 = sbr.rel (%p1269) target = $region132
      $region131: #{discriminator_forward.7} parent=5 // pred_region
        %s1272 = ssub.s32 %s10, 2
        // Predicated region
        $region133: #{discriminator_forward.7} parent=131 // pred_check
          %p1273 = pneg %p168
        $region134: #{discriminator_forward.7} parent=131 // pred_check_branch
          %1275 = sbr.rel (%p1273) target = $region136
        $region135: #{discriminator_forward.7} parent=131 // pred_region
          %s1276 = sand.u32 %s153, 1
          %s1277 = sand.u32 %s153, 1
          %s1278 = smul.addr %s1277, 48
          %s1279 = scalar_lea.vmem [#allocation4], %s1278
        $region136: #{discriminator_forward.7} parent=131 // pred_fallthru
          _
      $region132: #{discriminator_forward.7} parent=5 // pred_fallthru
        _
    $region6: #{discriminator_forward.7} parent=1 // loop_footer
      %s14 = sadd.s32 1, %s10
    $region7: #{discriminator_forward.7} parent=1 // loop_footer_branch
      %9 = sbr.rel target = $region3
    $region8: #{discriminator_forward.7} parent=1 // loop_exit
      _

</llo_original>
